<compile_context>
chip_gen: v5e
topology: v5e:2x2
jax: 0.10.0
libtpu: 0.0.40
codegen_flags: <defaults>
</compile_context>

<pallas_src>
import functools

import jax
import jax.numpy as jnp
from jax.experimental import pallas as pl
from jax.experimental.pallas import tpu as pltpu

_TM = 256  # M-axis tile; K and N are always full-extent blocks for this model


def _round_up(x, m):
    return (x + m - 1) // m * m


# ----------------------------------------------------------------------------
# Pallas kernel: single-shot GEMM with per-output-channel scale/bias (+ optional ReLU)
# ----------------------------------------------------------------------------
def _gemm_epilogue_kernel(a_ref, b_ref, s_ref, c_ref, o_ref, *, relu):
    # bf16 operands -> f32 MXU accumulation -> f32 epilogue -> cast at store.
    y = jnp.dot(a_ref[...], b_ref[...], preferred_element_type=jnp.float32)
    y = y * s_ref[...] + c_ref[...]
    if relu:
        y = jnp.maximum(y, 0.0)
    o_ref[...] = y.astype(o_ref.dtype)


def pallas_matmul(a, b, scale=None, bias=None, relu=False, out_dtype=jnp.bfloat16):
    """out = maybe_relu((a @ b) * scale + bias); scale/bias broadcast over rows.

    Only the M axis is tiled (and only when M > _TM); K and N are full-extent
    blocks, so there is no 128-padding, no zero MACs, no K reduction axis and
    no accumulator scratch.
    """
    M, K = a.shape
    K2, N = b.shape
    assert K == K2
    if scale is None:
        scale = jnp.ones((N,), jnp.float32)
    if bias is None:
        bias = jnp.zeros((N,), jnp.float32)

    a = a.astype(jnp.bfloat16)
    b = b.astype(jnp.bfloat16)
    s = scale.astype(jnp.float32).reshape(1, N)
    c = bias.astype(jnp.float32).reshape(1, N)

    if M > _TM:
        bm = _TM
        Mp = _round_up(M, bm)
        if Mp != M:
            a = jnp.pad(a, ((0, Mp - M), (0, 0)))
    else:
        bm, Mp = M, M
    grid = (Mp // bm,)

    out = pl.pallas_call(
        functools.partial(_gemm_epilogue_kernel, relu=relu),
        out_shape=jax.ShapeDtypeStruct((Mp, N), out_dtype),
        grid_spec=pltpu.PrefetchScalarGridSpec(
            num_scalar_prefetch=0,
            grid=grid,
            in_specs=[
                pl.BlockSpec((bm, K), lambda i: (i, 0)),
                pl.BlockSpec((K, N), lambda i: (0, 0)),   # constant index -> stays resident
                pl.BlockSpec((1, N), lambda i: (0, 0)),
                pl.BlockSpec((1, N), lambda i: (0, 0)),
            ],
            out_specs=pl.BlockSpec((bm, N), lambda i: (i, 0)),
        ),
        compiler_params=pltpu.CompilerParams(
            dimension_semantics=("parallel",)),   # M blocks shard across TensorCores
    )(a, b, s, c)
    if Mp != M:
        out = out[:M]
    return out


# ----------------------------------------------------------------------------
# Pallas kernel: batched GEMM (G independent GEMMs, one launch) with epilogue
# Used to fuse all ASPP conv branches (1x1 + three dilated 3x3) into one call.
# ----------------------------------------------------------------------------
def _bgemm_epilogue_kernel(a_ref, b_ref, s_ref, c_ref, o_ref, *, relu):
    y = jnp.dot(a_ref[0], b_ref[0], preferred_element_type=jnp.float32)
    y = y * s_ref[0] + c_ref[0]
    if relu:
        y = jnp.maximum(y, 0.0)
    o_ref[0] = y.astype(o_ref.dtype)


def pallas_batched_matmul(a, b, scale, bias, relu=True, out_dtype=jnp.bfloat16):
    """a: (G, M, K), b: (G, K, N), scale/bias: (G, N) -> (G, M, N)."""
    G, M, K = a.shape
    Gb, Kb, N = b.shape
    assert G == Gb and K == Kb

    a = a.astype(jnp.bfloat16)
    b = b.astype(jnp.bfloat16)
    s = scale.astype(jnp.float32).reshape(G, 1, N)
    c = bias.astype(jnp.float32).reshape(G, 1, N)

    if M > _TM:
        bm = _TM
        Mp = _round_up(M, bm)
        if Mp != M:
            a = jnp.pad(a, ((0, 0), (0, Mp - M), (0, 0)))
    else:
        bm, Mp = M, M
    grid = (G, Mp // bm)

    out = pl.pallas_call(
        functools.partial(_bgemm_epilogue_kernel, relu=relu),
        out_shape=jax.ShapeDtypeStruct((G, Mp, N), out_dtype),
        grid_spec=pltpu.PrefetchScalarGridSpec(
            num_scalar_prefetch=0,
            grid=grid,
            in_specs=[
                pl.BlockSpec((1, bm, K), lambda g, i: (g, i, 0)),
                pl.BlockSpec((1, K, N), lambda g, i: (g, 0, 0)),
                pl.BlockSpec((1, 1, N), lambda g, i: (g, 0, 0)),
                pl.BlockSpec((1, 1, N), lambda g, i: (g, 0, 0)),
            ],
            out_specs=pl.BlockSpec((1, bm, N), lambda g, i: (g, i, 0)),
        ),
        compiler_params=pltpu.CompilerParams(
            dimension_semantics=("parallel", "parallel")),  # branch x M-block sharding
    )(a, b, s, c)
    if Mp != M:
        out = out[:, :M]
    return out


# ----------------------------------------------------------------------------
# Conv2d (bias-free, PyTorch weight layout) as im2col + Pallas GEMM, BN/ReLU fused
# ----------------------------------------------------------------------------
def _im2col(x, kh, kw, stride, padding, dilation):
    # x: NHWC
    N, H, W, C = x.shape
    xp = jnp.pad(x, ((0, 0), (padding, padding), (padding, padding), (0, 0)))
    OH = (H + 2 * padding - dilation * (kh - 1) - 1) // stride + 1
    OW = (W + 2 * padding - dilation * (kw - 1) - 1) // stride + 1
    cols = []
    for i in range(kh):
        for j in range(kw):
            patch = xp[:,
                       i * dilation: i * dilation + (OH - 1) * stride + 1: stride,
                       j * dilation: j * dilation + (OW - 1) * stride + 1: stride, :]
            cols.append(patch)
    cols = jnp.concatenate(cols, axis=-1)            # (N, OH, OW, kh*kw*C)
    return cols.reshape(N * OH * OW, kh * kw * C), OH, OW


def conv2d(x, w, *, stride=1, padding=0, dilation=1, scale=None, bias=None,
           relu=False, out_dtype=jnp.bfloat16):
    # x: NHWC ; w: PyTorch layout (Cout, Cin, KH, KW)
    # TODO(synk): at large resolutions an implicit GEMM (kh*kw taps driven as the K grid
    # axis via index_map offsets) would avoid materializing the 9x im2col tensor in HBM.
    N = x.shape[0]
    cout, cin, kh, kw = w.shape
    if kh == 1 and kw == 1 and stride == 1 and padding == 0:
        OH, OW = x.shape[1], x.shape[2]
        a = x.reshape(N * OH * OW, cin)                       # 1x1 conv: no im2col
        wm = w.reshape(cout, cin).T
    else:
        a, OH, OW = _im2col(x, kh, kw, stride, padding, dilation)
        wm = jnp.transpose(w, (2, 3, 1, 0)).reshape(kh * kw * cin, cout)
    y = pallas_matmul(a, wm, scale=scale, bias=bias, relu=relu, out_dtype=out_dtype)
    return y.reshape(N, OH, OW, cout)


def aspp_conv_branches(feat, w_1x1, w_dil, dilations, scale, bias,
                       out_dtype=jnp.bfloat16):
    """ASPP 1x1 branch + all dilated 3x3 branches as ONE batched Pallas GEMM launch.

    The 1x1 branch is zero-padded along K to the dilated-branch K (9*Cin); zero columns
    contribute nothing, so results are identical to separate launches.
    """
    Nb, OH, OW, C = feat.shape
    M = Nb * OH * OW
    K = 9 * C
    cout = w_1x1.shape[0]

    a_list, w_list = [], []
    a0 = jnp.pad(feat.reshape(M, C), ((0, 0), (0, K - C)))
    w0 = jnp.pad(w_1x1.reshape(cout, C).T, ((0, K - C), (0, 0)))
    a_list.append(a0)
    w_list.append(w0)
    for w, d in zip(w_dil, dilations):
        a, oh, ow = _im2col(feat, 3, 3, 1, d, d)
        assert (oh, ow) == (OH, OW)
        a_list.append(a)
        w_list.append(jnp.transpose(w, (2, 3, 1, 0)).reshape(K, cout))

    G = len(a_list)
    A = jnp.stack(a_list, axis=0)                    # (G, M, K)
    Wm = jnp.stack(w_list, axis=0)                   # (G, K, cout)
    S = jnp.broadcast_to(scale[None, :], (G, cout))
    B = jnp.broadcast_to(bias[None, :], (G, cout))
    out = pallas_batched_matmul(A, Wm, S, B, relu=True, out_dtype=out_dtype)
    return [out[g].reshape(Nb, OH, OW, cout) for g in range(G)]


# ----------------------------------------------------------------------------
# Bilinear resize (align_corners=False) — tiny (C=2) separable contraction, plain XLA/VPU
# ----------------------------------------------------------------------------
def _bilinear_matrix(in_size, out_size):
    scale = in_size / out_size
    i = jnp.arange(out_size, dtype=jnp.float32)
    src = jnp.maximum((i + 0.5) * scale - 0.5, 0.0)
    i0 = jnp.minimum(jnp.floor(src).astype(jnp.int32), in_size - 1)
    i1 = jnp.minimum(i0 + 1, in_size - 1)
    frac = src - i0.astype(jnp.float32)
    W = jnp.zeros((out_size, in_size), jnp.float32)
    W = W.at[jnp.arange(out_size), i0].add(1.0 - frac)
    W = W.at[jnp.arange(out_size), i1].add(frac)
    return W


def bilinear_resize(x, out_h, out_w):
    # NHWC -> NHWC, matches F.interpolate(mode='bilinear', align_corners=False)
    _, H, W, _ = x.shape
    Wh = _bilinear_matrix(H, out_h)                  # (out_h, H)
    Ww = _bilinear_matrix(W, out_w)                  # (out_w, W)
    return jnp.einsum('yh,nhwc,xw->nyxc', Wh, x.astype(jnp.float32), Ww)


# ----------------------------------------------------------------------------
# Model: Retrain_Autodeeplab2 forward
# ----------------------------------------------------------------------------
# Synthetic args (small): filter_multiplier=2, block_multiplier=4, network_path[-1]=1
# -> backbone feature channels = 2 * 4 * filter_param_dict[1] = 16, output stride 8.
FILTER_MULTIPLIER = 2
BLOCK_MULTIPLIER = 4
FILTER_PARAM_LAST = 2            # filter_param_dict[network_path[-1]=1]
C_BACKBONE = FILTER_MULTIPLIER * BLOCK_MULTIPLIER * FILTER_PARAM_LAST  # 16
ASPP_CH = 256                    # torchvision DeepLabHead / ASPP hard-codes 256
NUM_CLASSES_HEAD = 2             # DeepLabHead(..., 2) in the reference module
STEM_CH = 8


def init_params(key):
    ks = jax.random.split(key, 11)
    f = lambda k, shape: (0.05 * jax.random.normal(k, shape, jnp.float32))
    return {
        # simplified stride-8 backbone stem
        "stem1_w": f(ks[0], (STEM_CH, 3, 3, 3)),
        "stem2_w": f(ks[1], (STEM_CH, STEM_CH, 3, 3)),
        "stem3_w": f(ks[2], (C_BACKBONE, STEM_CH, 3, 3)),
        # ASPP
        "aspp0_w": f(ks[3], (ASPP_CH, C_BACKBONE, 1, 1)),
        "aspp1_w": f(ks[4], (ASPP_CH, C_BACKBONE, 3, 3)),       # dilation 12
        "aspp2_w": f(ks[5], (ASPP_CH, C_BACKBONE, 3, 3)),       # dilation 24
        "aspp3_w": f(ks[6], (ASPP_CH, C_BACKBONE, 3, 3)),       # dilation 36
        "aspp_pool_w": f(ks[7], (ASPP_CH, C_BACKBONE, 1, 1)),
        "aspp_proj_w": f(ks[8], (ASPP_CH, 5 * ASPP_CH, 1, 1)),
        # DeepLabHead tail
        "head_conv_w": f(ks[9], (ASPP_CH, ASPP_CH, 3, 3)),
        "head_final_w": f(ks[10], (NUM_CLASSES_HEAD, ASPP_CH, 1, 1)),
        "head_final_b": jnp.zeros((NUM_CLASSES_HEAD,), jnp.float32),
    }


def _bn_identity(c):
    # eval-mode BN with gamma=1, beta=0, running_mean=0, running_var=1, eps=1e-5
    scale = jnp.full((c,), 1.0 / jnp.sqrt(1.0 + 1e-5), jnp.float32)
    shift = jnp.zeros((c,), jnp.float32)
    return scale, shift


def retrain_autodeeplab2_forward(x_nchw, params):
    N, _, H, W = x_nchw.shape
    x = jnp.transpose(x_nchw, (0, 2, 3, 1)).astype(jnp.bfloat16)   # -> NHWC, bf16 activations

    # ---- backbone (encoder) ----
    # TODO(synk): the AutoDeepLab NAS-cell encoder (newModel / network_arch / cell_arch)
    # source was not provided; a representative stride-8 conv+BN+ReLU stem with the same
    # output shape/channels (filter_multiplier*block_multiplier*filter_param_dict[path[-1]])
    # stands in for it.
    s, b = _bn_identity(STEM_CH)
    x = conv2d(x, params["stem1_w"], stride=2, padding=1, scale=s, bias=b, relu=True)
    x = conv2d(x, params["stem2_w"], stride=2, padding=1, scale=s, bias=b, relu=True)
    s, b = _bn_identity(C_BACKBONE)
    feat = conv2d(x, params["stem3_w"], stride=2, padding=1, scale=s, bias=b, relu=True)

    # ---- classifier: DeepLabHead = ASPP(rates 12,24,36) + 3x3 conv + BN + ReLU + 1x1 conv ----
    s256, b256 = _bn_identity(ASPP_CH)
    # 1x1 branch + three dilated 3x3 branches: one batched Pallas launch.
    br0, br1, br2, br3 = aspp_conv_branches(
        feat, params["aspp0_w"],
        [params["aspp1_w"], params["aspp2_w"], params["aspp3_w"]],
        dilations=(12, 24, 36), scale=s256, bias=b256)

    # image-pooling branch: adaptive_avg_pool2d(1) -> 1x1 conv -> BN -> ReLU -> upsample.
    # Tiny (M=batch) GEMM: done in plain XLA/VPU instead of a Pallas launch; bilinear
    # upsample from 1x1 (align_corners=False) == broadcast.
    pooled = jnp.mean(feat.astype(jnp.float32), axis=(1, 2))                   # (N, C)
    wpool = params["aspp_pool_w"].reshape(ASPP_CH, C_BACKBONE).T               # (C, 256)
    br4 = jnp.maximum(pooled @ wpool * s256 + b256, 0.0)
    br4 = jnp.broadcast_to(br4[:, None, None, :], br0.shape).astype(br0.dtype)

    cat = jnp.concatenate([br0, br1, br2, br3, br4], axis=-1)      # (N, h, w, 5*256)
    proj = conv2d(cat, params["aspp_proj_w"], scale=s256, bias=b256, relu=True)
    # TODO(synk): nn.Dropout(0.5) in ASPP treated as eval-mode identity (no stochasticity).

    h = conv2d(proj, params["head_conv_w"], padding=1, scale=s256, bias=b256, relu=True)
    logits = conv2d(h, params["head_final_w"],
                    bias=params["head_final_b"], relu=False, out_dtype=jnp.float32)

    # ---- DeepLabV3: bilinear upsample (align_corners=False) to input spatial size ----
    out = bilinear_resize(logits, H, W)
    return jnp.transpose(out, (0, 3, 1, 2))          # -> NCHW, f32


if __name__ == "__main__":
    key = jax.random.PRNGKey(0)
    pkey, xkey = jax.random.split(key)
    params = init_params(pkey)

    x = jax.random.normal(xkey, (2, 3, 32, 32), jnp.float32)   # NCHW, stride-8 feat = 4x4

    fwd = jax.jit(retrain_autodeeplab2_forward)
    out = jax.block_until_ready(fwd(x, params))

    assert out.shape == (2, NUM_CLASSES_HEAD, 32, 32), out.shape
    assert out.dtype == jnp.float32
    assert bool(jnp.all(jnp.isfinite(out)))
    print("KERNEL_OK")
</pallas_src>

<mosaic_0001>
module attributes {stable_mosaic.version = 11 : i64} {
  func.func @_gemm_epilogue_kernel(%arg0: i32, %arg1: memref<256x27xbf16, #tpu.memory_space<vmem>>, %arg2: memref<27x8xbf16, #tpu.memory_space<vmem>>, %arg3: memref<1x8xf32, #tpu.memory_space<vmem>>, %arg4: memref<1x8xf32, #tpu.memory_space<vmem>>, %arg5: memref<256x8xbf16, #tpu.memory_space<vmem>>) attributes {dimension_semantics = [#tpu.dimension_semantics<parallel>], iteration_bounds = array<i64: 2>, scalar_prefetch = 0 : i64, scratch_operands = 0 : i64, tpu.core_type = #tpu.core_type<tc>, window_params = [{transform_indices = @transform_0, window_bounds = array<i64: 256, 27>}, {pipeline_mode = #tpu.pipeline_mode<synchronous>, transform_indices = @transform_1, window_bounds = array<i64: 27, 8>}, {pipeline_mode = #tpu.pipeline_mode<synchronous>, transform_indices = @transform_2, window_bounds = array<i64: 1, 8>}, {pipeline_mode = #tpu.pipeline_mode<synchronous>, transform_indices = @transform_3, window_bounds = array<i64: 1, 8>}, {transform_indices = @transform_4, window_bounds = array<i64: 256, 8>}]} {
    %c0 = arith.constant 0 : index
    %c0_0 = arith.constant 0 : index
    %0 = vector.load %arg1[%c0, %c0_0] : memref<256x27xbf16, #tpu.memory_space<vmem>>, vector<256x27xbf16>
    %c0_1 = arith.constant 0 : index
    %c0_2 = arith.constant 0 : index
    %1 = vector.load %arg2[%c0_1, %c0_2] : memref<27x8xbf16, #tpu.memory_space<vmem>>, vector<27x8xbf16>
    %cst = arith.constant dense<0.000000e+00> : vector<256x8xf32>
    %2 = tpu.matmul %0, %1, %cst {dimension_numbers = #tpu.dot_dimension_numbers<[1], [0], [0], [1], [0, 0, 1, 1], [], []>} : vector<256x27xbf16>, vector<27x8xbf16>, vector<256x8xf32> -> vector<256x8xf32>
    %c0_3 = arith.constant 0 : index
    %c0_4 = arith.constant 0 : index
    %3 = vector.load %arg3[%c0_3, %c0_4] : memref<1x8xf32, #tpu.memory_space<vmem>>, vector<1x8xf32>
    %4 = vector.broadcast %3 : vector<1x8xf32> to vector<256x8xf32>
    %5 = arith.mulf %2, %4 : vector<256x8xf32>
    %c0_5 = arith.constant 0 : index
    %c0_6 = arith.constant 0 : index
    %6 = vector.load %arg4[%c0_5, %c0_6] : memref<1x8xf32, #tpu.memory_space<vmem>>, vector<1x8xf32>
    %7 = vector.broadcast %6 : vector<1x8xf32> to vector<256x8xf32>
    %8 = arith.addf %5, %7 : vector<256x8xf32>
    %cst_7 = arith.constant 0.000000e+00 : f32
    %9 = vector.broadcast %cst_7 : f32 to vector<256x8xf32>
    %10 = arith.maximumf %8, %9 : vector<256x8xf32>
    %11 = arith.truncf %10 : vector<256x8xf32> to vector<256x8xbf16>
    %c0_8 = arith.constant 0 : index
    %c0_9 = arith.constant 0 : index
    %12 = vector.load %arg5[%c0_8, %c0_9] : memref<256x8xbf16, #tpu.memory_space<vmem>>, vector<256x8xbf16>
    tpu.vector_store %arg5[%c0_8, %c0_9], %11 {strides = array<i32>} : memref<256x8xbf16, #tpu.memory_space<vmem>>, vector<256x8xbf16>,
    return
  }
  func.func @transform_0(%arg0: i32) -> (i32, i32) {
    %c0_i32 = arith.constant 0 : i32
    %c0_i32_0 = arith.constant 0 : i32
    return %arg0, %c0_i32 : i32, i32
  }
  func.func @transform_1(%arg0: i32) -> (i32, i32) {
    %c0_i32 = arith.constant 0 : i32
    %c0_i32_0 = arith.constant 0 : i32
    %c0_i32_1 = arith.constant 0 : i32
    return %c0_i32, %c0_i32_0 : i32, i32
  }
  func.func @transform_2(%arg0: i32) -> (i32, i32) {
    %c0_i32 = arith.constant 0 : i32
    %c0_i32_0 = arith.constant 0 : i32
    %c0_i32_1 = arith.constant 0 : i32
    return %c0_i32, %c0_i32_0 : i32, i32
  }
  func.func @transform_3(%arg0: i32) -> (i32, i32) {
    %c0_i32 = arith.constant 0 : i32
    %c0_i32_0 = arith.constant 0 : i32
    %c0_i32_1 = arith.constant 0 : i32
    return %c0_i32, %c0_i32_0 : i32, i32
  }
  func.func @transform_4(%arg0: i32) -> (i32, i32) {
    %c0_i32 = arith.constant 0 : i32
    %c0_i32_0 = arith.constant 0 : i32
    return %arg0, %c0_i32 : i32, i32
  }
}

module attributes {stable_mosaic.version = 11 : i64} {
  func.func @_gemm_epilogue_kernel(%arg0: i32, %arg1: memref<128x72xbf16, #tpu.memory_space<vmem>>, %arg2: memref<72x8xbf16, #tpu.memory_space<vmem>>, %arg3: memref<1x8xf32, #tpu.memory_space<vmem>>, %arg4: memref<1x8xf32, #tpu.memory_space<vmem>>, %arg5: memref<128x8xbf16, #tpu.memory_space<vmem>>) attributes {dimension_semantics = [#tpu.dimension_semantics<parallel>], iteration_bounds = array<i64: 1>, scalar_prefetch = 0 : i64, scratch_operands = 0 : i64, tpu.core_type = #tpu.core_type<tc>, window_params = [{transform_indices = @transform_0, window_bounds = array<i64: 128, 72>}, {pipeline_mode = #tpu.pipeline_mode<synchronous>, transform_indices = @transform_1, window_bounds = array<i64: 72, 8>}, {pipeline_mode = #tpu.pipeline_mode<synchronous>, transform_indices = @transform_2, window_bounds = array<i64: 1, 8>}, {pipeline_mode = #tpu.pipeline_mode<synchronous>, transform_indices = @transform_3, window_bounds = array<i64: 1, 8>}, {transform_indices = @transform_4, window_bounds = array<i64: 128, 8>}]} {
    %c0 = arith.constant 0 : index
    %c0_0 = arith.constant 0 : index
    %0 = vector.load %arg1[%c0, %c0_0] : memref<128x72xbf16, #tpu.memory_space<vmem>>, vector<128x72xbf16>
    %c0_1 = arith.constant 0 : index
    %c0_2 = arith.constant 0 : index
    %1 = vector.load %arg2[%c0_1, %c0_2] : memref<72x8xbf16, #tpu.memory_space<vmem>>, vector<72x8xbf16>
    %cst = arith.constant dense<0.000000e+00> : vector<128x8xf32>
    %2 = tpu.matmul %0, %1, %cst {dimension_numbers = #tpu.dot_dimension_numbers<[1], [0], [0], [1], [0, 0, 1, 1], [], []>} : vector<128x72xbf16>, vector<72x8xbf16>, vector<128x8xf32> -> vector<128x8xf32>
    %c0_3 = arith.constant 0 : index
    %c0_4 = arith.constant 0 : index
    %3 = vector.load %arg3[%c0_3, %c0_4] : memref<1x8xf32, #tpu.memory_space<vmem>>, vector<1x8xf32>
    %4 = vector.broadcast %3 : vector<1x8xf32> to vector<128x8xf32>
    %5 = arith.mulf %2, %4 : vector<128x8xf32>
    %c0_5 = arith.constant 0 : index
    %c0_6 = arith.constant 0 : index
    %6 = vector.load %arg4[%c0_5, %c0_6] : memref<1x8xf32, #tpu.memory_space<vmem>>, vector<1x8xf32>
    %7 = vector.broadcast %6 : vector<1x8xf32> to vector<128x8xf32>
    %8 = arith.addf %5, %7 : vector<128x8xf32>
    %cst_7 = arith.constant 0.000000e+00 : f32
    %9 = vector.broadcast %cst_7 : f32 to vector<128x8xf32>
    %10 = arith.maximumf %8, %9 : vector<128x8xf32>
    %11 = arith.truncf %10 : vector<128x8xf32> to vector<128x8xbf16>
    %c0_8 = arith.constant 0 : index
    %c0_9 = arith.constant 0 : index
    %12 = vector.load %arg5[%c0_8, %c0_9] : memref<128x8xbf16, #tpu.memory_space<vmem>>, vector<128x8xbf16>
    tpu.vector_store %arg5[%c0_8, %c0_9], %11 {strides = array<i32>} : memref<128x8xbf16, #tpu.memory_space<vmem>>, vector<128x8xbf16>,
    return
  }
  func.func @transform_0(%arg0: i32) -> (i32, i32) {
    %c0_i32 = arith.constant 0 : i32
    %c0_i32_0 = arith.constant 0 : i32
    return %arg0, %c0_i32 : i32, i32
  }
  func.func @transform_1(%arg0: i32) -> (i32, i32) {
    %c0_i32 = arith.constant 0 : i32
    %c0_i32_0 = arith.constant 0 : i32
    %c0_i32_1 = arith.constant 0 : i32
    return %c0_i32, %c0_i32_0 : i32, i32
  }
  func.func @transform_2(%arg0: i32) -> (i32, i32) {
    %c0_i32 = arith.constant 0 : i32
    %c0_i32_0 = arith.constant 0 : i32
    %c0_i32_1 = arith.constant 0 : i32
    return %c0_i32, %c0_i32_0 : i32, i32
  }
  func.func @transform_3(%arg0: i32) -> (i32, i32) {
    %c0_i32 = arith.constant 0 : i32
    %c0_i32_0 = arith.constant 0 : i32
    %c0_i32_1 = arith.constant 0 : i32
    return %c0_i32, %c0_i32_0 : i32, i32
  }
  func.func @transform_4(%arg0: i32) -> (i32, i32) {
    %c0_i32 = arith.constant 0 : i32
    %c0_i32_0 = arith.constant 0 : i32
    return %arg0, %c0_i32 : i32, i32
  }
}

module attributes {stable_mosaic.version = 11 : i64} {
  func.func @_gemm_epilogue_kernel(%arg0: i32, %arg1: memref<32x72xbf16, #tpu.memory_space<vmem>>, %arg2: memref<72x16xbf16, #tpu.memory_space<vmem>>, %arg3: memref<1x16xf32, #tpu.memory_space<vmem>>, %arg4: memref<1x16xf32, #tpu.memory_space<vmem>>, %arg5: memref<32x16xbf16, #tpu.memory_space<vmem>>) attributes {dimension_semantics = [#tpu.dimension_semantics<parallel>], iteration_bounds = array<i64: 1>, scalar_prefetch = 0 : i64, scratch_operands = 0 : i64, tpu.core_type = #tpu.core_type<tc>, window_params = [{transform_indices = @transform_0, window_bounds = array<i64: 32, 72>}, {pipeline_mode = #tpu.pipeline_mode<synchronous>, transform_indices = @transform_1, window_bounds = array<i64: 72, 16>}, {pipeline_mode = #tpu.pipeline_mode<synchronous>, transform_indices = @transform_2, window_bounds = array<i64: 1, 16>}, {pipeline_mode = #tpu.pipeline_mode<synchronous>, transform_indices = @transform_3, window_bounds = array<i64: 1, 16>}, {transform_indices = @transform_4, window_bounds = array<i64: 32, 16>}]} {
    %c0 = arith.constant 0 : index
    %c0_0 = arith.constant 0 : index
    %0 = vector.load %arg1[%c0, %c0_0] : memref<32x72xbf16, #tpu.memory_space<vmem>>, vector<32x72xbf16>
    %c0_1 = arith.constant 0 : index
    %c0_2 = arith.constant 0 : index
    %1 = vector.load %arg2[%c0_1, %c0_2] : memref<72x16xbf16, #tpu.memory_space<vmem>>, vector<72x16xbf16>
    %cst = arith.constant dense<0.000000e+00> : vector<32x16xf32>
    %2 = tpu.matmul %0, %1, %cst {dimension_numbers = #tpu.dot_dimension_numbers<[1], [0], [0], [1], [0, 0, 1, 1], [], []>} : vector<32x72xbf16>, vector<72x16xbf16>, vector<32x16xf32> -> vector<32x16xf32>
    %c0_3 = arith.constant 0 : index
    %c0_4 = arith.constant 0 : index
    %3 = vector.load %arg3[%c0_3, %c0_4] : memref<1x16xf32, #tpu.memory_space<vmem>>, vector<1x16xf32>
    %4 = vector.broadcast %3 : vector<1x16xf32> to vector<32x16xf32>
    %5 = arith.mulf %2, %4 : vector<32x16xf32>
    %c0_5 = arith.constant 0 : index
    %c0_6 = arith.constant 0 : index
    %6 = vector.load %arg4[%c0_5, %c0_6] : memref<1x16xf32, #tpu.memory_space<vmem>>, vector<1x16xf32>
    %7 = vector.broadcast %6 : vector<1x16xf32> to vector<32x16xf32>
    %8 = arith.addf %5, %7 : vector<32x16xf32>
    %cst_7 = arith.constant 0.000000e+00 : f32
    %9 = vector.broadcast %cst_7 : f32 to vector<32x16xf32>
    %10 = arith.maximumf %8, %9 : vector<32x16xf32>
    %11 = arith.truncf %10 : vector<32x16xf32> to vector<32x16xbf16>
    %c0_8 = arith.constant 0 : index
    %c0_9 = arith.constant 0 : index
    %12 = vector.load %arg5[%c0_8, %c0_9] : memref<32x16xbf16, #tpu.memory_space<vmem>>, vector<32x16xbf16>
    tpu.vector_store %arg5[%c0_8, %c0_9], %11 {strides = array<i32>} : memref<32x16xbf16, #tpu.memory_space<vmem>>, vector<32x16xbf16>,
    return
  }
  func.func @transform_0(%arg0: i32) -> (i32, i32) {
    %c0_i32 = arith.constant 0 : i32
    %c0_i32_0 = arith.constant 0 : i32
    return %arg0, %c0_i32 : i32, i32
  }
  func.func @transform_1(%arg0: i32) -> (i32, i32) {
    %c0_i32 = arith.constant 0 : i32
    %c0_i32_0 = arith.constant 0 : i32
    %c0_i32_1 = arith.constant 0 : i32
    return %c0_i32, %c0_i32_0 : i32, i32
  }
  func.func @transform_2(%arg0: i32) -> (i32, i32) {
    %c0_i32 = arith.constant 0 : i32
    %c0_i32_0 = arith.constant 0 : i32
    %c0_i32_1 = arith.constant 0 : i32
    return %c0_i32, %c0_i32_0 : i32, i32
  }
  func.func @transform_3(%arg0: i32) -> (i32, i32) {
    %c0_i32 = arith.constant 0 : i32
    %c0_i32_0 = arith.constant 0 : i32
    %c0_i32_1 = arith.constant 0 : i32
    return %c0_i32, %c0_i32_0 : i32, i32
  }
  func.func @transform_4(%arg0: i32) -> (i32, i32) {
    %c0_i32 = arith.constant 0 : i32
    %c0_i32_0 = arith.constant 0 : i32
    return %arg0, %c0_i32 : i32, i32
  }
}

module attributes {stable_mosaic.version = 11 : i64} {
  func.func @_bgemm_epilogue_kernel(%arg0: i32, %arg1: i32, %arg2: memref<1x32x144xbf16, #tpu.memory_space<vmem>>, %arg3: memref<1x144x256xbf16, #tpu.memory_space<vmem>>, %arg4: memref<1x1x256xf32, #tpu.memory_space<vmem>>, %arg5: memref<1x1x256xf32, #tpu.memory_space<vmem>>, %arg6: memref<1x32x256xbf16, #tpu.memory_space<vmem>>) attributes {dimension_semantics = [#tpu.dimension_semantics<parallel>, #tpu.dimension_semantics<parallel>], iteration_bounds = array<i64: 4, 1>, scalar_prefetch = 0 : i64, scratch_operands = 0 : i64, tpu.core_type = #tpu.core_type<tc>, window_params = [{transform_indices = @transform_0, window_bounds = array<i64: 1, 32, 144>}, {transform_indices = @transform_1, window_bounds = array<i64: 1, 144, 256>}, {transform_indices = @transform_2, window_bounds = array<i64: 1, 1, 256>}, {transform_indices = @transform_3, window_bounds = array<i64: 1, 1, 256>}, {transform_indices = @transform_4, window_bounds = array<i64: 1, 32, 256>}]} {
    %c0 = arith.constant 0 : index
    %c0_0 = arith.constant 0 : index
    %c0_1 = arith.constant 0 : index
    %0 = vector.load %arg2[%c0, %c0_0, %c0_1] : memref<1x32x144xbf16, #tpu.memory_space<vmem>>, vector<1x32x144xbf16>
    %1 = vector.shape_cast %0 : vector<1x32x144xbf16> to vector<32x144xbf16>
    %c0_2 = arith.constant 0 : index
    %c0_3 = arith.constant 0 : index
    %c0_4 = arith.constant 0 : index
    %2 = vector.load %arg3[%c0_2, %c0_3, %c0_4] : memref<1x144x256xbf16, #tpu.memory_space<vmem>>, vector<1x144x256xbf16>
    %3 = vector.shape_cast %2 : vector<1x144x256xbf16> to vector<144x256xbf16>
    %cst = arith.constant dense<0.000000e+00> : vector<32x256xf32>
    %4 = tpu.matmul %1, %3, %cst {dimension_numbers = #tpu.dot_dimension_numbers<[1], [0], [0], [1], [0, 0, 1, 1], [], []>} : vector<32x144xbf16>, vector<144x256xbf16>, vector<32x256xf32> -> vector<32x256xf32>
    %c0_5 = arith.constant 0 : index
    %c0_6 = arith.constant 0 : index
    %c0_7 = arith.constant 0 : index
    %5 = vector.load %arg4[%c0_5, %c0_6, %c0_7] : memref<1x1x256xf32, #tpu.memory_space<vmem>>, vector<1x1x256xf32>
    %6 = vector.shape_cast %5 : vector<1x1x256xf32> to vector<1x256xf32>
    %7 = vector.broadcast %6 : vector<1x256xf32> to vector<32x256xf32>
    %8 = arith.mulf %4, %7 : vector<32x256xf32>
    %c0_8 = arith.constant 0 : index
    %c0_9 = arith.constant 0 : index
    %c0_10 = arith.constant 0 : index
    %9 = vector.load %arg5[%c0_8, %c0_9, %c0_10] : memref<1x1x256xf32, #tpu.memory_space<vmem>>, vector<1x1x256xf32>
    %10 = vector.shape_cast %9 : vector<1x1x256xf32> to vector<1x256xf32>
    %11 = vector.broadcast %10 : vector<1x256xf32> to vector<32x256xf32>
    %12 = arith.addf %8, %11 : vector<32x256xf32>
    %cst_11 = arith.constant 0.000000e+00 : f32
    %13 = vector.broadcast %cst_11 : f32 to vector<32x256xf32>
    %14 = arith.maximumf %12, %13 : vector<32x256xf32>
    %15 = arith.truncf %14 : vector<32x256xf32> to vector<32x256xbf16>
    %c0_12 = arith.constant 0 : index
    %c0_13 = arith.constant 0 : index
    %c0_14 = arith.constant 0 : index
    %16 = vector.load %arg6[%c0_12, %c0_13, %c0_14] : memref<1x32x256xbf16, #tpu.memory_space<vmem>>, vector<1x32x256xbf16>
    %17 = vector.shape_cast %16 : vector<1x32x256xbf16> to vector<32x256xbf16>
    %18 = vector.shape_cast %15 : vector<32x256xbf16> to vector<1x32x256xbf16>
    tpu.vector_store %arg6[%c0_12, %c0_13, %c0_14], %18 {strides = array<i32>} : memref<1x32x256xbf16, #tpu.memory_space<vmem>>, vector<1x32x256xbf16>,
    return
  }
  func.func @transform_0(%arg0: i32, %arg1: i32) -> (i32, i32, i32) {
    %c0_i32 = arith.constant 0 : i32
    %c0_i32_0 = arith.constant 0 : i32
    return %arg0, %arg1, %c0_i32 : i32, i32, i32
  }
  func.func @transform_1(%arg0: i32, %arg1: i32) -> (i32, i32, i32) {
    %c0_i32 = arith.constant 0 : i32
    %c0_i32_0 = arith.constant 0 : i32
    %c0_i32_1 = arith.constant 0 : i32
    return %arg0, %c0_i32, %c0_i32_0 : i32, i32, i32
  }
  func.func @transform_2(%arg0: i32, %arg1: i32) -> (i32, i32, i32) {
    %c0_i32 = arith.constant 0 : i32
    %c0_i32_0 = arith.constant 0 : i32
    %c0_i32_1 = arith.constant 0 : i32
    return %arg0, %c0_i32, %c0_i32_0 : i32, i32, i32
  }
  func.func @transform_3(%arg0: i32, %arg1: i32) -> (i32, i32, i32) {
    %c0_i32 = arith.constant 0 : i32
    %c0_i32_0 = arith.constant 0 : i32
    %c0_i32_1 = arith.constant 0 : i32
    return %arg0, %c0_i32, %c0_i32_0 : i32, i32, i32
  }
  func.func @transform_4(%arg0: i32, %arg1: i32) -> (i32, i32, i32) {
    %c0_i32 = arith.constant 0 : i32
    %c0_i32_0 = arith.constant 0 : i32
    return %arg0, %arg1, %c0_i32 : i32, i32, i32
  }
}

module attributes {stable_mosaic.version = 11 : i64} {
  func.func @_gemm_epilogue_kernel(%arg0: i32, %arg1: memref<32x1280xbf16, #tpu.memory_space<vmem>>, %arg2: memref<1280x256xbf16, #tpu.memory_space<vmem>>, %arg3: memref<1x256xf32, #tpu.memory_space<vmem>>, %arg4: memref<1x256xf32, #tpu.memory_space<vmem>>, %arg5: memref<32x256xbf16, #tpu.memory_space<vmem>>) attributes {dimension_semantics = [#tpu.dimension_semantics<parallel>], iteration_bounds = array<i64: 1>, scalar_prefetch = 0 : i64, scratch_operands = 0 : i64, tpu.core_type = #tpu.core_type<tc>, window_params = [{transform_indices = @transform_0, window_bounds = array<i64: 32, 1280>}, {pipeline_mode = #tpu.pipeline_mode<synchronous>, transform_indices = @transform_1, window_bounds = array<i64: 1280, 256>}, {pipeline_mode = #tpu.pipeline_mode<synchronous>, transform_indices = @transform_2, window_bounds = array<i64: 1, 256>}, {pipeline_mode = #tpu.pipeline_mode<synchronous>, transform_indices = @transform_3, window_bounds = array<i64: 1, 256>}, {transform_indices = @transform_4, window_bounds = array<i64: 32, 256>}]} {
    %c0 = arith.constant 0 : index
    %c0_0 = arith.constant 0 : index
    %0 = vector.load %arg1[%c0, %c0_0] : memref<32x1280xbf16, #tpu.memory_space<vmem>>, vector<32x1280xbf16>
    %c0_1 = arith.constant 0 : index
    %c0_2 = arith.constant 0 : index
    %1 = vector.load %arg2[%c0_1, %c0_2] : memref<1280x256xbf16, #tpu.memory_space<vmem>>, vector<1280x256xbf16>
    %cst = arith.constant dense<0.000000e+00> : vector<32x256xf32>
    %2 = tpu.matmul %0, %1, %cst {dimension_numbers = #tpu.dot_dimension_numbers<[1], [0], [0], [1], [0, 0, 1, 1], [], []>} : vector<32x1280xbf16>, vector<1280x256xbf16>, vector<32x256xf32> -> vector<32x256xf32>
    %c0_3 = arith.constant 0 : index
    %c0_4 = arith.constant 0 : index
    %3 = vector.load %arg3[%c0_3, %c0_4] : memref<1x256xf32, #tpu.memory_space<vmem>>, vector<1x256xf32>
    %4 = vector.broadcast %3 : vector<1x256xf32> to vector<32x256xf32>
    %5 = arith.mulf %2, %4 : vector<32x256xf32>
    %c0_5 = arith.constant 0 : index
    %c0_6 = arith.constant 0 : index
    %6 = vector.load %arg4[%c0_5, %c0_6] : memref<1x256xf32, #tpu.memory_space<vmem>>, vector<1x256xf32>
    %7 = vector.broadcast %6 : vector<1x256xf32> to vector<32x256xf32>
    %8 = arith.addf %5, %7 : vector<32x256xf32>
    %cst_7 = arith.constant 0.000000e+00 : f32
    %9 = vector.broadcast %cst_7 : f32 to vector<32x256xf32>
    %10 = arith.maximumf %8, %9 : vector<32x256xf32>
    %11 = arith.truncf %10 : vector<32x256xf32> to vector<32x256xbf16>
    %c0_8 = arith.constant 0 : index
    %c0_9 = arith.constant 0 : index
    %12 = vector.load %arg5[%c0_8, %c0_9] : memref<32x256xbf16, #tpu.memory_space<vmem>>, vector<32x256xbf16>
    tpu.vector_store %arg5[%c0_8, %c0_9], %11 {strides = array<i32>} : memref<32x256xbf16, #tpu.memory_space<vmem>>, vector<32x256xbf16>,
    return
  }
  func.func @transform_0(%arg0: i32) -> (i32, i32) {
    %c0_i32 = arith.constant 0 : i32
    %c0_i32_0 = arith.constant 0 : i32
    return %arg0, %c0_i32 : i32, i32
  }
  func.func @transform_1(%arg0: i32) -> (i32, i32) {
    %c0_i32 = arith.constant 0 : i32
    %c0_i32_0 = arith.constant 0 : i32
    %c0_i32_1 = arith.constant 0 : i32
    return %c0_i32, %c0_i32_0 : i32, i32
  }
  func.func @transform_2(%arg0: i32) -> (i32, i32) {
    %c0_i32 = arith.constant 0 : i32
    %c0_i32_0 = arith.constant 0 : i32
    %c0_i32_1 = arith.constant 0 : i32
    return %c0_i32, %c0_i32_0 : i32, i32
  }
  func.func @transform_3(%arg0: i32) -> (i32, i32) {
    %c0_i32 = arith.constant 0 : i32
    %c0_i32_0 = arith.constant 0 : i32
    %c0_i32_1 = arith.constant 0 : i32
    return %c0_i32, %c0_i32_0 : i32, i32
  }
  func.func @transform_4(%arg0: i32) -> (i32, i32) {
    %c0_i32 = arith.constant 0 : i32
    %c0_i32_0 = arith.constant 0 : i32
    return %arg0, %c0_i32 : i32, i32
  }
}

module attributes {stable_mosaic.version = 11 : i64} {
  func.func @_gemm_epilogue_kernel(%arg0: i32, %arg1: memref<32x2304xbf16, #tpu.memory_space<vmem>>, %arg2: memref<2304x256xbf16, #tpu.memory_space<vmem>>, %arg3: memref<1x256xf32, #tpu.memory_space<vmem>>, %arg4: memref<1x256xf32, #tpu.memory_space<vmem>>, %arg5: memref<32x256xbf16, #tpu.memory_space<vmem>>) attributes {dimension_semantics = [#tpu.dimension_semantics<parallel>], iteration_bounds = array<i64: 1>, scalar_prefetch = 0 : i64, scratch_operands = 0 : i64, tpu.core_type = #tpu.core_type<tc>, window_params = [{transform_indices = @transform_0, window_bounds = array<i64: 32, 2304>}, {pipeline_mode = #tpu.pipeline_mode<synchronous>, transform_indices = @transform_1, window_bounds = array<i64: 2304, 256>}, {pipeline_mode = #tpu.pipeline_mode<synchronous>, transform_indices = @transform_2, window_bounds = array<i64: 1, 256>}, {pipeline_mode = #tpu.pipeline_mode<synchronous>, transform_indices = @transform_3, window_bounds = array<i64: 1, 256>}, {transform_indices = @transform_4, window_bounds = array<i64: 32, 256>}]} {
    %c0 = arith.constant 0 : index
    %c0_0 = arith.constant 0 : index
    %0 = vector.load %arg1[%c0, %c0_0] : memref<32x2304xbf16, #tpu.memory_space<vmem>>, vector<32x2304xbf16>
    %c0_1 = arith.constant 0 : index
    %c0_2 = arith.constant 0 : index
    %1 = vector.load %arg2[%c0_1, %c0_2] : memref<2304x256xbf16, #tpu.memory_space<vmem>>, vector<2304x256xbf16>
    %cst = arith.constant dense<0.000000e+00> : vector<32x256xf32>
    %2 = tpu.matmul %0, %1, %cst {dimension_numbers = #tpu.dot_dimension_numbers<[1], [0], [0], [1], [0, 0, 1, 1], [], []>} : vector<32x2304xbf16>, vector<2304x256xbf16>, vector<32x256xf32> -> vector<32x256xf32>
    %c0_3 = arith.constant 0 : index
    %c0_4 = arith.constant 0 : index
    %3 = vector.load %arg3[%c0_3, %c0_4] : memref<1x256xf32, #tpu.memory_space<vmem>>, vector<1x256xf32>
    %4 = vector.broadcast %3 : vector<1x256xf32> to vector<32x256xf32>
    %5 = arith.mulf %2, %4 : vector<32x256xf32>
    %c0_5 = arith.constant 0 : index
    %c0_6 = arith.constant 0 : index
    %6 = vector.load %arg4[%c0_5, %c0_6] : memref<1x256xf32, #tpu.memory_space<vmem>>, vector<1x256xf32>
    %7 = vector.broadcast %6 : vector<1x256xf32> to vector<32x256xf32>
    %8 = arith.addf %5, %7 : vector<32x256xf32>
    %cst_7 = arith.constant 0.000000e+00 : f32
    %9 = vector.broadcast %cst_7 : f32 to vector<32x256xf32>
    %10 = arith.maximumf %8, %9 : vector<32x256xf32>
    %11 = arith.truncf %10 : vector<32x256xf32> to vector<32x256xbf16>
    %c0_8 = arith.constant 0 : index
    %c0_9 = arith.constant 0 : index
    %12 = vector.load %arg5[%c0_8, %c0_9] : memref<32x256xbf16, #tpu.memory_space<vmem>>, vector<32x256xbf16>
    tpu.vector_store %arg5[%c0_8, %c0_9], %11 {strides = array<i32>} : memref<32x256xbf16, #tpu.memory_space<vmem>>, vector<32x256xbf16>,
    return
  }
  func.func @transform_0(%arg0: i32) -> (i32, i32) {
    %c0_i32 = arith.constant 0 : i32
    %c0_i32_0 = arith.constant 0 : i32
    return %arg0, %c0_i32 : i32, i32
  }
  func.func @transform_1(%arg0: i32) -> (i32, i32) {
    %c0_i32 = arith.constant 0 : i32
    %c0_i32_0 = arith.constant 0 : i32
    %c0_i32_1 = arith.constant 0 : i32
    return %c0_i32, %c0_i32_0 : i32, i32
  }
  func.func @transform_2(%arg0: i32) -> (i32, i32) {
    %c0_i32 = arith.constant 0 : i32
    %c0_i32_0 = arith.constant 0 : i32
    %c0_i32_1 = arith.constant 0 : i32
    return %c0_i32, %c0_i32_0 : i32, i32
  }
  func.func @transform_3(%arg0: i32) -> (i32, i32) {
    %c0_i32 = arith.constant 0 : i32
    %c0_i32_0 = arith.constant 0 : i32
    %c0_i32_1 = arith.constant 0 : i32
    return %c0_i32, %c0_i32_0 : i32, i32
  }
  func.func @transform_4(%arg0: i32) -> (i32, i32) {
    %c0_i32 = arith.constant 0 : i32
    %c0_i32_0 = arith.constant 0 : i32
    return %arg0, %c0_i32 : i32, i32
  }
}

module attributes {stable_mosaic.version = 11 : i64} {
  func.func @_gemm_epilogue_kernel(%arg0: i32, %arg1: memref<32x256xbf16, #tpu.memory_space<vmem>>, %arg2: memref<256x2xbf16, #tpu.memory_space<vmem>>, %arg3: memref<1x2xf32, #tpu.memory_space<vmem>>, %arg4: memref<1x2xf32, #tpu.memory_space<vmem>>, %arg5: memref<32x2xf32, #tpu.memory_space<vmem>>) attributes {dimension_semantics = [#tpu.dimension_semantics<parallel>], iteration_bounds = array<i64: 1>, scalar_prefetch = 0 : i64, scratch_operands = 0 : i64, tpu.core_type = #tpu.core_type<tc>, window_params = [{transform_indices = @transform_0, window_bounds = array<i64: 32, 256>}, {pipeline_mode = #tpu.pipeline_mode<synchronous>, transform_indices = @transform_1, window_bounds = array<i64: 256, 2>}, {pipeline_mode = #tpu.pipeline_mode<synchronous>, transform_indices = @transform_2, window_bounds = array<i64: 1, 2>}, {pipeline_mode = #tpu.pipeline_mode<synchronous>, transform_indices = @transform_3, window_bounds = array<i64: 1, 2>}, {transform_indices = @transform_4, window_bounds = array<i64: 32, 2>}]} {
    %c0 = arith.constant 0 : index
    %c0_0 = arith.constant 0 : index
    %0 = vector.load %arg1[%c0, %c0_0] : memref<32x256xbf16, #tpu.memory_space<vmem>>, vector<32x256xbf16>
    %c0_1 = arith.constant 0 : index
    %c0_2 = arith.constant 0 : index
    %1 = vector.load %arg2[%c0_1, %c0_2] : memref<256x2xbf16, #tpu.memory_space<vmem>>, vector<256x2xbf16>
    %cst = arith.constant dense<0.000000e+00> : vector<32x2xf32>
    %2 = tpu.matmul %0, %1, %cst {dimension_numbers = #tpu.dot_dimension_numbers<[1], [0], [0], [1], [0, 0, 1, 1], [], []>} : vector<32x256xbf16>, vector<256x2xbf16>, vector<32x2xf32> -> vector<32x2xf32>
    %c0_3 = arith.constant 0 : index
    %c0_4 = arith.constant 0 : index
    %3 = vector.load %arg3[%c0_3, %c0_4] : memref<1x2xf32, #tpu.memory_space<vmem>>, vector<1x2xf32>
    %4 = vector.broadcast %3 : vector<1x2xf32> to vector<32x2xf32>
    %5 = arith.mulf %2, %4 : vector<32x2xf32>
    %c0_5 = arith.constant 0 : index
    %c0_6 = arith.constant 0 : index
    %6 = vector.load %arg4[%c0_5, %c0_6] : memref<1x2xf32, #tpu.memory_space<vmem>>, vector<1x2xf32>
    %7 = vector.broadcast %6 : vector<1x2xf32> to vector<32x2xf32>
    %8 = arith.addf %5, %7 : vector<32x2xf32>
    %c0_7 = arith.constant 0 : index
    %c0_8 = arith.constant 0 : index
    %9 = vector.load %arg5[%c0_7, %c0_8] : memref<32x2xf32, #tpu.memory_space<vmem>>, vector<32x2xf32>
    tpu.vector_store %arg5[%c0_7, %c0_8], %8 {strides = array<i32>} : memref<32x2xf32, #tpu.memory_space<vmem>>, vector<32x2xf32>,
    return
  }
  func.func @transform_0(%arg0: i32) -> (i32, i32) {
    %c0_i32 = arith.constant 0 : i32
    %c0_i32_0 = arith.constant 0 : i32
    return %arg0, %c0_i32 : i32, i32
  }
  func.func @transform_1(%arg0: i32) -> (i32, i32) {
    %c0_i32 = arith.constant 0 : i32
    %c0_i32_0 = arith.constant 0 : i32
    %c0_i32_1 = arith.constant 0 : i32
    return %c0_i32, %c0_i32_0 : i32, i32
  }
  func.func @transform_2(%arg0: i32) -> (i32, i32) {
    %c0_i32 = arith.constant 0 : i32
    %c0_i32_0 = arith.constant 0 : i32
    %c0_i32_1 = arith.constant 0 : i32
    return %c0_i32, %c0_i32_0 : i32, i32
  }
  func.func @transform_3(%arg0: i32) -> (i32, i32) {
    %c0_i32 = arith.constant 0 : i32
    %c0_i32_0 = arith.constant 0 : i32
    %c0_i32_1 = arith.constant 0 : i32
    return %c0_i32, %c0_i32_0 : i32, i32
  }
  func.func @transform_4(%arg0: i32) -> (i32, i32) {
    %c0_i32 = arith.constant 0 : i32
    %c0_i32_0 = arith.constant 0 : i32
    return %arg0, %c0_i32 : i32, i32
  }
}

</mosaic_0001>

<llo_original>
// kernel: retrain_autodeeplab2_forward.7
$region0: #{retrain_autodeeplab2_forward.7}
  #allocation0 [shape = 'u32[]', space=smem, size = 0x4, offset = 0x4, fixed_abs, tag = 'smem constant byte address 0x4 - core index']
  #allocation1 [shape = 'u32[72,128]{1,0:T(1,128)}', space=vmem, size = 0x9000, scoped, tag = 'internal scratch']
  %s0 = inlined_call_operand.vmem [shape: bf16[512,27], index: 0, kind: input, shape index: {}]
  %s1 = inlined_call_operand.vmem [shape: bf16[27,8], index: 1, kind: input, shape index: {}]
  %s2 = inlined_call_operand.vmem [shape: f32[1,8], index: 2, kind: input, shape index: {}]
  %s3 = inlined_call_operand.vmem [shape: f32[1,8], index: 3, kind: input, shape index: {}]
  %s4 = inlined_call_operand.vmem [shape: bf16[512,8], index: 4, kind: output, shape index: {}]
  %s5 = sld [smem:[#allocation0]]
  $region49: #{retrain_autodeeplab2_forward.7} parent=0
    _
  %s7 = ssub.s32 1, %s5
  %s8 = scalar_select 0, %s7, %s5
  loop: start=0, step=1, limit=4
  $region2: #{retrain_autodeeplab2_forward.7} parent=0 // loop_pre_header
    _
  $region3: #{retrain_autodeeplab2_forward.7} parent=0 // loop_header
    %s10 = sphi 0, %s14
    %p11 = scmp.ge.s32.totalorder %s10, 4
    %s20 = sphi 0, %s22
    %s23 = sphi 0, %s20
    %s24 = sphi 0, %s23
    %s40 = sphi 0, %s24
    %s44 = sphi 0, %s44
    %s46 = sphi 0, %s44
    %s47 = sphi 0, %s46
    %s61 = sphi 0, %s47
    %s65 = sphi 0, %s65
    %s67 = sphi 0, %s65
    %s68 = sphi 0, %s67
    %s82 = sphi 0, %s68
    %s86 = sphi 0, %s86
    %s88 = sphi 0, %s86
    %s89 = sphi 0, %s88
    %s103 = sphi 0, %s89
    %s109 = sphi 0, %s111
    %s112 = sphi 0, %s109
    %s113 = sphi 0, %s112
    %s129 = sphi 0, %s113
  $region4: #{retrain_autodeeplab2_forward.7} parent=0 // loop_header_branch
    %13 = sbr.rel (%p11) target = $region8
  $region5: #{retrain_autodeeplab2_forward.7} parent=0 // loop_body
    %s15 = ssub.s32 %s10, 1
    %s16 = ssub.s32 %s10, 2
    %s17 = sadd.s32 %s10, 1
    %s18 = ssub.s32 %s10, %s17
    %p19 = scmp.eq.s32.totalorder %s18, 0
    %s21 = sadd.s32 %s20, 1
    %s22 = scalar_select %p19, %s20, %s21
    %p25 = pneg %p19
    %p26 = scmp.eq.s32.totalorder %s10, 1
    %p27 = por %p25, %p26
    %p28 = scmp.ne.s32.totalorder %s20, %s23
    %p29 = scmp.eq.s32.totalorder %s10, 0
    %p30 = por %p28, %p29
    %p31 = scmp.ne.s32.totalorder %s20, %s23
    %p32 = scmp.eq.s32.totalorder %s15, 1
    %p33 = por %p31, %p32
    %p34 = scmp.ne.s32.totalorder %s23, %s24
    %p35 = scmp.eq.s32.totalorder %s15, 0
    %p36 = por %p34, %p35
    %p37 = scmp.ne.s32.totalorder %s23, %s24
    %p38 = scmp.eq.s32.totalorder %s16, 1
    %p39 = por %p37, %p38
    %p41 = scmp.ne.s32.totalorder %s24, %s40
    %p42 = scmp.eq.s32.totalorder %s16, 0
    %p43 = por %p41, %p42
    %s45 = sadd.s32 %s44, 1
    %p48 = scmp.eq.s32.totalorder %s10, 1
    %p49 = scmp.ne.s32.totalorder %s44, %s46
    %p50 = scmp.eq.s32.totalorder %s10, 0
    %p51 = por %p49, %p50
    %p52 = scmp.ne.s32.totalorder %s44, %s46
    %p53 = scmp.eq.s32.totalorder %s15, 1
    %p54 = por %p52, %p53
    %p55 = scmp.ne.s32.totalorder %s46, %s47
    %p56 = scmp.eq.s32.totalorder %s15, 0
    %p57 = por %p55, %p56
    %p58 = scmp.ne.s32.totalorder %s46, %s47
    %p59 = scmp.eq.s32.totalorder %s16, 1
    %p60 = por %p58, %p59
    %p62 = scmp.ne.s32.totalorder %s47, %s61
    %p63 = scmp.eq.s32.totalorder %s16, 0
    %p64 = por %p62, %p63
    %s66 = sadd.s32 %s65, 1
    %p69 = scmp.eq.s32.totalorder %s10, 1
    %p70 = scmp.ne.s32.totalorder %s65, %s67
    %p71 = scmp.eq.s32.totalorder %s10, 0
    %p72 = por %p70, %p71
    %p73 = scmp.ne.s32.totalorder %s65, %s67
    %p74 = scmp.eq.s32.totalorder %s15, 1
    %p75 = por %p73, %p74
    %p76 = scmp.ne.s32.totalorder %s67, %s68
    %p77 = scmp.eq.s32.totalorder %s15, 0
    %p78 = por %p76, %p77
    %p79 = scmp.ne.s32.totalorder %s67, %s68
    %p80 = scmp.eq.s32.totalorder %s16, 1
    %p81 = por %p79, %p80
    %p83 = scmp.ne.s32.totalorder %s68, %s82
    %p84 = scmp.eq.s32.totalorder %s16, 0
    %p85 = por %p83, %p84
    %s87 = sadd.s32 %s86, 1
    %p90 = scmp.eq.s32.totalorder %s10, 1
    %p91 = scmp.ne.s32.totalorder %s86, %s88
    %p92 = scmp.eq.s32.totalorder %s10, 0
    %p93 = por %p91, %p92
    %p94 = scmp.ne.s32.totalorder %s86, %s88
    %p95 = scmp.eq.s32.totalorder %s15, 1
    %p96 = por %p94, %p95
    %p97 = scmp.ne.s32.totalorder %s88, %s89
    %p98 = scmp.eq.s32.totalorder %s15, 0
    %p99 = por %p97, %p98
    %p100 = scmp.ne.s32.totalorder %s88, %s89
    %p101 = scmp.eq.s32.totalorder %s16, 1
    %p102 = por %p100, %p101
    %p104 = scmp.ne.s32.totalorder %s89, %s103
    %p105 = scmp.eq.s32.totalorder %s16, 0
    %p106 = por %p104, %p105
    %s107 = ssub.s32 %s10, %s17
    %p108 = scmp.eq.s32.totalorder %s107, 0
    %s110 = sadd.s32 %s109, 1
    %s111 = scalar_select %p108, %s109, %s110
    %p114 = pneg %p108
    %p115 = scmp.eq.s32.totalorder %s10, 1
    %p116 = por %p114, %p115
    %p117 = scmp.ne.s32.totalorder %s109, %s112
    %p118 = scmp.eq.s32.totalorder %s10, 0
    %p119 = por %p117, %p118
    %p120 = scmp.ne.s32.totalorder %s109, %s112
    %p121 = scmp.eq.s32.totalorder %s15, 1
    %p122 = por %p120, %p121
    %p123 = scmp.ne.s32.totalorder %s112, %s113
    %p124 = scmp.eq.s32.totalorder %s15, 0
    %p125 = por %p123, %p124
    %p126 = scmp.ne.s32.totalorder %s112, %s113
    %p127 = scmp.eq.s32.totalorder %s16, 1
    %p128 = por %p126, %p127
    %p130 = scmp.ne.s32.totalorder %s113, %s129
    %p131 = scmp.eq.s32.totalorder %s16, 0
    %p132 = por %p130, %p131
    %p133 = scmp.le.s32.totalorder 1, %s10
    %p134 = scmp.lt.s32.totalorder %s10, 3
    %p135 = pnand %p133, %p134
    %p136 = pneg %p135
    // Predicated region
    $region9: #{retrain_autodeeplab2_forward.7} parent=5 // pred_check
      _
    $region10: #{retrain_autodeeplab2_forward.7} parent=5 // pred_check_branch
      %138 = sbr.rel (%p135) target = $region12
    $region11: #{retrain_autodeeplab2_forward.7} parent=5 // pred_region
      %s139 = ssub.s32 %s10, 1
      // Predicated region
      $region13: #{retrain_autodeeplab2_forward.7} parent=11 // pred_check
        %p140 = pneg %p57
      $region14: #{retrain_autodeeplab2_forward.7} parent=11 // pred_check_branch
        %142 = sbr.rel (%p140) target = $region16
      $region15: #{retrain_autodeeplab2_forward.7} parent=11 // pred_region
        _
      $region16: #{retrain_autodeeplab2_forward.7} parent=11 // pred_fallthru
        _
      // Predicated region
      $region17: #{retrain_autodeeplab2_forward.7} parent=11 // pred_check
        %p143 = pneg %p78
      $region18: #{retrain_autodeeplab2_forward.7} parent=11 // pred_check_branch
        %145 = sbr.rel (%p143) target = $region20
      $region19: #{retrain_autodeeplab2_forward.7} parent=11 // pred_region
        _
      $region20: #{retrain_autodeeplab2_forward.7} parent=11 // pred_fallthru
        _
      // Predicated region
      $region21: #{retrain_autodeeplab2_forward.7} parent=11 // pred_check
        %p146 = pneg %p99
      $region22: #{retrain_autodeeplab2_forward.7} parent=11 // pred_check_branch
        %148 = sbr.rel (%p146) target = $region24
      $region23: #{retrain_autodeeplab2_forward.7} parent=11 // pred_region
        _
      $region24: #{retrain_autodeeplab2_forward.7} parent=11 // pred_fallthru
        _
    $region12: #{retrain_autodeeplab2_forward.7} parent=5 // pred_fallthru
      _
    %p149 = scmp.lt.s32.totalorder %s10, 2
    // Predicated region
    $region25: #{retrain_autodeeplab2_forward.7} parent=5 // pred_check
      %p150 = pneg %p149
    $region26: #{retrain_autodeeplab2_forward.7} parent=5 // pred_check_branch
      %152 = sbr.rel (%p150) target = $region28
    $region27: #{retrain_autodeeplab2_forward.7} parent=5 // pred_region
      // Predicated region
      $region29: #{retrain_autodeeplab2_forward.7} parent=27 // pred_check
        %p153 = pneg %p30
      $region30: #{retrain_autodeeplab2_forward.7} parent=27 // pred_check_branch
        %155 = sbr.rel (%p153) target = $region32
      $region31: #{retrain_autodeeplab2_forward.7} parent=27 // pred_region
        %s156 = smul.u32 32, %s10
        %p157 = scmp.lt.s32.totalorder %s156, 63
        %s158 = scalar_select %p157, %s156, 63
        %s159 = smul.addr %s158, 4
        %s160 = scalar_lea.vmem %s0, %s159
        %s161 = smul.u32 32, %s10
      $region32: #{retrain_autodeeplab2_forward.7} parent=27 // pred_fallthru
        _
    $region28: #{retrain_autodeeplab2_forward.7} parent=5 // pred_fallthru
      _
    %p162 = scmp.le.s32.totalorder 1, %s10
    %p163 = scmp.lt.s32.totalorder %s10, 3
    %p164 = pnand %p162, %p163
    %p165 = pneg %p164
    // Predicated region
    $region33: #{retrain_autodeeplab2_forward.7} parent=5 // pred_check
      _
    $region34: #{retrain_autodeeplab2_forward.7} parent=5 // pred_check_branch
      %167 = sbr.rel (%p164) target = $region36
    $region35: #{retrain_autodeeplab2_forward.7} parent=5 // pred_region
      %s168 = ssub.s32 %s10, 1
      %s169 = smul.u32 32, %s15
      %p170 = scmp.lt.s32.totalorder %s169, 63
      %s171 = scalar_select %p170, %s169, 63
      %s172 = smul.addr %s171, 4
      %s173 = scalar_lea.vmem %s0, %s172
      %p174 = pneg %p36
      %p175 = pneg %p33
      %p176 = pneg %p57
      %p177 = pneg %p54
      %p178 = pneg %p78
      %p179 = pneg %p75
      %p180 = pneg %p99
      %p181 = pneg %p96
      %p182 = pneg %p125
      %p183 = pneg %p122
      %s184 = smul.u32 32, %s15
      %p185 = scmp.lt.s32.totalorder %s184, 63
      %s186 = scalar_select %p185, %s184, 63
      %s187 = smul.addr %s186, 4
      %s188 = scalar_lea.vmem %s4, %s187
      %s189 = smul.u32 32, %s15
      %p190 = scmp.lt.s32.totalorder %s189, 63
      %s191 = scalar_select %p190, %s189, 63
      %s192 = smul.addr %s191, 4
      %s193 = scalar_lea.vmem %s0, %s192
      %s194 = smul.u32 32, %s15
      %s195 = smul.u32 32, %s15
      %p196 = scmp.lt.s32.totalorder %s195, 63
      %s197 = scalar_select %p196, %s195, 63
      %s198 = smul.addr %s197, 4
      %s199 = scalar_lea.vmem %s4, %s198
      %s200 = smul.u32 32, %s15
      %v202 = vld [vmem:[%s193] sm:$0xf]
      %v203 = vld [vmem:[%s193 + $0x4] sm:$0xf]
      %v204 = vld [vmem:[%s193 + $0x8] sm:$0xf]
      %v205 = vld [vmem:[%s193 + $0xc] sm:$0xf]
      %v206 = vld [vmem:[%s193 + $0x10] sm:$0xf]
      %v207 = vld [vmem:[%s193 + $0x14] sm:$0xf]
      %v208 = vld [vmem:[%s193 + $0x18] sm:$0xf]
      %v209 = vld [vmem:[%s193 + $0x1c] sm:$0xf]
      %v210 = vld [vmem:[%s193 + $0x20] sm:$0xf]
      %v211 = vld [vmem:[%s193 + $0x24] sm:$0xf]
      %v212 = vld [vmem:[%s193 + $0x28] sm:$0xf]
      %v213 = vld [vmem:[%s193 + $0x2c] sm:$0xf]
      %v214 = vld [vmem:[%s193 + $0x30] sm:$0xf]
      %v215 = vld [vmem:[%s193 + $0x34] sm:$0xf]
      %v216 = vld [vmem:[%s193 + $0x38] sm:$0xf]
      %v217 = vld [vmem:[%s193 + $0x3c] sm:$0xf]
      %v218 = vld [vmem:[%s193 + $0x40] sm:$0xf]
      %v219 = vld [vmem:[%s193 + $0x44] sm:$0xf]
      %v220 = vld [vmem:[%s193 + $0x48] sm:$0xf]
      %v221 = vld [vmem:[%s193 + $0x4c] sm:$0xf]
      %v222 = vld [vmem:[%s193 + $0x50] sm:$0xf]
      %v223 = vld [vmem:[%s193 + $0x54] sm:$0xf]
      %v224 = vld [vmem:[%s193 + $0x58] sm:$0xf]
      %v225 = vld [vmem:[%s193 + $0x5c] sm:$0xf]
      %v226 = vld [vmem:[%s193 + $0x60] sm:$0xf]
      %v227 = vld [vmem:[%s193 + $0x64] sm:$0xf]
      %v228 = vld [vmem:[%s193 + $0x68] sm:$0xf]
      %v229 = vld [vmem:[%s193 + $0x6c] sm:$0xf]
      %v230 = vld [vmem:[%s193 + $0x70] sm:$0xf]
      %v231 = vld [vmem:[%s193 + $0x74] sm:$0xf]
      %v232 = vld [vmem:[%s193 + $0x78] sm:$0xf]
      %v233 = vld [vmem:[%s193 + $0x7c] sm:$0xf]
      %v234 = vld [vmem:[%s1] sm:$0xf]
      %v235 = vld [vmem:[%s1 + $0x4] sm:$0xf]
      %v236 = vld [vmem:[%s1 + $0x8] sm:$0xf]
      %v237 = vld [vmem:[%s1 + $0xc] sm:$0x3]
      %v270 = vunpack.c.l.b16 %v202
      %v271 = vunpack.c.l.b16 %v203
      %v272 = vunpack.c.l.b16 %v204
      %v273 = vunpack.c.l.b16 %v205
      %v274 = vunpack.c.l.b16 %v206
      %v275 = vunpack.c.l.b16 %v207
      %v276 = vunpack.c.l.b16 %v208
      %v277 = vunpack.c.l.b16 %v209
      %v278 = vunpack.c.l.b16 %v210
      %v279 = vunpack.c.l.b16 %v211
      %v280 = vunpack.c.l.b16 %v212
      %v281 = vunpack.c.l.b16 %v213
      %v282 = vunpack.c.l.b16 %v214
      %v283 = vunpack.c.l.b16 %v215
      %v284 = vunpack.c.l.b16 %v216
      %v285 = vunpack.c.l.b16 %v217
      %v286 = vunpack.c.l.b16 %v218
      %v287 = vunpack.c.l.b16 %v219
      %v288 = vunpack.c.l.b16 %v220
      %v289 = vunpack.c.l.b16 %v221
      %v290 = vunpack.c.l.b16 %v222
      %v291 = vunpack.c.l.b16 %v223
      %v292 = vunpack.c.l.b16 %v224
      %v293 = vunpack.c.l.b16 %v225
      %v294 = vunpack.c.l.b16 %v226
      %v295 = vunpack.c.l.b16 %v227
      %v296 = vunpack.c.l.b16 %v228
      %v297 = vunpack.c.l.b16 %v229
      %v298 = vunpack.c.l.b16 %v230
      %v299 = vunpack.c.l.b16 %v231
      %v300 = vunpack.c.l.b16 %v232
      %v301 = vunpack.c.l.b16 %v233
      %v302 = vpack.c.b16 %v271, %v270
      %v303 = vpack.c.b16 %v273, %v272
      %v304 = vpack.c.b16 %v275, %v274
      %v305 = vpack.c.b16 %v277, %v276
      %v306 = vpack.c.b16 %v279, %v278
      %v307 = vpack.c.b16 %v281, %v280
      %v308 = vpack.c.b16 %v283, %v282
      %v309 = vpack.c.b16 %v285, %v284
      %v310 = vpack.c.b16 %v287, %v286
      %v311 = vpack.c.b16 %v289, %v288
      %v312 = vpack.c.b16 %v291, %v290
      %v313 = vpack.c.b16 %v293, %v292
      %v314 = vpack.c.b16 %v295, %v294
      %v315 = vpack.c.b16 %v297, %v296
      %v316 = vpack.c.b16 %v299, %v298
      %v317 = vpack.c.b16 %v301, %v300
      %v322 = vunpack.c.l.b16 %v234
      %v323 = vunpack.c.l.b16 %v235
      %v324 = vunpack.c.l.b16 %v236
      %v325 = vunpack.c.l.b16 %v237
      %v326 = vpack.c.b16 %v323, %v322
      %v327 = vpack.c.b16 %v325, %v324
      %vm329 = vcmask 220160
      %v331 = vsel %vm329, %v302, 0
      %v334 = vsel %vm329, %v303, 0
      %v337 = vsel %vm329, %v304, 0
      %v340 = vsel %vm329, %v305, 0
      %v343 = vsel %vm329, %v306, 0
      %v346 = vsel %vm329, %v307, 0
      %v349 = vsel %vm329, %v308, 0
      %v352 = vsel %vm329, %v309, 0
      %v355 = vsel %vm329, %v310, 0
      %v358 = vsel %vm329, %v311, 0
      %v361 = vsel %vm329, %v312, 0
      %v364 = vsel %vm329, %v313, 0
      %v367 = vsel %vm329, %v314, 0
      %v370 = vsel %vm329, %v315, 0
      %v373 = vsel %vm329, %v316, 0
      %v376 = vsel %vm329, %v317, 0
      %vm378 = vcmask 1044480
      %vm379 = vcmask 1045504
      %v380 = vsel %vm378, 4294967295, 65535
      %v381 = vsel %vm379, %v380, 0
      %v383 = vand.u32 %v327, %v381
      %385 = vmatpush.bf16.msra.mxu0 0
      %386 = vmatpush.bf16.msra.mxu0 0
      %387 = vmatpush.bf16.msra.mxu0 0
      %388 = vmatpush.bf16.msra.mxu0 0
      %389 = vmatpush.bf16.msra.mxu0 0
      %390 = vmatpush.bf16.msra.mxu0 0
      %391 = vmatpush.bf16.msra.mxu0 %v383
      %392 = vmatpush.bf16.msra.mxu0 %v326
      %393 = vmatmul.bf16.gmra.mxu0 %v331
      %v394 = vpop.f32.mrf.mxu0
      %v395 = vadd.f32 0.0, %v394
      %v396 = vpop.f32.mrf.mxu0
      %v397 = vadd.f32 0.0, %v396
      %398 = vmatmul.bf16.gmra.mxu0 %v334
      %v399 = vpop.f32.mrf.mxu0
      %v400 = vadd.f32 0.0, %v399
      %v401 = vpop.f32.mrf.mxu0
      %v402 = vadd.f32 0.0, %v401
      %403 = vmatmul.bf16.gmra.mxu0 %v337
      %v404 = vpop.f32.mrf.mxu0
      %v405 = vadd.f32 0.0, %v404
      %v406 = vpop.f32.mrf.mxu0
      %v407 = vadd.f32 0.0, %v406
      %408 = vmatmul.bf16.gmra.mxu0 %v340
      %v409 = vpop.f32.mrf.mxu0
      %v410 = vadd.f32 0.0, %v409
      %v411 = vpop.f32.mrf.mxu0
      %v412 = vadd.f32 0.0, %v411
      %413 = vmatmul.bf16.gmra.mxu0 %v343
      %v414 = vpop.f32.mrf.mxu0
      %v415 = vadd.f32 0.0, %v414
      %v416 = vpop.f32.mrf.mxu0
      %v417 = vadd.f32 0.0, %v416
      %418 = vmatmul.bf16.gmra.mxu0 %v346
      %v419 = vpop.f32.mrf.mxu0
      %v420 = vadd.f32 0.0, %v419
      %v421 = vpop.f32.mrf.mxu0
      %v422 = vadd.f32 0.0, %v421
      %423 = vmatmul.bf16.gmra.mxu0 %v349
      %v424 = vpop.f32.mrf.mxu0
      %v425 = vadd.f32 0.0, %v424
      %v426 = vpop.f32.mrf.mxu0
      %v427 = vadd.f32 0.0, %v426
      %428 = vmatmul.bf16.gmra.mxu0 %v352
      %v429 = vpop.f32.mrf.mxu0
      %v430 = vadd.f32 0.0, %v429
      %v431 = vpop.f32.mrf.mxu0
      %v432 = vadd.f32 0.0, %v431
      %433 = vmatmul.bf16.gmra.mxu0 %v355
      %v434 = vpop.f32.mrf.mxu0
      %v435 = vadd.f32 0.0, %v434
      %v436 = vpop.f32.mrf.mxu0
      %v437 = vadd.f32 0.0, %v436
      %438 = vmatmul.bf16.gmra.mxu0 %v358
      %v439 = vpop.f32.mrf.mxu0
      %v440 = vadd.f32 0.0, %v439
      %v441 = vpop.f32.mrf.mxu0
      %v442 = vadd.f32 0.0, %v441
      %443 = vmatmul.bf16.gmra.mxu0 %v361
      %v444 = vpop.f32.mrf.mxu0
      %v445 = vadd.f32 0.0, %v444
      %v446 = vpop.f32.mrf.mxu0
      %v447 = vadd.f32 0.0, %v446
      %448 = vmatmul.bf16.gmra.mxu0 %v364
      %v449 = vpop.f32.mrf.mxu0
      %v450 = vadd.f32 0.0, %v449
      %v451 = vpop.f32.mrf.mxu0
      %v452 = vadd.f32 0.0, %v451
      %453 = vmatmul.bf16.gmra.mxu0 %v367
      %v454 = vpop.f32.mrf.mxu0
      %v455 = vadd.f32 0.0, %v454
      %v456 = vpop.f32.mrf.mxu0
      %v457 = vadd.f32 0.0, %v456
      %458 = vmatmul.bf16.gmra.mxu0 %v370
      %v459 = vpop.f32.mrf.mxu0
      %v460 = vadd.f32 0.0, %v459
      %v461 = vpop.f32.mrf.mxu0
      %v462 = vadd.f32 0.0, %v461
      %463 = vmatmul.bf16.gmra.mxu0 %v373
      %v464 = vpop.f32.mrf.mxu0
      %v465 = vadd.f32 0.0, %v464
      %v466 = vpop.f32.mrf.mxu0
      %v467 = vadd.f32 0.0, %v466
      %468 = vmatmul.bf16.gmra.mxu0 %v376
      %v469 = vpop.f32.mrf.mxu0
      %v470 = vadd.f32 0.0, %v469
      %v471 = vpop.f32.mrf.mxu0
      %v472 = vadd.f32 0.0, %v471
      %473 = vdwg.mxu0
      %v474 = vld [vmem:[%s2] sm:$0x1]
      %v476 = vperm.slane %v474, 0
      %v478 = vmul.f32 %v395, %v476
      %v479 = vmul.f32 %v397, %v476
      %v480 = vmul.f32 %v400, %v476
      %v481 = vmul.f32 %v402, %v476
      %v482 = vmul.f32 %v405, %v476
      %v483 = vmul.f32 %v407, %v476
      %v484 = vmul.f32 %v410, %v476
      %v485 = vmul.f32 %v412, %v476
      %v486 = vmul.f32 %v415, %v476
      %v487 = vmul.f32 %v417, %v476
      %v488 = vmul.f32 %v420, %v476
      %v489 = vmul.f32 %v422, %v476
      %v490 = vmul.f32 %v425, %v476
      %v491 = vmul.f32 %v427, %v476
      %v492 = vmul.f32 %v430, %v476
      %v493 = vmul.f32 %v432, %v476
      %v494 = vmul.f32 %v435, %v476
      %v495 = vmul.f32 %v437, %v476
      %v496 = vmul.f32 %v440, %v476
      %v497 = vmul.f32 %v442, %v476
      %v498 = vmul.f32 %v445, %v476
      %v499 = vmul.f32 %v447, %v476
      %v500 = vmul.f32 %v450, %v476
      %v501 = vmul.f32 %v452, %v476
      %v502 = vmul.f32 %v455, %v476
      %v503 = vmul.f32 %v457, %v476
      %v504 = vmul.f32 %v460, %v476
      %v505 = vmul.f32 %v462, %v476
      %v506 = vmul.f32 %v465, %v476
      %v507 = vmul.f32 %v467, %v476
      %v508 = vmul.f32 %v470, %v476
      %v509 = vmul.f32 %v472, %v476
      %v510 = vld [vmem:[%s3] sm:$0x1]
      %v512 = vperm.slane %v510, 0
      %v514 = vadd.f32 %v478, %v512
      %v515 = vadd.f32 %v479, %v512
      %v516 = vadd.f32 %v480, %v512
      %v517 = vadd.f32 %v481, %v512
      %v518 = vadd.f32 %v482, %v512
      %v519 = vadd.f32 %v483, %v512
      %v520 = vadd.f32 %v484, %v512
      %v521 = vadd.f32 %v485, %v512
      %v522 = vadd.f32 %v486, %v512
      %v523 = vadd.f32 %v487, %v512
      %v524 = vadd.f32 %v488, %v512
      %v525 = vadd.f32 %v489, %v512
      %v526 = vadd.f32 %v490, %v512
      %v527 = vadd.f32 %v491, %v512
      %v528 = vadd.f32 %v492, %v512
      %v529 = vadd.f32 %v493, %v512
      %v530 = vadd.f32 %v494, %v512
      %v531 = vadd.f32 %v495, %v512
      %v532 = vadd.f32 %v496, %v512
      %v533 = vadd.f32 %v497, %v512
      %v534 = vadd.f32 %v498, %v512
      %v535 = vadd.f32 %v499, %v512
      %v536 = vadd.f32 %v500, %v512
      %v537 = vadd.f32 %v501, %v512
      %v538 = vadd.f32 %v502, %v512
      %v539 = vadd.f32 %v503, %v512
      %v540 = vadd.f32 %v504, %v512
      %v541 = vadd.f32 %v505, %v512
      %v542 = vadd.f32 %v506, %v512
      %v543 = vadd.f32 %v507, %v512
      %v544 = vadd.f32 %v508, %v512
      %v545 = vadd.f32 %v509, %v512
      %v546 = vmax.f32 %v514, 0.0
      %v547 = vmax.f32 %v515, 0.0
      %v548 = vmax.f32 %v516, 0.0
      %v549 = vmax.f32 %v517, 0.0
      %v550 = vmax.f32 %v518, 0.0
      %v551 = vmax.f32 %v519, 0.0
      %v552 = vmax.f32 %v520, 0.0
      %v553 = vmax.f32 %v521, 0.0
      %v554 = vmax.f32 %v522, 0.0
      %v555 = vmax.f32 %v523, 0.0
      %v556 = vmax.f32 %v524, 0.0
      %v557 = vmax.f32 %v525, 0.0
      %v558 = vmax.f32 %v526, 0.0
      %v559 = vmax.f32 %v527, 0.0
      %v560 = vmax.f32 %v528, 0.0
      %v561 = vmax.f32 %v529, 0.0
      %v562 = vmax.f32 %v530, 0.0
      %v563 = vmax.f32 %v531, 0.0
      %v564 = vmax.f32 %v532, 0.0
      %v565 = vmax.f32 %v533, 0.0
      %v566 = vmax.f32 %v534, 0.0
      %v567 = vmax.f32 %v535, 0.0
      %v568 = vmax.f32 %v536, 0.0
      %v569 = vmax.f32 %v537, 0.0
      %v570 = vmax.f32 %v538, 0.0
      %v571 = vmax.f32 %v539, 0.0
      %v572 = vmax.f32 %v540, 0.0
      %v573 = vmax.f32 %v541, 0.0
      %v574 = vmax.f32 %v542, 0.0
      %v575 = vmax.f32 %v543, 0.0
      %v576 = vmax.f32 %v544, 0.0
      %v577 = vmax.f32 %v545, 0.0
      %v578 = vpack.c.bf16 %v546, %v546
      %v579 = vpack.c.bf16 %v547, %v547
      %v580 = vpack.c.bf16 %v548, %v548
      %v581 = vpack.c.bf16 %v549, %v549
      %v582 = vpack.c.bf16 %v550, %v550
      %v583 = vpack.c.bf16 %v551, %v551
      %v584 = vpack.c.bf16 %v552, %v552
      %v585 = vpack.c.bf16 %v553, %v553
      %v586 = vpack.c.bf16 %v554, %v554
      %v587 = vpack.c.bf16 %v555, %v555
      %v588 = vpack.c.bf16 %v556, %v556
      %v589 = vpack.c.bf16 %v557, %v557
      %v590 = vpack.c.bf16 %v558, %v558
      %v591 = vpack.c.bf16 %v559, %v559
      %v592 = vpack.c.bf16 %v560, %v560
      %v593 = vpack.c.bf16 %v561, %v561
      %v594 = vpack.c.bf16 %v562, %v562
      %v595 = vpack.c.bf16 %v563, %v563
      %v596 = vpack.c.bf16 %v564, %v564
      %v597 = vpack.c.bf16 %v565, %v565
      %v598 = vpack.c.bf16 %v566, %v566
      %v599 = vpack.c.bf16 %v567, %v567
      %v600 = vpack.c.bf16 %v568, %v568
      %v601 = vpack.c.bf16 %v569, %v569
      %v602 = vpack.c.bf16 %v570, %v570
      %v603 = vpack.c.bf16 %v571, %v571
      %v604 = vpack.c.bf16 %v572, %v572
      %v605 = vpack.c.bf16 %v573, %v573
      %v606 = vpack.c.bf16 %v574, %v574
      %v607 = vpack.c.bf16 %v575, %v575
      %v608 = vpack.c.bf16 %v576, %v576
      %v609 = vpack.c.bf16 %v577, %v577
      %vm610 = vcmask 60416
      %611 = vst.msk [vmem:[%s199] sm:$0xf] %vm610, %v578
      %612 = vst.msk [vmem:[%s199 + $0x4] sm:$0xf] %vm610, %v579
      %613 = vst.msk [vmem:[%s199 + $0x8] sm:$0xf] %vm610, %v580
      %614 = vst.msk [vmem:[%s199 + $0xc] sm:$0xf] %vm610, %v581
      %615 = vst.msk [vmem:[%s199 + $0x10] sm:$0xf] %vm610, %v582
      %616 = vst.msk [vmem:[%s199 + $0x14] sm:$0xf] %vm610, %v583
      %617 = vst.msk [vmem:[%s199 + $0x18] sm:$0xf] %vm610, %v584
      %618 = vst.msk [vmem:[%s199 + $0x1c] sm:$0xf] %vm610, %v585
      %619 = vst.msk [vmem:[%s199 + $0x20] sm:$0xf] %vm610, %v586
      %620 = vst.msk [vmem:[%s199 + $0x24] sm:$0xf] %vm610, %v587
      %621 = vst.msk [vmem:[%s199 + $0x28] sm:$0xf] %vm610, %v588
      %622 = vst.msk [vmem:[%s199 + $0x2c] sm:$0xf] %vm610, %v589
      %623 = vst.msk [vmem:[%s199 + $0x30] sm:$0xf] %vm610, %v590
      %624 = vst.msk [vmem:[%s199 + $0x34] sm:$0xf] %vm610, %v591
      %625 = vst.msk [vmem:[%s199 + $0x38] sm:$0xf] %vm610, %v592
      %626 = vst.msk [vmem:[%s199 + $0x3c] sm:$0xf] %vm610, %v593
      %627 = vst.msk [vmem:[%s199 + $0x40] sm:$0xf] %vm610, %v594
      %628 = vst.msk [vmem:[%s199 + $0x44] sm:$0xf] %vm610, %v595
      %629 = vst.msk [vmem:[%s199 + $0x48] sm:$0xf] %vm610, %v596
      %630 = vst.msk [vmem:[%s199 + $0x4c] sm:$0xf] %vm610, %v597
      %631 = vst.msk [vmem:[%s199 + $0x50] sm:$0xf] %vm610, %v598
      %632 = vst.msk [vmem:[%s199 + $0x54] sm:$0xf] %vm610, %v599
      %633 = vst.msk [vmem:[%s199 + $0x58] sm:$0xf] %vm610, %v600
      %634 = vst.msk [vmem:[%s199 + $0x5c] sm:$0xf] %vm610, %v601
      %635 = vst.msk [vmem:[%s199 + $0x60] sm:$0xf] %vm610, %v602
      %636 = vst.msk [vmem:[%s199 + $0x64] sm:$0xf] %vm610, %v603
      %637 = vst.msk [vmem:[%s199 + $0x68] sm:$0xf] %vm610, %v604
      %638 = vst.msk [vmem:[%s199 + $0x6c] sm:$0xf] %vm610, %v605
      %639 = vst.msk [vmem:[%s199 + $0x70] sm:$0xf] %vm610, %v606
      %640 = vst.msk [vmem:[%s199 + $0x74] sm:$0xf] %vm610, %v607
      %641 = vst.msk [vmem:[%s199 + $0x78] sm:$0xf] %vm610, %v608
      %642 = vst.msk [vmem:[%s199 + $0x7c] sm:$0xf] %vm610, %v609
      %s643 = smul.u32 32, %s15
      %p644 = scmp.lt.s32.totalorder %s643, 63
      %s645 = scalar_select %p644, %s643, 63
      %s646 = smul.addr %s645, 4
      %s647 = scalar_lea.vmem %s4, %s646
      // Predicated region
      $region37: #{retrain_autodeeplab2_forward.7} parent=35 // pred_check
        %p648 = pneg %p122
      $region38: #{retrain_autodeeplab2_forward.7} parent=35 // pred_check_branch
        %650 = sbr.rel (%p648) target = $region40
      $region39: #{retrain_autodeeplab2_forward.7} parent=35 // pred_region
        %s651 = smul.u32 32, %s15
      $region40: #{retrain_autodeeplab2_forward.7} parent=35 // pred_fallthru
        _
    $region36: #{retrain_autodeeplab2_forward.7} parent=5 // pred_fallthru
      _
    %p652 = scmp.le.s32.totalorder 2, %s10
    // Predicated region
    $region41: #{retrain_autodeeplab2_forward.7} parent=5 // pred_check
      %p653 = pneg %p652
    $region42: #{retrain_autodeeplab2_forward.7} parent=5 // pred_check_branch
      %655 = sbr.rel (%p653) target = $region44
    $region43: #{retrain_autodeeplab2_forward.7} parent=5 // pred_region
      %s656 = ssub.s32 %s10, 2
      // Predicated region
      $region45: #{retrain_autodeeplab2_forward.7} parent=43 // pred_check
        %p657 = pneg %p128
      $region46: #{retrain_autodeeplab2_forward.7} parent=43 // pred_check_branch
        %659 = sbr.rel (%p657) target = $region48
      $region47: #{retrain_autodeeplab2_forward.7} parent=43 // pred_region
        %s660 = smul.u32 32, %s16
        %p661 = scmp.lt.s32.totalorder %s660, 63
        %s662 = scalar_select %p661, %s660, 63
        %s663 = smul.addr %s662, 4
        %s664 = scalar_lea.vmem %s4, %s663
      $region48: #{retrain_autodeeplab2_forward.7} parent=43 // pred_fallthru
        _
    $region44: #{retrain_autodeeplab2_forward.7} parent=5 // pred_fallthru
      _
  $region6: #{retrain_autodeeplab2_forward.7} parent=0 // loop_footer
    %s14 = sadd.s32 1, %s10
  $region7: #{retrain_autodeeplab2_forward.7} parent=0 // loop_footer_branch
    %9 = sbr.rel target = $region3
  $region8: #{retrain_autodeeplab2_forward.7} parent=0 // loop_exit
    _

// kernel: retrain_autodeeplab2_forward.8
$region0: #{retrain_autodeeplab2_forward.8}
  #allocation0 [shape = 'u32[]', space=smem, size = 0x4, offset = 0x4, fixed_abs, tag = 'smem constant byte address 0x4 - core index']
  #allocation1 [shape = 'u32[72,128]{1,0:T(1,128)}', space=vmem, size = 0x9000, scoped, tag = 'internal scratch']
  %s0 = inlined_call_operand.vmem [shape: bf16[128,72], index: 0, kind: input, shape index: {}]
  %s1 = inlined_call_operand.vmem [shape: bf16[72,8], index: 1, kind: input, shape index: {}]
  %s2 = inlined_call_operand.vmem [shape: f32[1,8], index: 2, kind: input, shape index: {}]
  %s3 = inlined_call_operand.vmem [shape: f32[1,8], index: 3, kind: input, shape index: {}]
  %s4 = inlined_call_operand.vmem [shape: bf16[128,8], index: 4, kind: output, shape index: {}]
  %s5 = sld [smem:[#allocation0]]
  $region26: #{retrain_autodeeplab2_forward.8} parent=0
    _
  %s7 = ssub.s32 1, %s5
  %s8 = scalar_select 0, %s7, %s5
  // Predicated region
  $region2: #{retrain_autodeeplab2_forward.8} parent=0 // pred_check
    _
  $region3: #{retrain_autodeeplab2_forward.8} parent=0 // pred_check_branch
    %10 = sbr.rel (0) target = $region5
  $region4: #{retrain_autodeeplab2_forward.8} parent=0 // pred_region
    _
  $region5: #{retrain_autodeeplab2_forward.8} parent=0 // pred_fallthru
    _
  // Predicated region
  $region6: #{retrain_autodeeplab2_forward.8} parent=0 // pred_check
    _
  $region7: #{retrain_autodeeplab2_forward.8} parent=0 // pred_check_branch
    %12 = sbr.rel (0) target = $region9
  $region8: #{retrain_autodeeplab2_forward.8} parent=0 // pred_region
    _
  $region9: #{retrain_autodeeplab2_forward.8} parent=0 // pred_fallthru
    _
  // Predicated region
  $region10: #{retrain_autodeeplab2_forward.8} parent=0 // pred_check
    _
  $region11: #{retrain_autodeeplab2_forward.8} parent=0 // pred_check_branch
    %14 = sbr.rel (0) target = $region13
  $region12: #{retrain_autodeeplab2_forward.8} parent=0 // pred_region
    _
  $region13: #{retrain_autodeeplab2_forward.8} parent=0 // pred_fallthru
    _
  // Predicated region
  $region14: #{retrain_autodeeplab2_forward.8} parent=0 // pred_check
    _
  $region15: #{retrain_autodeeplab2_forward.8} parent=0 // pred_check_branch
    %16 = sbr.rel (0) target = $region17
  $region16: #{retrain_autodeeplab2_forward.8} parent=0 // pred_region
    _
  $region17: #{retrain_autodeeplab2_forward.8} parent=0 // pred_fallthru
    _
  %v18 = vld [vmem:[%s0] sm:$0xf]
  %v19 = vld [vmem:[%s0 + $0x4] sm:$0xf]
  %v20 = vld [vmem:[%s0 + $0x8] sm:$0xf]
  %v21 = vld [vmem:[%s0 + $0xc] sm:$0xf]
  %v22 = vld [vmem:[%s0 + $0x10] sm:$0xf]
  %v23 = vld [vmem:[%s0 + $0x14] sm:$0xf]
  %v24 = vld [vmem:[%s0 + $0x18] sm:$0xf]
  %v25 = vld [vmem:[%s0 + $0x1c] sm:$0xf]
  %v26 = vld [vmem:[%s0 + $0x20] sm:$0xf]
  %v27 = vld [vmem:[%s0 + $0x24] sm:$0xf]
  %v28 = vld [vmem:[%s0 + $0x28] sm:$0xf]
  %v29 = vld [vmem:[%s0 + $0x2c] sm:$0xf]
  %v30 = vld [vmem:[%s0 + $0x30] sm:$0xf]
  %v31 = vld [vmem:[%s0 + $0x34] sm:$0xf]
  %v32 = vld [vmem:[%s0 + $0x38] sm:$0xf]
  %v33 = vld [vmem:[%s0 + $0x3c] sm:$0xf]
  %v34 = vld [vmem:[%s1] sm:$0xf]
  %v35 = vld [vmem:[%s1 + $0x4] sm:$0xf]
  %v36 = vld [vmem:[%s1 + $0x8] sm:$0xf]
  %v37 = vld [vmem:[%s1 + $0xc] sm:$0xf]
  %v38 = vld [vmem:[%s1 + $0x10] sm:$0xf]
  %v39 = vld [vmem:[%s1 + $0x14] sm:$0xf]
  %v40 = vld [vmem:[%s1 + $0x18] sm:$0xf]
  %v41 = vld [vmem:[%s1 + $0x1c] sm:$0xf]
  %v42 = vld [vmem:[%s1 + $0x20] sm:$0xf]
  %v59 = vunpack.c.l.b16 %v18
  %v60 = vunpack.c.l.b16 %v19
  %v61 = vunpack.c.l.b16 %v20
  %v62 = vunpack.c.l.b16 %v21
  %v63 = vunpack.c.l.b16 %v22
  %v64 = vunpack.c.l.b16 %v23
  %v65 = vunpack.c.l.b16 %v24
  %v66 = vunpack.c.l.b16 %v25
  %v67 = vunpack.c.l.b16 %v26
  %v68 = vunpack.c.l.b16 %v27
  %v69 = vunpack.c.l.b16 %v28
  %v70 = vunpack.c.l.b16 %v29
  %v71 = vunpack.c.l.b16 %v30
  %v72 = vunpack.c.l.b16 %v31
  %v73 = vunpack.c.l.b16 %v32
  %v74 = vunpack.c.l.b16 %v33
  %v75 = vpack.c.b16 %v60, %v59
  %v76 = vpack.c.b16 %v62, %v61
  %v77 = vpack.c.b16 %v64, %v63
  %v78 = vpack.c.b16 %v66, %v65
  %v79 = vpack.c.b16 %v68, %v67
  %v80 = vpack.c.b16 %v70, %v69
  %v81 = vpack.c.b16 %v72, %v71
  %v82 = vpack.c.b16 %v74, %v73
  %v92 = vunpack.c.l.b16 %v34
  %v93 = vunpack.c.l.b16 %v35
  %v94 = vunpack.c.l.b16 %v36
  %v95 = vunpack.c.l.b16 %v37
  %v96 = vunpack.c.l.b16 %v38
  %v97 = vunpack.c.l.b16 %v39
  %v98 = vunpack.c.l.b16 %v40
  %v99 = vunpack.c.l.b16 %v41
  %v100 = vunpack.c.l.b16 %v42
  %v101 = vpack.c.b16 %v93, %v92
  %v102 = vpack.c.b16 %v95, %v94
  %v103 = vpack.c.b16 %v97, %v96
  %v104 = vpack.c.b16 %v99, %v98
  %v105 = vpack.c.b16 %v100, %v100
  %vm110 = vcmask 588800
  %v112 = vsel %vm110, %v75, 0
  %v115 = vsel %vm110, %v76, 0
  %v118 = vsel %vm110, %v77, 0
  %v121 = vsel %vm110, %v78, 0
  %v124 = vsel %vm110, %v79, 0
  %v127 = vsel %vm110, %v80, 0
  %v130 = vsel %vm110, %v81, 0
  %v133 = vsel %vm110, %v82, 0
  %vm135 = vcmask 1043456
  %v137 = vsel %vm135, %v105, 0
  %139 = vmatpush.bf16.msra.mxu0 0
  %140 = vmatpush.bf16.msra.mxu0 0
  %141 = vmatpush.bf16.msra.mxu0 0
  %142 = vmatpush.bf16.msra.mxu0 %v137
  %143 = vmatpush.bf16.msra.mxu0 %v104
  %144 = vmatpush.bf16.msra.mxu0 %v103
  %145 = vmatpush.bf16.msra.mxu0 %v102
  %146 = vmatpush.bf16.msra.mxu0 %v101
  %147 = vmatmul.bf16.gmra.mxu0 %v112
  %v148 = vpop.f32.mrf.mxu0
  %v149 = vadd.f32 0.0, %v148
  %v150 = vpop.f32.mrf.mxu0
  %v151 = vadd.f32 0.0, %v150
  %152 = vmatmul.bf16.gmra.mxu0 %v115
  %v153 = vpop.f32.mrf.mxu0
  %v154 = vadd.f32 0.0, %v153
  %v155 = vpop.f32.mrf.mxu0
  %v156 = vadd.f32 0.0, %v155
  %157 = vmatmul.bf16.gmra.mxu0 %v118
  %v158 = vpop.f32.mrf.mxu0
  %v159 = vadd.f32 0.0, %v158
  %v160 = vpop.f32.mrf.mxu0
  %v161 = vadd.f32 0.0, %v160
  %162 = vmatmul.bf16.gmra.mxu0 %v121
  %v163 = vpop.f32.mrf.mxu0
  %v164 = vadd.f32 0.0, %v163
  %v165 = vpop.f32.mrf.mxu0
  %v166 = vadd.f32 0.0, %v165
  %167 = vmatmul.bf16.gmra.mxu0 %v124
  %v168 = vpop.f32.mrf.mxu0
  %v169 = vadd.f32 0.0, %v168
  %v170 = vpop.f32.mrf.mxu0
  %v171 = vadd.f32 0.0, %v170
  %172 = vmatmul.bf16.gmra.mxu0 %v127
  %v173 = vpop.f32.mrf.mxu0
  %v174 = vadd.f32 0.0, %v173
  %v175 = vpop.f32.mrf.mxu0
  %v176 = vadd.f32 0.0, %v175
  %177 = vmatmul.bf16.gmra.mxu0 %v130
  %v178 = vpop.f32.mrf.mxu0
  %v179 = vadd.f32 0.0, %v178
  %v180 = vpop.f32.mrf.mxu0
  %v181 = vadd.f32 0.0, %v180
  %182 = vmatmul.bf16.gmra.mxu0 %v133
  %v183 = vpop.f32.mrf.mxu0
  %v184 = vadd.f32 0.0, %v183
  %v185 = vpop.f32.mrf.mxu0
  %v186 = vadd.f32 0.0, %v185
  %187 = vdwg.mxu0
  %v188 = vld [vmem:[%s2] sm:$0x1]
  %v190 = vperm.slane %v188, 0
  %v192 = vmul.f32 %v149, %v190
  %v193 = vmul.f32 %v151, %v190
  %v194 = vmul.f32 %v154, %v190
  %v195 = vmul.f32 %v156, %v190
  %v196 = vmul.f32 %v159, %v190
  %v197 = vmul.f32 %v161, %v190
  %v198 = vmul.f32 %v164, %v190
  %v199 = vmul.f32 %v166, %v190
  %v200 = vmul.f32 %v169, %v190
  %v201 = vmul.f32 %v171, %v190
  %v202 = vmul.f32 %v174, %v190
  %v203 = vmul.f32 %v176, %v190
  %v204 = vmul.f32 %v179, %v190
  %v205 = vmul.f32 %v181, %v190
  %v206 = vmul.f32 %v184, %v190
  %v207 = vmul.f32 %v186, %v190
  %v208 = vld [vmem:[%s3] sm:$0x1]
  %v210 = vperm.slane %v208, 0
  %v212 = vadd.f32 %v192, %v210
  %v213 = vadd.f32 %v193, %v210
  %v214 = vadd.f32 %v194, %v210
  %v215 = vadd.f32 %v195, %v210
  %v216 = vadd.f32 %v196, %v210
  %v217 = vadd.f32 %v197, %v210
  %v218 = vadd.f32 %v198, %v210
  %v219 = vadd.f32 %v199, %v210
  %v220 = vadd.f32 %v200, %v210
  %v221 = vadd.f32 %v201, %v210
  %v222 = vadd.f32 %v202, %v210
  %v223 = vadd.f32 %v203, %v210
  %v224 = vadd.f32 %v204, %v210
  %v225 = vadd.f32 %v205, %v210
  %v226 = vadd.f32 %v206, %v210
  %v227 = vadd.f32 %v207, %v210
  %v228 = vmax.f32 %v212, 0.0
  %v229 = vmax.f32 %v213, 0.0
  %v230 = vmax.f32 %v214, 0.0
  %v231 = vmax.f32 %v215, 0.0
  %v232 = vmax.f32 %v216, 0.0
  %v233 = vmax.f32 %v217, 0.0
  %v234 = vmax.f32 %v218, 0.0
  %v235 = vmax.f32 %v219, 0.0
  %v236 = vmax.f32 %v220, 0.0
  %v237 = vmax.f32 %v221, 0.0
  %v238 = vmax.f32 %v222, 0.0
  %v239 = vmax.f32 %v223, 0.0
  %v240 = vmax.f32 %v224, 0.0
  %v241 = vmax.f32 %v225, 0.0
  %v242 = vmax.f32 %v226, 0.0
  %v243 = vmax.f32 %v227, 0.0
  %v244 = vpack.c.bf16 %v228, %v228
  %v245 = vpack.c.bf16 %v229, %v229
  %v246 = vpack.c.bf16 %v230, %v230
  %v247 = vpack.c.bf16 %v231, %v231
  %v248 = vpack.c.bf16 %v232, %v232
  %v249 = vpack.c.bf16 %v233, %v233
  %v250 = vpack.c.bf16 %v234, %v234
  %v251 = vpack.c.bf16 %v235, %v235
  %v252 = vpack.c.bf16 %v236, %v236
  %v253 = vpack.c.bf16 %v237, %v237
  %v254 = vpack.c.bf16 %v238, %v238
  %v255 = vpack.c.bf16 %v239, %v239
  %v256 = vpack.c.bf16 %v240, %v240
  %v257 = vpack.c.bf16 %v241, %v241
  %v258 = vpack.c.bf16 %v242, %v242
  %v259 = vpack.c.bf16 %v243, %v243
  %vm260 = vcmask 60416
  %261 = vst.msk [vmem:[%s4] sm:$0xf] %vm260, %v244
  %262 = vst.msk [vmem:[%s4 + $0x4] sm:$0xf] %vm260, %v245
  %263 = vst.msk [vmem:[%s4 + $0x8] sm:$0xf] %vm260, %v246
  %264 = vst.msk [vmem:[%s4 + $0xc] sm:$0xf] %vm260, %v247
  %265 = vst.msk [vmem:[%s4 + $0x10] sm:$0xf] %vm260, %v248
  %266 = vst.msk [vmem:[%s4 + $0x14] sm:$0xf] %vm260, %v249
  %267 = vst.msk [vmem:[%s4 + $0x18] sm:$0xf] %vm260, %v250
  %268 = vst.msk [vmem:[%s4 + $0x1c] sm:$0xf] %vm260, %v251
  %269 = vst.msk [vmem:[%s4 + $0x20] sm:$0xf] %vm260, %v252
  %270 = vst.msk [vmem:[%s4 + $0x24] sm:$0xf] %vm260, %v253
  %271 = vst.msk [vmem:[%s4 + $0x28] sm:$0xf] %vm260, %v254
  %272 = vst.msk [vmem:[%s4 + $0x2c] sm:$0xf] %vm260, %v255
  %273 = vst.msk [vmem:[%s4 + $0x30] sm:$0xf] %vm260, %v256
  %274 = vst.msk [vmem:[%s4 + $0x34] sm:$0xf] %vm260, %v257
  %275 = vst.msk [vmem:[%s4 + $0x38] sm:$0xf] %vm260, %v258
  %276 = vst.msk [vmem:[%s4 + $0x3c] sm:$0xf] %vm260, %v259
  // Predicated region
  $region18: #{retrain_autodeeplab2_forward.8} parent=0 // pred_check
    _
  $region19: #{retrain_autodeeplab2_forward.8} parent=0 // pred_check_branch
    %278 = sbr.rel (0) target = $region21
  $region20: #{retrain_autodeeplab2_forward.8} parent=0 // pred_region
    _
  $region21: #{retrain_autodeeplab2_forward.8} parent=0 // pred_fallthru
    _
  // Predicated region
  $region22: #{retrain_autodeeplab2_forward.8} parent=0 // pred_check
    _
  $region23: #{retrain_autodeeplab2_forward.8} parent=0 // pred_check_branch
    %280 = sbr.rel (0) target = $region25
  $region24: #{retrain_autodeeplab2_forward.8} parent=0 // pred_region
    _
  $region25: #{retrain_autodeeplab2_forward.8} parent=0 // pred_fallthru
    _

// kernel: retrain_autodeeplab2_forward.9
$region0: #{retrain_autodeeplab2_forward.9}
  #allocation0 [shape = 'u32[]', space=smem, size = 0x4, offset = 0x4, fixed_abs, tag = 'smem constant byte address 0x4 - core index']
  #allocation1 [shape = 'u32[72,128]{1,0:T(1,128)}', space=vmem, size = 0x9000, scoped, tag = 'internal scratch']
  %s0 = inlined_call_operand.vmem [shape: bf16[32,72], index: 0, kind: input, shape index: {}]
  %s1 = inlined_call_operand.vmem [shape: bf16[72,16], index: 1, kind: input, shape index: {}]
  %s2 = inlined_call_operand.vmem [shape: f32[1,16], index: 2, kind: input, shape index: {}]
  %s3 = inlined_call_operand.vmem [shape: f32[1,16], index: 3, kind: input, shape index: {}]
  %s4 = inlined_call_operand.vmem [shape: bf16[32,16], index: 4, kind: output, shape index: {}]
  %s5 = sld [smem:[#allocation0]]
  $region26: #{retrain_autodeeplab2_forward.9} parent=0
    _
  %s7 = ssub.s32 1, %s5
  %s8 = scalar_select 0, %s7, %s5
  // Predicated region
  $region2: #{retrain_autodeeplab2_forward.9} parent=0 // pred_check
    _
  $region3: #{retrain_autodeeplab2_forward.9} parent=0 // pred_check_branch
    %10 = sbr.rel (0) target = $region5
  $region4: #{retrain_autodeeplab2_forward.9} parent=0 // pred_region
    _
  $region5: #{retrain_autodeeplab2_forward.9} parent=0 // pred_fallthru
    _
  // Predicated region
  $region6: #{retrain_autodeeplab2_forward.9} parent=0 // pred_check
    _
  $region7: #{retrain_autodeeplab2_forward.9} parent=0 // pred_check_branch
    %12 = sbr.rel (0) target = $region9
  $region8: #{retrain_autodeeplab2_forward.9} parent=0 // pred_region
    _
  $region9: #{retrain_autodeeplab2_forward.9} parent=0 // pred_fallthru
    _
  // Predicated region
  $region10: #{retrain_autodeeplab2_forward.9} parent=0 // pred_check
    _
  $region11: #{retrain_autodeeplab2_forward.9} parent=0 // pred_check_branch
    %14 = sbr.rel (0) target = $region13
  $region12: #{retrain_autodeeplab2_forward.9} parent=0 // pred_region
    _
  $region13: #{retrain_autodeeplab2_forward.9} parent=0 // pred_fallthru
    _
  // Predicated region
  $region14: #{retrain_autodeeplab2_forward.9} parent=0 // pred_check
    _
  $region15: #{retrain_autodeeplab2_forward.9} parent=0 // pred_check_branch
    %16 = sbr.rel (0) target = $region17
  $region16: #{retrain_autodeeplab2_forward.9} parent=0 // pred_region
    _
  $region17: #{retrain_autodeeplab2_forward.9} parent=0 // pred_fallthru
    _
  %v18 = vld [vmem:[%s0] sm:$0xf]
  %v19 = vld [vmem:[%s0 + $0x4] sm:$0xf]
  %v20 = vld [vmem:[%s0 + $0x8] sm:$0xf]
  %v21 = vld [vmem:[%s0 + $0xc] sm:$0xf]
  %v22 = vld [vmem:[%s1] sm:$0xf]
  %v23 = vld [vmem:[%s1 + $0x4] sm:$0xf]
  %v24 = vld [vmem:[%s1 + $0x8] sm:$0xf]
  %v25 = vld [vmem:[%s1 + $0xc] sm:$0xf]
  %v26 = vld [vmem:[%s1 + $0x10] sm:$0xf]
  %v27 = vld [vmem:[%s1 + $0x14] sm:$0xf]
  %v28 = vld [vmem:[%s1 + $0x18] sm:$0xf]
  %v29 = vld [vmem:[%s1 + $0x1c] sm:$0xf]
  %v30 = vld [vmem:[%s1 + $0x20] sm:$0xf]
  %v35 = vunpack.c.l.b16 %v18
  %v36 = vunpack.c.l.b16 %v19
  %v37 = vunpack.c.l.b16 %v20
  %v38 = vunpack.c.l.b16 %v21
  %v39 = vpack.c.b16 %v36, %v35
  %v40 = vpack.c.b16 %v38, %v37
  %v50 = vunpack.c.l.b16 %v22
  %v51 = vunpack.c.l.b16 %v23
  %v52 = vunpack.c.l.b16 %v24
  %v53 = vunpack.c.l.b16 %v25
  %v54 = vunpack.c.l.b16 %v26
  %v55 = vunpack.c.l.b16 %v27
  %v56 = vunpack.c.l.b16 %v28
  %v57 = vunpack.c.l.b16 %v29
  %v58 = vunpack.c.l.b16 %v30
  %v59 = vpack.c.b16 %v51, %v50
  %v60 = vpack.c.b16 %v53, %v52
  %v61 = vpack.c.b16 %v55, %v54
  %v62 = vpack.c.b16 %v57, %v56
  %v63 = vpack.c.b16 %v58, %v58
  %vm68 = vcmask 588800
  %v70 = vsel %vm68, %v39, 0
  %v73 = vsel %vm68, %v40, 0
  %vm75 = vcmask 1043456
  %v77 = vsel %vm75, %v63, 0
  %79 = vmatpush.bf16.msra.mxu0 0
  %80 = vmatpush.bf16.msra.mxu0 0
  %81 = vmatpush.bf16.msra.mxu0 0
  %82 = vmatpush.bf16.msra.mxu0 %v77
  %83 = vmatpush.bf16.msra.mxu0 %v62
  %84 = vmatpush.bf16.msra.mxu0 %v61
  %85 = vmatpush.bf16.msra.mxu0 %v60
  %86 = vmatpush.bf16.msra.mxu0 %v59
  %87 = vmatmul.bf16.gmra.mxu0 %v70
  %v88 = vpop.f32.mrf.mxu0
  %v89 = vadd.f32 0.0, %v88
  %v90 = vpop.f32.mrf.mxu0
  %v91 = vadd.f32 0.0, %v90
  %92 = vmatmul.bf16.gmra.mxu0 %v73
  %v93 = vpop.f32.mrf.mxu0
  %v94 = vadd.f32 0.0, %v93
  %v95 = vpop.f32.mrf.mxu0
  %v96 = vadd.f32 0.0, %v95
  %97 = vdwg.mxu0
  %v98 = vld [vmem:[%s2] sm:$0x1]
  %v100 = vperm.slane %v98, 0
  %v102 = vmul.f32 %v89, %v100
  %v103 = vmul.f32 %v91, %v100
  %v104 = vmul.f32 %v94, %v100
  %v105 = vmul.f32 %v96, %v100
  %v106 = vld [vmem:[%s3] sm:$0x1]
  %v108 = vperm.slane %v106, 0
  %v110 = vadd.f32 %v102, %v108
  %v111 = vadd.f32 %v103, %v108
  %v112 = vadd.f32 %v104, %v108
  %v113 = vadd.f32 %v105, %v108
  %v114 = vmax.f32 %v110, 0.0
  %v115 = vmax.f32 %v111, 0.0
  %v116 = vmax.f32 %v112, 0.0
  %v117 = vmax.f32 %v113, 0.0
  %v118 = vpack.c.bf16 %v114, %v114
  %v119 = vpack.c.bf16 %v115, %v115
  %v120 = vpack.c.bf16 %v116, %v116
  %v121 = vpack.c.bf16 %v117, %v117
  %vm122 = vcmask 125952
  %123 = vst.msk [vmem:[%s4] sm:$0xf] %vm122, %v118
  %124 = vst.msk [vmem:[%s4 + $0x4] sm:$0xf] %vm122, %v119
  %125 = vst.msk [vmem:[%s4 + $0x8] sm:$0xf] %vm122, %v120
  %126 = vst.msk [vmem:[%s4 + $0xc] sm:$0xf] %vm122, %v121
  // Predicated region
  $region18: #{retrain_autodeeplab2_forward.9} parent=0 // pred_check
    _
  $region19: #{retrain_autodeeplab2_forward.9} parent=0 // pred_check_branch
    %128 = sbr.rel (0) target = $region21
  $region20: #{retrain_autodeeplab2_forward.9} parent=0 // pred_region
    _
  $region21: #{retrain_autodeeplab2_forward.9} parent=0 // pred_fallthru
    _
  // Predicated region
  $region22: #{retrain_autodeeplab2_forward.9} parent=0 // pred_check
    _
  $region23: #{retrain_autodeeplab2_forward.9} parent=0 // pred_check_branch
    %130 = sbr.rel (0) target = $region25
  $region24: #{retrain_autodeeplab2_forward.9} parent=0 // pred_region
    _
  $region25: #{retrain_autodeeplab2_forward.9} parent=0 // pred_fallthru
    _

// kernel: retrain_autodeeplab2_forward.10
$region0: #{retrain_autodeeplab2_forward.10}
  #allocation0 [shape = 'u32[]', space=smem, size = 0x4, offset = 0x4, fixed_abs, tag = 'smem constant byte address 0x4 - core index']
  #allocation1 [shape = 'u32[72,128]{1,0:T(1,128)}', space=vmem, size = 0x9000, scoped, tag = 'internal scratch']
  %s0 = inlined_call_operand.vmem [shape: bf16[4,32,144], index: 0, kind: input, shape index: {}]
  %s1 = inlined_call_operand.vmem [shape: bf16[4,144,256], index: 1, kind: input, shape index: {}]
  %s2 = inlined_call_operand.vmem [shape: f32[4,1,256], index: 2, kind: input, shape index: {}]
  %s3 = inlined_call_operand.vmem [shape: f32[4,1,256], index: 3, kind: input, shape index: {}]
  %s4 = inlined_call_operand.vmem [shape: bf16[4,32,256], index: 4, kind: output, shape index: {}]
  %s5 = sld [smem:[#allocation0]]
  $region49: #{retrain_autodeeplab2_forward.10} parent=0
    _
  %s7 = ssub.s32 1, %s5
  %s8 = scalar_select 0, %s7, %s5
  loop: start=0, step=1, limit=6
  $region2: #{retrain_autodeeplab2_forward.10} parent=0 // loop_pre_header
    _
  $region3: #{retrain_autodeeplab2_forward.10} parent=0 // loop_header
    %s10 = sphi 0, %s14
    %p11 = scmp.ge.s32.totalorder %s10, 6
    %s17 = sphi 0, %s29
    %s18 = sphi 0, %s25
    %s19 = sphi 0, %s17
    %s20 = sphi 0, %s18
    %s21 = sphi 0, %s19
    %s22 = sphi 0, %s20
    %s34 = sphi 0, %s36
    %s37 = sphi 0, %s34
    %s38 = sphi 0, %s37
    %s54 = sphi 0, %s38
    %s60 = sphi 0, %s62
    %s63 = sphi 0, %s60
    %s64 = sphi 0, %s63
    %s80 = sphi 0, %s64
    %s86 = sphi 0, %s88
    %s89 = sphi 0, %s86
    %s90 = sphi 0, %s89
    %s106 = sphi 0, %s90
    %s112 = sphi 0, %s114
    %s115 = sphi 0, %s112
    %s116 = sphi 0, %s115
    %s132 = sphi 0, %s116
    %s140 = sphi 0, %s142
    %s143 = sphi 0, %s140
    %s144 = sphi 0, %s143
    %s160 = sphi 0, %s144
  $region4: #{retrain_autodeeplab2_forward.10} parent=0 // loop_header_branch
    %13 = sbr.rel (%p11) target = $region8
  $region5: #{retrain_autodeeplab2_forward.10} parent=0 // loop_body
    %s15 = ssub.s32 %s10, 1
    %s16 = ssub.s32 %s10, 2
    %s23 = sadd.s32 1, %s18
    %p24 = scmp.ge.s32.totalorder %s23, 1
    %s25 = scalar_select %p24, 0, %s23
    %s26 = sadd.s32 1, %s17
    %s27 = scalar_select %p24, %s26, %s17
    %p28 = scmp.ge.s32.totalorder %s27, 4
    %s29 = scalar_select %p28, 0, %s27
    %s30 = ssub.s32 %s17, %s29
    %s31 = ssub.s32 %s18, %s25
    %s32 = sor.u32 %s30, %s31
    %p33 = scmp.eq.s32.totalorder %s32, 0
    %s35 = sadd.s32 %s34, 1
    %s36 = scalar_select %p33, %s34, %s35
    %p39 = pneg %p33
    %p40 = scmp.eq.s32.totalorder %s10, 3
    %p41 = por %p39, %p40
    %p42 = scmp.ne.s32.totalorder %s34, %s37
    %p43 = scmp.eq.s32.totalorder %s10, 0
    %p44 = por %p42, %p43
    %p45 = scmp.ne.s32.totalorder %s34, %s37
    %p46 = scmp.eq.s32.totalorder %s15, 3
    %p47 = por %p45, %p46
    %p48 = scmp.ne.s32.totalorder %s37, %s38
    %p49 = scmp.eq.s32.totalorder %s15, 0
    %p50 = por %p48, %p49
    %p51 = scmp.ne.s32.totalorder %s37, %s38
    %p52 = scmp.eq.s32.totalorder %s16, 3
    %p53 = por %p51, %p52
    %p55 = scmp.ne.s32.totalorder %s38, %s54
    %p56 = scmp.eq.s32.totalorder %s16, 0
    %p57 = por %p55, %p56
    %s58 = ssub.s32 %s17, %s29
    %p59 = scmp.eq.s32.totalorder %s58, 0
    %s61 = sadd.s32 %s60, 1
    %s62 = scalar_select %p59, %s60, %s61
    %p65 = pneg %p59
    %p66 = scmp.eq.s32.totalorder %s10, 3
    %p67 = por %p65, %p66
    %p68 = scmp.ne.s32.totalorder %s60, %s63
    %p69 = scmp.eq.s32.totalorder %s10, 0
    %p70 = por %p68, %p69
    %p71 = scmp.ne.s32.totalorder %s60, %s63
    %p72 = scmp.eq.s32.totalorder %s15, 3
    %p73 = por %p71, %p72
    %p74 = scmp.ne.s32.totalorder %s63, %s64
    %p75 = scmp.eq.s32.totalorder %s15, 0
    %p76 = por %p74, %p75
    %p77 = scmp.ne.s32.totalorder %s63, %s64
    %p78 = scmp.eq.s32.totalorder %s16, 3
    %p79 = por %p77, %p78
    %p81 = scmp.ne.s32.totalorder %s64, %s80
    %p82 = scmp.eq.s32.totalorder %s16, 0
    %p83 = por %p81, %p82
    %s84 = ssub.s32 %s17, %s29
    %p85 = scmp.eq.s32.totalorder %s84, 0
    %s87 = sadd.s32 %s86, 1
    %s88 = scalar_select %p85, %s86, %s87
    %p91 = pneg %p85
    %p92 = scmp.eq.s32.totalorder %s10, 3
    %p93 = por %p91, %p92
    %p94 = scmp.ne.s32.totalorder %s86, %s89
    %p95 = scmp.eq.s32.totalorder %s10, 0
    %p96 = por %p94, %p95
    %p97 = scmp.ne.s32.totalorder %s86, %s89
    %p98 = scmp.eq.s32.totalorder %s15, 3
    %p99 = por %p97, %p98
    %p100 = scmp.ne.s32.totalorder %s89, %s90
    %p101 = scmp.eq.s32.totalorder %s15, 0
    %p102 = por %p100, %p101
    %p103 = scmp.ne.s32.totalorder %s89, %s90
    %p104 = scmp.eq.s32.totalorder %s16, 3
    %p105 = por %p103, %p104
    %p107 = scmp.ne.s32.totalorder %s90, %s106
    %p108 = scmp.eq.s32.totalorder %s16, 0
    %p109 = por %p107, %p108
    %s110 = ssub.s32 %s17, %s29
    %p111 = scmp.eq.s32.totalorder %s110, 0
    %s113 = sadd.s32 %s112, 1
    %s114 = scalar_select %p111, %s112, %s113
    %p117 = pneg %p111
    %p118 = scmp.eq.s32.totalorder %s10, 3
    %p119 = por %p117, %p118
    %p120 = scmp.ne.s32.totalorder %s112, %s115
    %p121 = scmp.eq.s32.totalorder %s10, 0
    %p122 = por %p120, %p121
    %p123 = scmp.ne.s32.totalorder %s112, %s115
    %p124 = scmp.eq.s32.totalorder %s15, 3
    %p125 = por %p123, %p124
    %p126 = scmp.ne.s32.totalorder %s115, %s116
    %p127 = scmp.eq.s32.totalorder %s15, 0
    %p128 = por %p126, %p127
    %p129 = scmp.ne.s32.totalorder %s115, %s116
    %p130 = scmp.eq.s32.totalorder %s16, 3
    %p131 = por %p129, %p130
    %p133 = scmp.ne.s32.totalorder %s116, %s132
    %p134 = scmp.eq.s32.totalorder %s16, 0
    %p135 = por %p133, %p134
    %s136 = ssub.s32 %s17, %s29
    %s137 = ssub.s32 %s18, %s25
    %s138 = sor.u32 %s136, %s137
    %p139 = scmp.eq.s32.totalorder %s138, 0
    %s141 = sadd.s32 %s140, 1
    %s142 = scalar_select %p139, %s140, %s141
    %p145 = pneg %p139
    %p146 = scmp.eq.s32.totalorder %s10, 3
    %p147 = por %p145, %p146
    %p148 = scmp.ne.s32.totalorder %s140, %s143
    %p149 = scmp.eq.s32.totalorder %s10, 0
    %p150 = por %p148, %p149
    %p151 = scmp.ne.s32.totalorder %s140, %s143
    %p152 = scmp.eq.s32.totalorder %s15, 3
    %p153 = por %p151, %p152
    %p154 = scmp.ne.s32.totalorder %s143, %s144
    %p155 = scmp.eq.s32.totalorder %s15, 0
    %p156 = por %p154, %p155
    %p157 = scmp.ne.s32.totalorder %s143, %s144
    %p158 = scmp.eq.s32.totalorder %s16, 3
    %p159 = por %p157, %p158
    %p161 = scmp.ne.s32.totalorder %s144, %s160
    %p162 = scmp.eq.s32.totalorder %s16, 0
    %p163 = por %p161, %p162
    %p164 = scmp.le.s32.totalorder 1, %s10
    %p165 = scmp.lt.s32.totalorder %s10, 5
    %p166 = pnand %p164, %p165
    %p167 = pneg %p166
    // Predicated region
    $region9: #{retrain_autodeeplab2_forward.10} parent=5 // pred_check
      _
    $region10: #{retrain_autodeeplab2_forward.10} parent=5 // pred_check_branch
      %169 = sbr.rel (%p166) target = $region12
    $region11: #{retrain_autodeeplab2_forward.10} parent=5 // pred_region
      %s170 = ssub.s32 %s10, 1
    $region12: #{retrain_autodeeplab2_forward.10} parent=5 // pred_fallthru
      _
    %p171 = scmp.lt.s32.totalorder %s10, 4
    // Predicated region
    $region13: #{retrain_autodeeplab2_forward.10} parent=5 // pred_check
      %p172 = pneg %p171
    $region14: #{retrain_autodeeplab2_forward.10} parent=5 // pred_check_branch
      %174 = sbr.rel (%p172) target = $region16
    $region15: #{retrain_autodeeplab2_forward.10} parent=5 // pred_region
      // Predicated region
      $region17: #{retrain_autodeeplab2_forward.10} parent=15 // pred_check
        %p175 = pneg %p44
      $region18: #{retrain_autodeeplab2_forward.10} parent=15 // pred_check_branch
        %177 = sbr.rel (%p175) target = $region20
      $region19: #{retrain_autodeeplab2_forward.10} parent=15 // pred_region
        %s178 = smul.u32 4, %s18
        %p179 = scmp.lt.s32.totalorder %s17, 3
        %s180 = scalar_select %p179, %s17, 3
        %p181 = scmp.lt.s32.totalorder %s178, 3
        %s182 = scalar_select %p181, %s178, 3
        %s183 = smul.addr %s182, 2
        %s184 = smul.addr %s180, 8
        %s185 = sadd.s32 %s183, %s184
        %s186 = smul.addr %s185, 4
        %s187 = scalar_lea.vmem %s0, %s186
        %s188 = smul.u32 4, %s18
      $region20: #{retrain_autodeeplab2_forward.10} parent=15 // pred_fallthru
        _
      // Predicated region
      $region21: #{retrain_autodeeplab2_forward.10} parent=15 // pred_check
        %p189 = pneg %p70
      $region22: #{retrain_autodeeplab2_forward.10} parent=15 // pred_check_branch
        %191 = sbr.rel (%p189) target = $region24
      $region23: #{retrain_autodeeplab2_forward.10} parent=15 // pred_region
        %p192 = scmp.lt.s32.totalorder %s17, 3
        %s193 = scalar_select %p192, %s17, 3
        %s194 = smul.addr %s193, 36
        %s195 = smul.addr %s194, 4
        %s196 = scalar_lea.vmem %s1, %s195
      $region24: #{retrain_autodeeplab2_forward.10} parent=15 // pred_fallthru
        _
      // Predicated region
      $region25: #{retrain_autodeeplab2_forward.10} parent=15 // pred_check
        %p197 = pneg %p96
      $region26: #{retrain_autodeeplab2_forward.10} parent=15 // pred_check_branch
        %199 = sbr.rel (%p197) target = $region28
      $region27: #{retrain_autodeeplab2_forward.10} parent=15 // pred_region
        %p200 = scmp.lt.s32.totalorder %s17, 3
        %s201 = scalar_select %p200, %s17, 3
        %s202 = smul.addr %s201, 2
        %s203 = scalar_lea.vmem %s2, %s202
      $region28: #{retrain_autodeeplab2_forward.10} parent=15 // pred_fallthru
        _
      // Predicated region
      $region29: #{retrain_autodeeplab2_forward.10} parent=15 // pred_check
        %p204 = pneg %p122
      $region30: #{retrain_autodeeplab2_forward.10} parent=15 // pred_check_branch
        %206 = sbr.rel (%p204) target = $region32
      $region31: #{retrain_autodeeplab2_forward.10} parent=15 // pred_region
        %p207 = scmp.lt.s32.totalorder %s17, 3
        %s208 = scalar_select %p207, %s17, 3
        %s209 = smul.addr %s208, 2
        %s210 = scalar_lea.vmem %s3, %s209
      $region32: #{retrain_autodeeplab2_forward.10} parent=15 // pred_fallthru
        _
    $region16: #{retrain_autodeeplab2_forward.10} parent=5 // pred_fallthru
      _
    %p211 = scmp.le.s32.totalorder 1, %s10
    %p212 = scmp.lt.s32.totalorder %s10, 5
    %p213 = pnand %p211, %p212
    %p214 = pneg %p213
    // Predicated region
    $region33: #{retrain_autodeeplab2_forward.10} parent=5 // pred_check
      _
    $region34: #{retrain_autodeeplab2_forward.10} parent=5 // pred_check_branch
      %216 = sbr.rel (%p213) target = $region36
    $region35: #{retrain_autodeeplab2_forward.10} parent=5 // pred_region
      %s217 = ssub.s32 %s10, 1
      %s218 = smul.u32 4, %s20
      %p219 = scmp.lt.s32.totalorder %s19, 3
      %s220 = scalar_select %p219, %s19, 3
      %p221 = scmp.lt.s32.totalorder %s218, 3
      %s222 = scalar_select %p221, %s218, 3
      %s223 = smul.addr %s222, 2
      %s224 = smul.addr %s220, 8
      %s225 = sadd.s32 %s223, %s224
      %s226 = smul.addr %s225, 4
      %s227 = scalar_lea.vmem %s0, %s226
      %p228 = pneg %p50
      %p229 = pneg %p47
      %p230 = scmp.lt.s32.totalorder %s19, 3
      %s231 = scalar_select %p230, %s19, 3
      %s232 = smul.addr %s231, 36
      %s233 = smul.addr %s232, 4
      %s234 = scalar_lea.vmem %s1, %s233
      %p235 = pneg %p76
      %p236 = pneg %p73
      %p237 = scmp.lt.s32.totalorder %s19, 3
      %s238 = scalar_select %p237, %s19, 3
      %s239 = smul.addr %s238, 2
      %s240 = scalar_lea.vmem %s2, %s239
      %p241 = pneg %p102
      %p242 = pneg %p99
      %p243 = scmp.lt.s32.totalorder %s19, 3
      %s244 = scalar_select %p243, %s19, 3
      %s245 = smul.addr %s244, 2
      %s246 = scalar_lea.vmem %s3, %s245
      %p247 = pneg %p128
      %p248 = pneg %p125
      %p249 = pneg %p156
      %p250 = pneg %p153
      %s251 = smul.u32 4, %s20
      %p252 = scmp.lt.s32.totalorder %s19, 3
      %s253 = scalar_select %p252, %s19, 3
      %p254 = scmp.lt.s32.totalorder %s251, 3
      %s255 = scalar_select %p254, %s251, 3
      %s256 = smul.addr %s255, 2
      %s257 = smul.addr %s253, 8
      %s258 = sadd.s32 %s256, %s257
      %s259 = smul.addr %s258, 4
      %s260 = scalar_lea.vmem %s4, %s259
      %s261 = smul.u32 4, %s20
      %p262 = scmp.lt.s32.totalorder %s19, 3
      %s263 = scalar_select %p262, %s19, 3
      %p264 = scmp.lt.s32.totalorder %s261, 3
      %s265 = scalar_select %p264, %s261, 3
      %s266 = smul.addr %s265, 2
      %s267 = smul.addr %s263, 8
      %s268 = sadd.s32 %s266, %s267
      %s269 = smul.addr %s268, 4
      %s270 = scalar_lea.vmem %s0, %s269
      %s271 = smul.u32 4, %s20
      %p272 = scmp.lt.s32.totalorder %s19, 3
      %s273 = scalar_select %p272, %s19, 3
      %s274 = smul.addr %s273, 36
      %s275 = smul.addr %s274, 4
      %s276 = scalar_lea.vmem %s1, %s275
      %p277 = scmp.lt.s32.totalorder %s19, 3
      %s278 = scalar_select %p277, %s19, 3
      %s279 = smul.addr %s278, 2
      %s280 = scalar_lea.vmem %s2, %s279
      %p281 = scmp.lt.s32.totalorder %s19, 3
      %s282 = scalar_select %p281, %s19, 3
      %s283 = smul.addr %s282, 2
      %s284 = scalar_lea.vmem %s3, %s283
      %s285 = smul.u32 4, %s20
      %p286 = scmp.lt.s32.totalorder %s19, 3
      %s287 = scalar_select %p286, %s19, 3
      %p288 = scmp.lt.s32.totalorder %s285, 3
      %s289 = scalar_select %p288, %s285, 3
      %s290 = smul.addr %s289, 2
      %s291 = smul.addr %s287, 8
      %s292 = sadd.s32 %s290, %s291
      %s293 = smul.addr %s292, 4
      %s294 = scalar_lea.vmem %s4, %s293
      %s295 = smul.u32 4, %s20
      %v297 = vld [vmem:[%s270] sm:$0xff]
      %v298 = vld [vmem:[%s270 + $0x8] sm:$0xff]
      %v299 = vld [vmem:[%s270 + $0x10] sm:$0xff]
      %v300 = vld [vmem:[%s270 + $0x18] sm:$0xff]
      %v301 = vld [vmem:[%s276] sm:$0xff]
      %v302 = vld [vmem:[%s276 + $0x8] sm:$0xff]
      %v303 = vld [vmem:[%s276 + $0x10] sm:$0xff]
      %v304 = vld [vmem:[%s276 + $0x18] sm:$0xff]
      %v305 = vld [vmem:[%s276 + $0x20] sm:$0xff]
      %v306 = vld [vmem:[%s276 + $0x28] sm:$0xff]
      %v307 = vld [vmem:[%s276 + $0x30] sm:$0xff]
      %v308 = vld [vmem:[%s276 + $0x38] sm:$0xff]
      %v309 = vld [vmem:[%s276 + $0x40] sm:$0xff]
      %v310 = vld [vmem:[%s276 + $0x48] sm:$0xff]
      %v311 = vld [vmem:[%s276 + $0x50] sm:$0xff]
      %v312 = vld [vmem:[%s276 + $0x58] sm:$0xff]
      %v313 = vld [vmem:[%s276 + $0x60] sm:$0xff]
      %v314 = vld [vmem:[%s276 + $0x68] sm:$0xff]
      %v315 = vld [vmem:[%s276 + $0x70] sm:$0xff]
      %v316 = vld [vmem:[%s276 + $0x78] sm:$0xff]
      %v317 = vld [vmem:[%s276 + $0x80] sm:$0xff]
      %v318 = vld [vmem:[%s276 + $0x88] sm:$0xff]
      %v323 = vunpack.c.l.b16 %v297
      %v324 = vunpack.c.h.b16 %v297
      %v325 = vunpack.c.l.b16 %v298
      %v326 = vunpack.c.h.b16 %v298
      %v327 = vunpack.c.l.b16 %v299
      %v328 = vunpack.c.h.b16 %v299
      %v329 = vunpack.c.l.b16 %v300
      %v330 = vunpack.c.h.b16 %v300
      %v331 = vpack.c.b16 %v325, %v323
      %v332 = vpack.c.b16 %v326, %v324
      %v333 = vpack.c.b16 %v329, %v327
      %v334 = vpack.c.b16 %v330, %v328
      %v355 = vunpack.c.l.b16 %v301
      %v356 = vunpack.c.h.b16 %v301
      %v357 = vunpack.c.l.b16 %v302
      %v358 = vunpack.c.h.b16 %v302
      %v359 = vunpack.c.l.b16 %v303
      %v360 = vunpack.c.h.b16 %v303
      %v361 = vunpack.c.l.b16 %v304
      %v362 = vunpack.c.h.b16 %v304
      %v363 = vunpack.c.l.b16 %v305
      %v364 = vunpack.c.h.b16 %v305
      %v365 = vunpack.c.l.b16 %v306
      %v366 = vunpack.c.h.b16 %v306
      %v367 = vunpack.c.l.b16 %v307
      %v368 = vunpack.c.h.b16 %v307
      %v369 = vunpack.c.l.b16 %v308
      %v370 = vunpack.c.h.b16 %v308
      %v371 = vunpack.c.l.b16 %v309
      %v372 = vunpack.c.h.b16 %v309
      %v373 = vunpack.c.l.b16 %v310
      %v374 = vunpack.c.h.b16 %v310
      %v375 = vunpack.c.l.b16 %v311
      %v376 = vunpack.c.h.b16 %v311
      %v377 = vunpack.c.l.b16 %v312
      %v378 = vunpack.c.h.b16 %v312
      %v379 = vunpack.c.l.b16 %v313
      %v380 = vunpack.c.h.b16 %v313
      %v381 = vunpack.c.l.b16 %v314
      %v382 = vunpack.c.h.b16 %v314
      %v383 = vunpack.c.l.b16 %v315
      %v384 = vunpack.c.h.b16 %v315
      %v385 = vunpack.c.l.b16 %v316
      %v386 = vunpack.c.h.b16 %v316
      %v387 = vunpack.c.l.b16 %v317
      %v388 = vunpack.c.h.b16 %v317
      %v389 = vunpack.c.l.b16 %v318
      %v390 = vunpack.c.h.b16 %v318
      %v391 = vpack.c.b16 %v357, %v355
      %v392 = vpack.c.b16 %v358, %v356
      %v393 = vpack.c.b16 %v361, %v359
      %v394 = vpack.c.b16 %v362, %v360
      %v395 = vpack.c.b16 %v365, %v363
      %v396 = vpack.c.b16 %v366, %v364
      %v397 = vpack.c.b16 %v369, %v367
      %v398 = vpack.c.b16 %v370, %v368
      %v399 = vpack.c.b16 %v373, %v371
      %v400 = vpack.c.b16 %v374, %v372
      %v401 = vpack.c.b16 %v377, %v375
      %v402 = vpack.c.b16 %v378, %v376
      %v403 = vpack.c.b16 %v381, %v379
      %v404 = vpack.c.b16 %v382, %v380
      %v405 = vpack.c.b16 %v385, %v383
      %v406 = vpack.c.b16 %v386, %v384
      %v407 = vpack.c.b16 %v389, %v387
      %v408 = vpack.c.b16 %v390, %v388
      %vm427 = vcmask 130048
      %v429 = vsel %vm427, %v332, 0
      %v432 = vsel %vm427, %v334, 0
      %434 = vmatpush.bf16.msra.mxu0 %v405
      %435 = vmatpush.bf16.msra.mxu0 %v403
      %436 = vmatpush.bf16.msra.mxu0 %v401
      %437 = vmatpush.bf16.msra.mxu0 %v399
      %438 = vmatpush.bf16.msra.mxu0 %v397
      %439 = vmatpush.bf16.msra.mxu0 %v395
      %440 = vmatpush.bf16.msra.mxu0 %v393
      %441 = vmatpush.bf16.msra.mxu0 %v391
      %442 = vmatmul.bf16.gmra.mxu0 %v331
      %v443 = vpop.f32.mrf.mxu0
      %v444 = vadd.f32 0.0, %v443
      %v445 = vpop.f32.mrf.mxu0
      %v446 = vadd.f32 0.0, %v445
      %447 = vmatmul.bf16.gmra.mxu0 %v333
      %v448 = vpop.f32.mrf.mxu0
      %v449 = vadd.f32 0.0, %v448
      %v450 = vpop.f32.mrf.mxu0
      %v451 = vadd.f32 0.0, %v450
      %452 = vdwg.mxu0
      %453 = vmatpush.bf16.msra.mxu0 0
      %454 = vmatpush.bf16.msra.mxu0 0
      %455 = vmatpush.bf16.msra.mxu0 0
      %456 = vmatpush.bf16.msra.mxu0 0
      %457 = vmatpush.bf16.msra.mxu0 0
      %458 = vmatpush.bf16.msra.mxu0 0
      %459 = vmatpush.bf16.msra.mxu0 0
      %460 = vmatpush.bf16.msra.mxu0 %v407
      %461 = vmatmul.bf16.gmra.mxu0 %v429
      %v462 = vpop.f32.mrf.mxu0
      %v463 = vadd.f32 %v444, %v462
      %v464 = vpop.f32.mrf.mxu0
      %v465 = vadd.f32 %v446, %v464
      %466 = vmatmul.bf16.gmra.mxu0 %v432
      %v467 = vpop.f32.mrf.mxu0
      %v468 = vadd.f32 %v449, %v467
      %v469 = vpop.f32.mrf.mxu0
      %v470 = vadd.f32 %v451, %v469
      %471 = vdwg.mxu0
      %472 = vmatpush.bf16.msra.mxu0 %v406
      %473 = vmatpush.bf16.msra.mxu0 %v404
      %474 = vmatpush.bf16.msra.mxu0 %v402
      %475 = vmatpush.bf16.msra.mxu0 %v400
      %476 = vmatpush.bf16.msra.mxu0 %v398
      %477 = vmatpush.bf16.msra.mxu0 %v396
      %478 = vmatpush.bf16.msra.mxu0 %v394
      %479 = vmatpush.bf16.msra.mxu0 %v392
      %480 = vmatmul.bf16.gmra.mxu0 %v331
      %v481 = vpop.f32.mrf.mxu0
      %v482 = vadd.f32 0.0, %v481
      %v483 = vpop.f32.mrf.mxu0
      %v484 = vadd.f32 0.0, %v483
      %485 = vmatmul.bf16.gmra.mxu0 %v333
      %v486 = vpop.f32.mrf.mxu0
      %v487 = vadd.f32 0.0, %v486
      %v488 = vpop.f32.mrf.mxu0
      %v489 = vadd.f32 0.0, %v488
      %490 = vdwg.mxu0
      %491 = vmatpush.bf16.msra.mxu0 0
      %492 = vmatpush.bf16.msra.mxu0 0
      %493 = vmatpush.bf16.msra.mxu0 0
      %494 = vmatpush.bf16.msra.mxu0 0
      %495 = vmatpush.bf16.msra.mxu0 0
      %496 = vmatpush.bf16.msra.mxu0 0
      %497 = vmatpush.bf16.msra.mxu0 0
      %498 = vmatpush.bf16.msra.mxu0 %v408
      %499 = vmatmul.bf16.gmra.mxu0 %v429
      %v500 = vpop.f32.mrf.mxu0
      %v501 = vadd.f32 %v482, %v500
      %v502 = vpop.f32.mrf.mxu0
      %v503 = vadd.f32 %v484, %v502
      %504 = vmatmul.bf16.gmra.mxu0 %v432
      %v505 = vpop.f32.mrf.mxu0
      %v506 = vadd.f32 %v487, %v505
      %v507 = vpop.f32.mrf.mxu0
      %v508 = vadd.f32 %v489, %v507
      %509 = vdwg.mxu0
      %v510 = vld [vmem:[%s280] sm:$0x3]
      %v512 = vperm.slane %v510, 0
      %v513 = vperm.slane %v510, 1
      %v516 = vmul.f32 %v463, %v512
      %v517 = vmul.f32 %v501, %v513
      %v518 = vmul.f32 %v465, %v512
      %v519 = vmul.f32 %v503, %v513
      %v520 = vmul.f32 %v468, %v512
      %v521 = vmul.f32 %v506, %v513
      %v522 = vmul.f32 %v470, %v512
      %v523 = vmul.f32 %v508, %v513
      %v524 = vld [vmem:[%s284] sm:$0x3]
      %v526 = vperm.slane %v524, 0
      %v527 = vperm.slane %v524, 1
      %v530 = vadd.f32 %v516, %v526
      %v531 = vadd.f32 %v517, %v527
      %v532 = vadd.f32 %v518, %v526
      %v533 = vadd.f32 %v519, %v527
      %v534 = vadd.f32 %v520, %v526
      %v535 = vadd.f32 %v521, %v527
      %v536 = vadd.f32 %v522, %v526
      %v537 = vadd.f32 %v523, %v527
      %v538 = vmax.f32 %v530, 0.0
      %v539 = vmax.f32 %v531, 0.0
      %v540 = vmax.f32 %v532, 0.0
      %v541 = vmax.f32 %v533, 0.0
      %v542 = vmax.f32 %v534, 0.0
      %v543 = vmax.f32 %v535, 0.0
      %v544 = vmax.f32 %v536, 0.0
      %v545 = vmax.f32 %v537, 0.0
      %v546 = vpack.c.bf16 %v539, %v538
      %v547 = vpack.c.bf16 %v541, %v540
      %v548 = vpack.c.bf16 %v543, %v542
      %v549 = vpack.c.bf16 %v545, %v544
      %550 = vst [vmem:[%s294] sm:$0xff] %v546
      %551 = vst [vmem:[%s294 + $0x8] sm:$0xff] %v547
      %552 = vst [vmem:[%s294 + $0x10] sm:$0xff] %v548
      %553 = vst [vmem:[%s294 + $0x18] sm:$0xff] %v549
      %s554 = smul.u32 4, %s20
      %p555 = scmp.lt.s32.totalorder %s19, 3
      %s556 = scalar_select %p555, %s19, 3
      %p557 = scmp.lt.s32.totalorder %s554, 3
      %s558 = scalar_select %p557, %s554, 3
      %s559 = smul.addr %s558, 2
      %s560 = smul.addr %s556, 8
      %s561 = sadd.s32 %s559, %s560
      %s562 = smul.addr %s561, 4
      %s563 = scalar_lea.vmem %s4, %s562
      // Predicated region
      $region37: #{retrain_autodeeplab2_forward.10} parent=35 // pred_check
        %p564 = pneg %p153
      $region38: #{retrain_autodeeplab2_forward.10} parent=35 // pred_check_branch
        %566 = sbr.rel (%p564) target = $region40
      $region39: #{retrain_autodeeplab2_forward.10} parent=35 // pred_region
        %s567 = smul.u32 4, %s20
      $region40: #{retrain_autodeeplab2_forward.10} parent=35 // pred_fallthru
        _
    $region36: #{retrain_autodeeplab2_forward.10} parent=5 // pred_fallthru
      _
    %p568 = scmp.le.s32.totalorder 2, %s10
    // Predicated region
    $region41: #{retrain_autodeeplab2_forward.10} parent=5 // pred_check
      %p569 = pneg %p568
    $region42: #{retrain_autodeeplab2_forward.10} parent=5 // pred_check_branch
      %571 = sbr.rel (%p569) target = $region44
    $region43: #{retrain_autodeeplab2_forward.10} parent=5 // pred_region
      %s572 = ssub.s32 %s10, 2
      // Predicated region
      $region45: #{retrain_autodeeplab2_forward.10} parent=43 // pred_check
        %p573 = pneg %p159
      $region46: #{retrain_autodeeplab2_forward.10} parent=43 // pred_check_branch
        %575 = sbr.rel (%p573) target = $region48
      $region47: #{retrain_autodeeplab2_forward.10} parent=43 // pred_region
        %s576 = smul.u32 4, %s22
        %p577 = scmp.lt.s32.totalorder %s21, 3
        %s578 = scalar_select %p577, %s21, 3
        %p579 = scmp.lt.s32.totalorder %s576, 3
        %s580 = scalar_select %p579, %s576, 3
        %s581 = smul.addr %s580, 2
        %s582 = smul.addr %s578, 8
        %s583 = sadd.s32 %s581, %s582
        %s584 = smul.addr %s583, 4
        %s585 = scalar_lea.vmem %s4, %s584
      $region48: #{retrain_autodeeplab2_forward.10} parent=43 // pred_fallthru
        _
    $region44: #{retrain_autodeeplab2_forward.10} parent=5 // pred_fallthru
      _
  $region6: #{retrain_autodeeplab2_forward.10} parent=0 // loop_footer
    %s14 = sadd.s32 1, %s10
  $region7: #{retrain_autodeeplab2_forward.10} parent=0 // loop_footer_branch
    %9 = sbr.rel target = $region3
  $region8: #{retrain_autodeeplab2_forward.10} parent=0 // loop_exit
    _

// kernel: retrain_autodeeplab2_forward.11
$region0: #{retrain_autodeeplab2_forward.11}
  #allocation0 [shape = 'u32[]', space=smem, size = 0x4, offset = 0x4, fixed_abs, tag = 'smem constant byte address 0x4 - core index']
  #allocation1 [shape = 'u32[72,128]{1,0:T(1,128)}', space=vmem, size = 0x9000, scoped, tag = 'internal scratch']
  %s0 = inlined_call_operand.vmem [shape: bf16[32,1280], index: 0, kind: input, shape index: {}]
  %s1 = inlined_call_operand.vmem [shape: bf16[1280,256], index: 1, kind: input, shape index: {}]
  %s2 = inlined_call_operand.vmem [shape: f32[1,256], index: 2, kind: input, shape index: {}]
  %s3 = inlined_call_operand.vmem [shape: f32[1,256], index: 3, kind: input, shape index: {}]
  %s4 = inlined_call_operand.vmem [shape: bf16[32,256], index: 4, kind: output, shape index: {}]
  %s5 = sld [smem:[#allocation0]]
  $region26: #{retrain_autodeeplab2_forward.11} parent=0
    _
  %s7 = ssub.s32 1, %s5
  %s8 = scalar_select 0, %s7, %s5
  // Predicated region
  $region2: #{retrain_autodeeplab2_forward.11} parent=0 // pred_check
    _
  $region3: #{retrain_autodeeplab2_forward.11} parent=0 // pred_check_branch
    %10 = sbr.rel (0) target = $region5
  $region4: #{retrain_autodeeplab2_forward.11} parent=0 // pred_region
    _
  $region5: #{retrain_autodeeplab2_forward.11} parent=0 // pred_fallthru
    _
  // Predicated region
  $region6: #{retrain_autodeeplab2_forward.11} parent=0 // pred_check
    _
  $region7: #{retrain_autodeeplab2_forward.11} parent=0 // pred_check_branch
    %12 = sbr.rel (0) target = $region9
  $region8: #{retrain_autodeeplab2_forward.11} parent=0 // pred_region
    _
  $region9: #{retrain_autodeeplab2_forward.11} parent=0 // pred_fallthru
    _
  // Predicated region
  $region10: #{retrain_autodeeplab2_forward.11} parent=0 // pred_check
    _
  $region11: #{retrain_autodeeplab2_forward.11} parent=0 // pred_check_branch
    %14 = sbr.rel (0) target = $region13
  $region12: #{retrain_autodeeplab2_forward.11} parent=0 // pred_region
    _
  $region13: #{retrain_autodeeplab2_forward.11} parent=0 // pred_fallthru
    _
  // Predicated region
  $region14: #{retrain_autodeeplab2_forward.11} parent=0 // pred_check
    _
  $region15: #{retrain_autodeeplab2_forward.11} parent=0 // pred_check_branch
    %16 = sbr.rel (0) target = $region17
  $region16: #{retrain_autodeeplab2_forward.11} parent=0 // pred_region
    _
  $region17: #{retrain_autodeeplab2_forward.11} parent=0 // pred_fallthru
    _
  %v17 = vld [vmem:[%s0] sm:$0xff]
  %v18 = vld [vmem:[%s0 + $0x8] sm:$0xff]
  %v19 = vld [vmem:[%s0 + $0x10] sm:$0xff]
  %v20 = vld [vmem:[%s0 + $0x18] sm:$0xff]
  %v21 = vld [vmem:[%s0 + $0x20] sm:$0xff]
  %v22 = vld [vmem:[%s0 + $0x28] sm:$0xff]
  %v23 = vld [vmem:[%s0 + $0x30] sm:$0xff]
  %v24 = vld [vmem:[%s0 + $0x38] sm:$0xff]
  %v25 = vld [vmem:[%s0 + $0x40] sm:$0xff]
  %v26 = vld [vmem:[%s0 + $0x48] sm:$0xff]
  %v27 = vld [vmem:[%s0 + $0x50] sm:$0xff]
  %v28 = vld [vmem:[%s0 + $0x58] sm:$0xff]
  %v29 = vld [vmem:[%s0 + $0x60] sm:$0xff]
  %v30 = vld [vmem:[%s0 + $0x68] sm:$0xff]
  %v31 = vld [vmem:[%s0 + $0x70] sm:$0xff]
  %v32 = vld [vmem:[%s0 + $0x78] sm:$0xff]
  %v33 = vld [vmem:[%s0 + $0x80] sm:$0xff]
  %v34 = vld [vmem:[%s0 + $0x88] sm:$0xff]
  %v35 = vld [vmem:[%s0 + $0x90] sm:$0xff]
  %v36 = vld [vmem:[%s0 + $0x98] sm:$0xff]
  %v37 = vld [vmem:[%s1] sm:$0xff]
  %v38 = vld [vmem:[%s1 + $0x8] sm:$0xff]
  %v39 = vld [vmem:[%s1 + $0x10] sm:$0xff]
  %v40 = vld [vmem:[%s1 + $0x18] sm:$0xff]
  %v41 = vld [vmem:[%s1 + $0x20] sm:$0xff]
  %v42 = vld [vmem:[%s1 + $0x28] sm:$0xff]
  %v43 = vld [vmem:[%s1 + $0x30] sm:$0xff]
  %v44 = vld [vmem:[%s1 + $0x38] sm:$0xff]
  %v45 = vld [vmem:[%s1 + $0x40] sm:$0xff]
  %v46 = vld [vmem:[%s1 + $0x48] sm:$0xff]
  %v47 = vld [vmem:[%s1 + $0x50] sm:$0xff]
  %v48 = vld [vmem:[%s1 + $0x58] sm:$0xff]
  %v49 = vld [vmem:[%s1 + $0x60] sm:$0xff]
  %v50 = vld [vmem:[%s1 + $0x68] sm:$0xff]
  %v51 = vld [vmem:[%s1 + $0x70] sm:$0xff]
  %v52 = vld [vmem:[%s1 + $0x78] sm:$0xff]
  %v53 = vld [vmem:[%s1 + $0x80] sm:$0xff]
  %v54 = vld [vmem:[%s1 + $0x88] sm:$0xff]
  %v55 = vld [vmem:[%s1 + $0x90] sm:$0xff]
  %v56 = vld [vmem:[%s1 + $0x98] sm:$0xff]
  %v57 = vld [vmem:[%s1 + $0xa0] sm:$0xff]
  %v58 = vld [vmem:[%s1 + $0xa8] sm:$0xff]
  %v59 = vld [vmem:[%s1 + $0xb0] sm:$0xff]
  %v60 = vld [vmem:[%s1 + $0xb8] sm:$0xff]
  %v61 = vld [vmem:[%s1 + $0xc0] sm:$0xff]
  %v62 = vld [vmem:[%s1 + $0xc8] sm:$0xff]
  %v63 = vld [vmem:[%s1 + $0xd0] sm:$0xff]
  %v64 = vld [vmem:[%s1 + $0xd8] sm:$0xff]
  %v65 = vld [vmem:[%s1 + $0xe0] sm:$0xff]
  %v66 = vld [vmem:[%s1 + $0xe8] sm:$0xff]
  %v67 = vld [vmem:[%s1 + $0xf0] sm:$0xff]
  %v68 = vld [vmem:[%s1 + $0xf8] sm:$0xff]
  %v69 = vld [vmem:[%s1 + $0x100] sm:$0xff]
  %v70 = vld [vmem:[%s1 + $0x108] sm:$0xff]
  %v71 = vld [vmem:[%s1 + $0x110] sm:$0xff]
  %v72 = vld [vmem:[%s1 + $0x118] sm:$0xff]
  %v73 = vld [vmem:[%s1 + $0x120] sm:$0xff]
  %v74 = vld [vmem:[%s1 + $0x128] sm:$0xff]
  %v75 = vld [vmem:[%s1 + $0x130] sm:$0xff]
  %v76 = vld [vmem:[%s1 + $0x138] sm:$0xff]
  %v77 = vld [vmem:[%s1 + $0x140] sm:$0xff]
  %v78 = vld [vmem:[%s1 + $0x148] sm:$0xff]
  %v79 = vld [vmem:[%s1 + $0x150] sm:$0xff]
  %v80 = vld [vmem:[%s1 + $0x158] sm:$0xff]
  %v81 = vld [vmem:[%s1 + $0x160] sm:$0xff]
  %v82 = vld [vmem:[%s1 + $0x168] sm:$0xff]
  %v83 = vld [vmem:[%s1 + $0x170] sm:$0xff]
  %v84 = vld [vmem:[%s1 + $0x178] sm:$0xff]
  %v85 = vld [vmem:[%s1 + $0x180] sm:$0xff]
  %v86 = vld [vmem:[%s1 + $0x188] sm:$0xff]
  %v87 = vld [vmem:[%s1 + $0x190] sm:$0xff]
  %v88 = vld [vmem:[%s1 + $0x198] sm:$0xff]
  %v89 = vld [vmem:[%s1 + $0x1a0] sm:$0xff]
  %v90 = vld [vmem:[%s1 + $0x1a8] sm:$0xff]
  %v91 = vld [vmem:[%s1 + $0x1b0] sm:$0xff]
  %v92 = vld [vmem:[%s1 + $0x1b8] sm:$0xff]
  %v93 = vld [vmem:[%s1 + $0x1c0] sm:$0xff]
  %v94 = vld [vmem:[%s1 + $0x1c8] sm:$0xff]
  %v95 = vld [vmem:[%s1 + $0x1d0] sm:$0xff]
  %v96 = vld [vmem:[%s1 + $0x1d8] sm:$0xff]
  %v97 = vld [vmem:[%s1 + $0x1e0] sm:$0xff]
  %v98 = vld [vmem:[%s1 + $0x1e8] sm:$0xff]
  %v99 = vld [vmem:[%s1 + $0x1f0] sm:$0xff]
  %v100 = vld [vmem:[%s1 + $0x1f8] sm:$0xff]
  %v101 = vld [vmem:[%s1 + $0x200] sm:$0xff]
  %v102 = vld [vmem:[%s1 + $0x208] sm:$0xff]
  %v103 = vld [vmem:[%s1 + $0x210] sm:$0xff]
  %v104 = vld [vmem:[%s1 + $0x218] sm:$0xff]
  %v105 = vld [vmem:[%s1 + $0x220] sm:$0xff]
  %v106 = vld [vmem:[%s1 + $0x228] sm:$0xff]
  %v107 = vld [vmem:[%s1 + $0x230] sm:$0xff]
  %v108 = vld [vmem:[%s1 + $0x238] sm:$0xff]
  %v109 = vld [vmem:[%s1 + $0x240] sm:$0xff]
  %v110 = vld [vmem:[%s1 + $0x248] sm:$0xff]
  %v111 = vld [vmem:[%s1 + $0x250] sm:$0xff]
  %v112 = vld [vmem:[%s1 + $0x258] sm:$0xff]
  %v113 = vld [vmem:[%s1 + $0x260] sm:$0xff]
  %v114 = vld [vmem:[%s1 + $0x268] sm:$0xff]
  %v115 = vld [vmem:[%s1 + $0x270] sm:$0xff]
  %v116 = vld [vmem:[%s1 + $0x278] sm:$0xff]
  %v117 = vld [vmem:[%s1 + $0x280] sm:$0xff]
  %v118 = vld [vmem:[%s1 + $0x288] sm:$0xff]
  %v119 = vld [vmem:[%s1 + $0x290] sm:$0xff]
  %v120 = vld [vmem:[%s1 + $0x298] sm:$0xff]
  %v121 = vld [vmem:[%s1 + $0x2a0] sm:$0xff]
  %v122 = vld [vmem:[%s1 + $0x2a8] sm:$0xff]
  %v123 = vld [vmem:[%s1 + $0x2b0] sm:$0xff]
  %v124 = vld [vmem:[%s1 + $0x2b8] sm:$0xff]
  %v125 = vld [vmem:[%s1 + $0x2c0] sm:$0xff]
  %v126 = vld [vmem:[%s1 + $0x2c8] sm:$0xff]
  %v127 = vld [vmem:[%s1 + $0x2d0] sm:$0xff]
  %v128 = vld [vmem:[%s1 + $0x2d8] sm:$0xff]
  %v129 = vld [vmem:[%s1 + $0x2e0] sm:$0xff]
  %v130 = vld [vmem:[%s1 + $0x2e8] sm:$0xff]
  %v131 = vld [vmem:[%s1 + $0x2f0] sm:$0xff]
  %v132 = vld [vmem:[%s1 + $0x2f8] sm:$0xff]
  %v133 = vld [vmem:[%s1 + $0x300] sm:$0xff]
  %v134 = vld [vmem:[%s1 + $0x308] sm:$0xff]
  %v135 = vld [vmem:[%s1 + $0x310] sm:$0xff]
  %v136 = vld [vmem:[%s1 + $0x318] sm:$0xff]
  %v137 = vld [vmem:[%s1 + $0x320] sm:$0xff]
  %v138 = vld [vmem:[%s1 + $0x328] sm:$0xff]
  %v139 = vld [vmem:[%s1 + $0x330] sm:$0xff]
  %v140 = vld [vmem:[%s1 + $0x338] sm:$0xff]
  %v141 = vld [vmem:[%s1 + $0x340] sm:$0xff]
  %v142 = vld [vmem:[%s1 + $0x348] sm:$0xff]
  %v143 = vld [vmem:[%s1 + $0x350] sm:$0xff]
  %v144 = vld [vmem:[%s1 + $0x358] sm:$0xff]
  %v145 = vld [vmem:[%s1 + $0x360] sm:$0xff]
  %v146 = vld [vmem:[%s1 + $0x368] sm:$0xff]
  %v147 = vld [vmem:[%s1 + $0x370] sm:$0xff]
  %v148 = vld [vmem:[%s1 + $0x378] sm:$0xff]
  %v149 = vld [vmem:[%s1 + $0x380] sm:$0xff]
  %v150 = vld [vmem:[%s1 + $0x388] sm:$0xff]
  %v151 = vld [vmem:[%s1 + $0x390] sm:$0xff]
  %v152 = vld [vmem:[%s1 + $0x398] sm:$0xff]
  %v153 = vld [vmem:[%s1 + $0x3a0] sm:$0xff]
  %v154 = vld [vmem:[%s1 + $0x3a8] sm:$0xff]
  %v155 = vld [vmem:[%s1 + $0x3b0] sm:$0xff]
  %v156 = vld [vmem:[%s1 + $0x3b8] sm:$0xff]
  %v157 = vld [vmem:[%s1 + $0x3c0] sm:$0xff]
  %v158 = vld [vmem:[%s1 + $0x3c8] sm:$0xff]
  %v159 = vld [vmem:[%s1 + $0x3d0] sm:$0xff]
  %v160 = vld [vmem:[%s1 + $0x3d8] sm:$0xff]
  %v161 = vld [vmem:[%s1 + $0x3e0] sm:$0xff]
  %v162 = vld [vmem:[%s1 + $0x3e8] sm:$0xff]
  %v163 = vld [vmem:[%s1 + $0x3f0] sm:$0xff]
  %v164 = vld [vmem:[%s1 + $0x3f8] sm:$0xff]
  %v165 = vld [vmem:[%s1 + $0x400] sm:$0xff]
  %v166 = vld [vmem:[%s1 + $0x408] sm:$0xff]
  %v167 = vld [vmem:[%s1 + $0x410] sm:$0xff]
  %v168 = vld [vmem:[%s1 + $0x418] sm:$0xff]
  %v169 = vld [vmem:[%s1 + $0x420] sm:$0xff]
  %v170 = vld [vmem:[%s1 + $0x428] sm:$0xff]
  %v171 = vld [vmem:[%s1 + $0x430] sm:$0xff]
  %v172 = vld [vmem:[%s1 + $0x438] sm:$0xff]
  %v173 = vld [vmem:[%s1 + $0x440] sm:$0xff]
  %v174 = vld [vmem:[%s1 + $0x448] sm:$0xff]
  %v175 = vld [vmem:[%s1 + $0x450] sm:$0xff]
  %v176 = vld [vmem:[%s1 + $0x458] sm:$0xff]
  %v177 = vld [vmem:[%s1 + $0x460] sm:$0xff]
  %v178 = vld [vmem:[%s1 + $0x468] sm:$0xff]
  %v179 = vld [vmem:[%s1 + $0x470] sm:$0xff]
  %v180 = vld [vmem:[%s1 + $0x478] sm:$0xff]
  %v181 = vld [vmem:[%s1 + $0x480] sm:$0xff]
  %v182 = vld [vmem:[%s1 + $0x488] sm:$0xff]
  %v183 = vld [vmem:[%s1 + $0x490] sm:$0xff]
  %v184 = vld [vmem:[%s1 + $0x498] sm:$0xff]
  %v185 = vld [vmem:[%s1 + $0x4a0] sm:$0xff]
  %v186 = vld [vmem:[%s1 + $0x4a8] sm:$0xff]
  %v187 = vld [vmem:[%s1 + $0x4b0] sm:$0xff]
  %v188 = vld [vmem:[%s1 + $0x4b8] sm:$0xff]
  %v189 = vld [vmem:[%s1 + $0x4c0] sm:$0xff]
  %v190 = vld [vmem:[%s1 + $0x4c8] sm:$0xff]
  %v191 = vld [vmem:[%s1 + $0x4d0] sm:$0xff]
  %v192 = vld [vmem:[%s1 + $0x4d8] sm:$0xff]
  %v193 = vld [vmem:[%s1 + $0x4e0] sm:$0xff]
  %v194 = vld [vmem:[%s1 + $0x4e8] sm:$0xff]
  %v195 = vld [vmem:[%s1 + $0x4f0] sm:$0xff]
  %v196 = vld [vmem:[%s1 + $0x4f8] sm:$0xff]
  %v217 = vunpack.c.l.b16 %v17
  %v218 = vunpack.c.h.b16 %v17
  %v219 = vunpack.c.l.b16 %v18
  %v220 = vunpack.c.h.b16 %v18
  %v221 = vunpack.c.l.b16 %v19
  %v222 = vunpack.c.h.b16 %v19
  %v223 = vunpack.c.l.b16 %v20
  %v224 = vunpack.c.h.b16 %v20
  %v225 = vunpack.c.l.b16 %v21
  %v226 = vunpack.c.h.b16 %v21
  %v227 = vunpack.c.l.b16 %v22
  %v228 = vunpack.c.h.b16 %v22
  %v229 = vunpack.c.l.b16 %v23
  %v230 = vunpack.c.h.b16 %v23
  %v231 = vunpack.c.l.b16 %v24
  %v232 = vunpack.c.h.b16 %v24
  %v233 = vunpack.c.l.b16 %v25
  %v234 = vunpack.c.h.b16 %v25
  %v235 = vunpack.c.l.b16 %v26
  %v236 = vunpack.c.h.b16 %v26
  %v237 = vunpack.c.l.b16 %v27
  %v238 = vunpack.c.h.b16 %v27
  %v239 = vunpack.c.l.b16 %v28
  %v240 = vunpack.c.h.b16 %v28
  %v241 = vunpack.c.l.b16 %v29
  %v242 = vunpack.c.h.b16 %v29
  %v243 = vunpack.c.l.b16 %v30
  %v244 = vunpack.c.h.b16 %v30
  %v245 = vunpack.c.l.b16 %v31
  %v246 = vunpack.c.h.b16 %v31
  %v247 = vunpack.c.l.b16 %v32
  %v248 = vunpack.c.h.b16 %v32
  %v249 = vunpack.c.l.b16 %v33
  %v250 = vunpack.c.h.b16 %v33
  %v251 = vunpack.c.l.b16 %v34
  %v252 = vunpack.c.h.b16 %v34
  %v253 = vunpack.c.l.b16 %v35
  %v254 = vunpack.c.h.b16 %v35
  %v255 = vunpack.c.l.b16 %v36
  %v256 = vunpack.c.h.b16 %v36
  %v257 = vpack.c.b16 %v227, %v217
  %v258 = vpack.c.b16 %v228, %v218
  %v259 = vpack.c.b16 %v229, %v219
  %v260 = vpack.c.b16 %v230, %v220
  %v261 = vpack.c.b16 %v231, %v221
  %v262 = vpack.c.b16 %v232, %v222
  %v263 = vpack.c.b16 %v233, %v223
  %v264 = vpack.c.b16 %v234, %v224
  %v265 = vpack.c.b16 %v235, %v225
  %v266 = vpack.c.b16 %v236, %v226
  %v267 = vpack.c.b16 %v247, %v237
  %v268 = vpack.c.b16 %v248, %v238
  %v269 = vpack.c.b16 %v249, %v239
  %v270 = vpack.c.b16 %v250, %v240
  %v271 = vpack.c.b16 %v251, %v241
  %v272 = vpack.c.b16 %v252, %v242
  %v273 = vpack.c.b16 %v253, %v243
  %v274 = vpack.c.b16 %v254, %v244
  %v275 = vpack.c.b16 %v255, %v245
  %v276 = vpack.c.b16 %v256, %v246
  %v457 = vunpack.c.l.b16 %v37
  %v458 = vunpack.c.h.b16 %v37
  %v459 = vunpack.c.l.b16 %v38
  %v460 = vunpack.c.h.b16 %v38
  %v461 = vunpack.c.l.b16 %v39
  %v462 = vunpack.c.h.b16 %v39
  %v463 = vunpack.c.l.b16 %v40
  %v464 = vunpack.c.h.b16 %v40
  %v465 = vunpack.c.l.b16 %v41
  %v466 = vunpack.c.h.b16 %v41
  %v467 = vunpack.c.l.b16 %v42
  %v468 = vunpack.c.h.b16 %v42
  %v469 = vunpack.c.l.b16 %v43
  %v470 = vunpack.c.h.b16 %v43
  %v471 = vunpack.c.l.b16 %v44
  %v472 = vunpack.c.h.b16 %v44
  %v473 = vunpack.c.l.b16 %v45
  %v474 = vunpack.c.h.b16 %v45
  %v475 = vunpack.c.l.b16 %v46
  %v476 = vunpack.c.h.b16 %v46
  %v477 = vunpack.c.l.b16 %v47
  %v478 = vunpack.c.h.b16 %v47
  %v479 = vunpack.c.l.b16 %v48
  %v480 = vunpack.c.h.b16 %v48
  %v481 = vunpack.c.l.b16 %v49
  %v482 = vunpack.c.h.b16 %v49
  %v483 = vunpack.c.l.b16 %v50
  %v484 = vunpack.c.h.b16 %v50
  %v485 = vunpack.c.l.b16 %v51
  %v486 = vunpack.c.h.b16 %v51
  %v487 = vunpack.c.l.b16 %v52
  %v488 = vunpack.c.h.b16 %v52
  %v489 = vunpack.c.l.b16 %v53
  %v490 = vunpack.c.h.b16 %v53
  %v491 = vunpack.c.l.b16 %v54
  %v492 = vunpack.c.h.b16 %v54
  %v493 = vunpack.c.l.b16 %v55
  %v494 = vunpack.c.h.b16 %v55
  %v495 = vunpack.c.l.b16 %v56
  %v496 = vunpack.c.h.b16 %v56
  %v497 = vunpack.c.l.b16 %v57
  %v498 = vunpack.c.h.b16 %v57
  %v499 = vunpack.c.l.b16 %v58
  %v500 = vunpack.c.h.b16 %v58
  %v501 = vunpack.c.l.b16 %v59
  %v502 = vunpack.c.h.b16 %v59
  %v503 = vunpack.c.l.b16 %v60
  %v504 = vunpack.c.h.b16 %v60
  %v505 = vunpack.c.l.b16 %v61
  %v506 = vunpack.c.h.b16 %v61
  %v507 = vunpack.c.l.b16 %v62
  %v508 = vunpack.c.h.b16 %v62
  %v509 = vunpack.c.l.b16 %v63
  %v510 = vunpack.c.h.b16 %v63
  %v511 = vunpack.c.l.b16 %v64
  %v512 = vunpack.c.h.b16 %v64
  %v513 = vunpack.c.l.b16 %v65
  %v514 = vunpack.c.h.b16 %v65
  %v515 = vunpack.c.l.b16 %v66
  %v516 = vunpack.c.h.b16 %v66
  %v517 = vunpack.c.l.b16 %v67
  %v518 = vunpack.c.h.b16 %v67
  %v519 = vunpack.c.l.b16 %v68
  %v520 = vunpack.c.h.b16 %v68
  %v521 = vunpack.c.l.b16 %v69
  %v522 = vunpack.c.h.b16 %v69
  %v523 = vunpack.c.l.b16 %v70
  %v524 = vunpack.c.h.b16 %v70
  %v525 = vunpack.c.l.b16 %v71
  %v526 = vunpack.c.h.b16 %v71
  %v527 = vunpack.c.l.b16 %v72
  %v528 = vunpack.c.h.b16 %v72
  %v529 = vunpack.c.l.b16 %v73
  %v530 = vunpack.c.h.b16 %v73
  %v531 = vunpack.c.l.b16 %v74
  %v532 = vunpack.c.h.b16 %v74
  %v533 = vunpack.c.l.b16 %v75
  %v534 = vunpack.c.h.b16 %v75
  %v535 = vunpack.c.l.b16 %v76
  %v536 = vunpack.c.h.b16 %v76
  %v537 = vunpack.c.l.b16 %v77
  %v538 = vunpack.c.h.b16 %v77
  %v539 = vunpack.c.l.b16 %v78
  %v540 = vunpack.c.h.b16 %v78
  %v541 = vunpack.c.l.b16 %v79
  %v542 = vunpack.c.h.b16 %v79
  %v543 = vunpack.c.l.b16 %v80
  %v544 = vunpack.c.h.b16 %v80
  %v545 = vunpack.c.l.b16 %v81
  %v546 = vunpack.c.h.b16 %v81
  %v547 = vunpack.c.l.b16 %v82
  %v548 = vunpack.c.h.b16 %v82
  %v549 = vunpack.c.l.b16 %v83
  %v550 = vunpack.c.h.b16 %v83
  %v551 = vunpack.c.l.b16 %v84
  %v552 = vunpack.c.h.b16 %v84
  %v553 = vunpack.c.l.b16 %v85
  %v554 = vunpack.c.h.b16 %v85
  %v555 = vunpack.c.l.b16 %v86
  %v556 = vunpack.c.h.b16 %v86
  %v557 = vunpack.c.l.b16 %v87
  %v558 = vunpack.c.h.b16 %v87
  %v559 = vunpack.c.l.b16 %v88
  %v560 = vunpack.c.h.b16 %v88
  %v561 = vunpack.c.l.b16 %v89
  %v562 = vunpack.c.h.b16 %v89
  %v563 = vunpack.c.l.b16 %v90
  %v564 = vunpack.c.h.b16 %v90
  %v565 = vunpack.c.l.b16 %v91
  %v566 = vunpack.c.h.b16 %v91
  %v567 = vunpack.c.l.b16 %v92
  %v568 = vunpack.c.h.b16 %v92
  %v569 = vunpack.c.l.b16 %v93
  %v570 = vunpack.c.h.b16 %v93
  %v571 = vunpack.c.l.b16 %v94
  %v572 = vunpack.c.h.b16 %v94
  %v573 = vunpack.c.l.b16 %v95
  %v574 = vunpack.c.h.b16 %v95
  %v575 = vunpack.c.l.b16 %v96
  %v576 = vunpack.c.h.b16 %v96
  %v577 = vunpack.c.l.b16 %v97
  %v578 = vunpack.c.h.b16 %v97
  %v579 = vunpack.c.l.b16 %v98
  %v580 = vunpack.c.h.b16 %v98
  %v581 = vunpack.c.l.b16 %v99
  %v582 = vunpack.c.h.b16 %v99
  %v583 = vunpack.c.l.b16 %v100
  %v584 = vunpack.c.h.b16 %v100
  %v585 = vunpack.c.l.b16 %v101
  %v586 = vunpack.c.h.b16 %v101
  %v587 = vunpack.c.l.b16 %v102
  %v588 = vunpack.c.h.b16 %v102
  %v589 = vunpack.c.l.b16 %v103
  %v590 = vunpack.c.h.b16 %v103
  %v591 = vunpack.c.l.b16 %v104
  %v592 = vunpack.c.h.b16 %v104
  %v593 = vunpack.c.l.b16 %v105
  %v594 = vunpack.c.h.b16 %v105
  %v595 = vunpack.c.l.b16 %v106
  %v596 = vunpack.c.h.b16 %v106
  %v597 = vunpack.c.l.b16 %v107
  %v598 = vunpack.c.h.b16 %v107
  %v599 = vunpack.c.l.b16 %v108
  %v600 = vunpack.c.h.b16 %v108
  %v601 = vunpack.c.l.b16 %v109
  %v602 = vunpack.c.h.b16 %v109
  %v603 = vunpack.c.l.b16 %v110
  %v604 = vunpack.c.h.b16 %v110
  %v605 = vunpack.c.l.b16 %v111
  %v606 = vunpack.c.h.b16 %v111
  %v607 = vunpack.c.l.b16 %v112
  %v608 = vunpack.c.h.b16 %v112
  %v609 = vunpack.c.l.b16 %v113
  %v610 = vunpack.c.h.b16 %v113
  %v611 = vunpack.c.l.b16 %v114
  %v612 = vunpack.c.h.b16 %v114
  %v613 = vunpack.c.l.b16 %v115
  %v614 = vunpack.c.h.b16 %v115
  %v615 = vunpack.c.l.b16 %v116
  %v616 = vunpack.c.h.b16 %v116
  %v617 = vunpack.c.l.b16 %v117
  %v618 = vunpack.c.h.b16 %v117
  %v619 = vunpack.c.l.b16 %v118
  %v620 = vunpack.c.h.b16 %v118
  %v621 = vunpack.c.l.b16 %v119
  %v622 = vunpack.c.h.b16 %v119
  %v623 = vunpack.c.l.b16 %v120
  %v624 = vunpack.c.h.b16 %v120
  %v625 = vunpack.c.l.b16 %v121
  %v626 = vunpack.c.h.b16 %v121
  %v627 = vunpack.c.l.b16 %v122
  %v628 = vunpack.c.h.b16 %v122
  %v629 = vunpack.c.l.b16 %v123
  %v630 = vunpack.c.h.b16 %v123
  %v631 = vunpack.c.l.b16 %v124
  %v632 = vunpack.c.h.b16 %v124
  %v633 = vunpack.c.l.b16 %v125
  %v634 = vunpack.c.h.b16 %v125
  %v635 = vunpack.c.l.b16 %v126
  %v636 = vunpack.c.h.b16 %v126
  %v637 = vunpack.c.l.b16 %v127
  %v638 = vunpack.c.h.b16 %v127
  %v639 = vunpack.c.l.b16 %v128
  %v640 = vunpack.c.h.b16 %v128
  %v641 = vunpack.c.l.b16 %v129
  %v642 = vunpack.c.h.b16 %v129
  %v643 = vunpack.c.l.b16 %v130
  %v644 = vunpack.c.h.b16 %v130
  %v645 = vunpack.c.l.b16 %v131
  %v646 = vunpack.c.h.b16 %v131
  %v647 = vunpack.c.l.b16 %v132
  %v648 = vunpack.c.h.b16 %v132
  %v649 = vunpack.c.l.b16 %v133
  %v650 = vunpack.c.h.b16 %v133
  %v651 = vunpack.c.l.b16 %v134
  %v652 = vunpack.c.h.b16 %v134
  %v653 = vunpack.c.l.b16 %v135
  %v654 = vunpack.c.h.b16 %v135
  %v655 = vunpack.c.l.b16 %v136
  %v656 = vunpack.c.h.b16 %v136
  %v657 = vunpack.c.l.b16 %v137
  %v658 = vunpack.c.h.b16 %v137
  %v659 = vunpack.c.l.b16 %v138
  %v660 = vunpack.c.h.b16 %v138
  %v661 = vunpack.c.l.b16 %v139
  %v662 = vunpack.c.h.b16 %v139
  %v663 = vunpack.c.l.b16 %v140
  %v664 = vunpack.c.h.b16 %v140
  %v665 = vunpack.c.l.b16 %v141
  %v666 = vunpack.c.h.b16 %v141
  %v667 = vunpack.c.l.b16 %v142
  %v668 = vunpack.c.h.b16 %v142
  %v669 = vunpack.c.l.b16 %v143
  %v670 = vunpack.c.h.b16 %v143
  %v671 = vunpack.c.l.b16 %v144
  %v672 = vunpack.c.h.b16 %v144
  %v673 = vunpack.c.l.b16 %v145
  %v674 = vunpack.c.h.b16 %v145
  %v675 = vunpack.c.l.b16 %v146
  %v676 = vunpack.c.h.b16 %v146
  %v677 = vunpack.c.l.b16 %v147
  %v678 = vunpack.c.h.b16 %v147
  %v679 = vunpack.c.l.b16 %v148
  %v680 = vunpack.c.h.b16 %v148
  %v681 = vunpack.c.l.b16 %v149
  %v682 = vunpack.c.h.b16 %v149
  %v683 = vunpack.c.l.b16 %v150
  %v684 = vunpack.c.h.b16 %v150
  %v685 = vunpack.c.l.b16 %v151
  %v686 = vunpack.c.h.b16 %v151
  %v687 = vunpack.c.l.b16 %v152
  %v688 = vunpack.c.h.b16 %v152
  %v689 = vunpack.c.l.b16 %v153
  %v690 = vunpack.c.h.b16 %v153
  %v691 = vunpack.c.l.b16 %v154
  %v692 = vunpack.c.h.b16 %v154
  %v693 = vunpack.c.l.b16 %v155
  %v694 = vunpack.c.h.b16 %v155
  %v695 = vunpack.c.l.b16 %v156
  %v696 = vunpack.c.h.b16 %v156
  %v697 = vunpack.c.l.b16 %v157
  %v698 = vunpack.c.h.b16 %v157
  %v699 = vunpack.c.l.b16 %v158
  %v700 = vunpack.c.h.b16 %v158
  %v701 = vunpack.c.l.b16 %v159
  %v702 = vunpack.c.h.b16 %v159
  %v703 = vunpack.c.l.b16 %v160
  %v704 = vunpack.c.h.b16 %v160
  %v705 = vunpack.c.l.b16 %v161
  %v706 = vunpack.c.h.b16 %v161
  %v707 = vunpack.c.l.b16 %v162
  %v708 = vunpack.c.h.b16 %v162
  %v709 = vunpack.c.l.b16 %v163
  %v710 = vunpack.c.h.b16 %v163
  %v711 = vunpack.c.l.b16 %v164
  %v712 = vunpack.c.h.b16 %v164
  %v713 = vunpack.c.l.b16 %v165
  %v714 = vunpack.c.h.b16 %v165
  %v715 = vunpack.c.l.b16 %v166
  %v716 = vunpack.c.h.b16 %v166
  %v717 = vunpack.c.l.b16 %v167
  %v718 = vunpack.c.h.b16 %v167
  %v719 = vunpack.c.l.b16 %v168
  %v720 = vunpack.c.h.b16 %v168
  %v721 = vunpack.c.l.b16 %v169
  %v722 = vunpack.c.h.b16 %v169
  %v723 = vunpack.c.l.b16 %v170
  %v724 = vunpack.c.h.b16 %v170
  %v725 = vunpack.c.l.b16 %v171
  %v726 = vunpack.c.h.b16 %v171
  %v727 = vunpack.c.l.b16 %v172
  %v728 = vunpack.c.h.b16 %v172
  %v729 = vunpack.c.l.b16 %v173
  %v730 = vunpack.c.h.b16 %v173
  %v731 = vunpack.c.l.b16 %v174
  %v732 = vunpack.c.h.b16 %v174
  %v733 = vunpack.c.l.b16 %v175
  %v734 = vunpack.c.h.b16 %v175
  %v735 = vunpack.c.l.b16 %v176
  %v736 = vunpack.c.h.b16 %v176
  %v737 = vunpack.c.l.b16 %v177
  %v738 = vunpack.c.h.b16 %v177
  %v739 = vunpack.c.l.b16 %v178
  %v740 = vunpack.c.h.b16 %v178
  %v741 = vunpack.c.l.b16 %v179
  %v742 = vunpack.c.h.b16 %v179
  %v743 = vunpack.c.l.b16 %v180
  %v744 = vunpack.c.h.b16 %v180
  %v745 = vunpack.c.l.b16 %v181
  %v746 = vunpack.c.h.b16 %v181
  %v747 = vunpack.c.l.b16 %v182
  %v748 = vunpack.c.h.b16 %v182
  %v749 = vunpack.c.l.b16 %v183
  %v750 = vunpack.c.h.b16 %v183
  %v751 = vunpack.c.l.b16 %v184
  %v752 = vunpack.c.h.b16 %v184
  %v753 = vunpack.c.l.b16 %v185
  %v754 = vunpack.c.h.b16 %v185
  %v755 = vunpack.c.l.b16 %v186
  %v756 = vunpack.c.h.b16 %v186
  %v757 = vunpack.c.l.b16 %v187
  %v758 = vunpack.c.h.b16 %v187
  %v759 = vunpack.c.l.b16 %v188
  %v760 = vunpack.c.h.b16 %v188
  %v761 = vunpack.c.l.b16 %v189
  %v762 = vunpack.c.h.b16 %v189
  %v763 = vunpack.c.l.b16 %v190
  %v764 = vunpack.c.h.b16 %v190
  %v765 = vunpack.c.l.b16 %v191
  %v766 = vunpack.c.h.b16 %v191
  %v767 = vunpack.c.l.b16 %v192
  %v768 = vunpack.c.h.b16 %v192
  %v769 = vunpack.c.l.b16 %v193
  %v770 = vunpack.c.h.b16 %v193
  %v771 = vunpack.c.l.b16 %v194
  %v772 = vunpack.c.h.b16 %v194
  %v773 = vunpack.c.l.b16 %v195
  %v774 = vunpack.c.h.b16 %v195
  %v775 = vunpack.c.l.b16 %v196
  %v776 = vunpack.c.h.b16 %v196
  %v777 = vpack.c.b16 %v459, %v457
  %v778 = vpack.c.b16 %v460, %v458
  %v779 = vpack.c.b16 %v463, %v461
  %v780 = vpack.c.b16 %v464, %v462
  %v781 = vpack.c.b16 %v467, %v465
  %v782 = vpack.c.b16 %v468, %v466
  %v783 = vpack.c.b16 %v471, %v469
  %v784 = vpack.c.b16 %v472, %v470
  %v785 = vpack.c.b16 %v475, %v473
  %v786 = vpack.c.b16 %v476, %v474
  %v787 = vpack.c.b16 %v479, %v477
  %v788 = vpack.c.b16 %v480, %v478
  %v789 = vpack.c.b16 %v483, %v481
  %v790 = vpack.c.b16 %v484, %v482
  %v791 = vpack.c.b16 %v487, %v485
  %v792 = vpack.c.b16 %v488, %v486
  %v793 = vpack.c.b16 %v491, %v489
  %v794 = vpack.c.b16 %v492, %v490
  %v795 = vpack.c.b16 %v495, %v493
  %v796 = vpack.c.b16 %v496, %v494
  %v797 = vpack.c.b16 %v499, %v497
  %v798 = vpack.c.b16 %v500, %v498
  %v799 = vpack.c.b16 %v503, %v501
  %v800 = vpack.c.b16 %v504, %v502
  %v801 = vpack.c.b16 %v507, %v505
  %v802 = vpack.c.b16 %v508, %v506
  %v803 = vpack.c.b16 %v511, %v509
  %v804 = vpack.c.b16 %v512, %v510
  %v805 = vpack.c.b16 %v515, %v513
  %v806 = vpack.c.b16 %v516, %v514
  %v807 = vpack.c.b16 %v519, %v517
  %v808 = vpack.c.b16 %v520, %v518
  %v809 = vpack.c.b16 %v523, %v521
  %v810 = vpack.c.b16 %v524, %v522
  %v811 = vpack.c.b16 %v527, %v525
  %v812 = vpack.c.b16 %v528, %v526
  %v813 = vpack.c.b16 %v531, %v529
  %v814 = vpack.c.b16 %v532, %v530
  %v815 = vpack.c.b16 %v535, %v533
  %v816 = vpack.c.b16 %v536, %v534
  %v817 = vpack.c.b16 %v539, %v537
  %v818 = vpack.c.b16 %v540, %v538
  %v819 = vpack.c.b16 %v543, %v541
  %v820 = vpack.c.b16 %v544, %v542
  %v821 = vpack.c.b16 %v547, %v545
  %v822 = vpack.c.b16 %v548, %v546
  %v823 = vpack.c.b16 %v551, %v549
  %v824 = vpack.c.b16 %v552, %v550
  %v825 = vpack.c.b16 %v555, %v553
  %v826 = vpack.c.b16 %v556, %v554
  %v827 = vpack.c.b16 %v559, %v557
  %v828 = vpack.c.b16 %v560, %v558
  %v829 = vpack.c.b16 %v563, %v561
  %v830 = vpack.c.b16 %v564, %v562
  %v831 = vpack.c.b16 %v567, %v565
  %v832 = vpack.c.b16 %v568, %v566
  %v833 = vpack.c.b16 %v571, %v569
  %v834 = vpack.c.b16 %v572, %v570
  %v835 = vpack.c.b16 %v575, %v573
  %v836 = vpack.c.b16 %v576, %v574
  %v837 = vpack.c.b16 %v579, %v577
  %v838 = vpack.c.b16 %v580, %v578
  %v839 = vpack.c.b16 %v583, %v581
  %v840 = vpack.c.b16 %v584, %v582
  %v841 = vpack.c.b16 %v587, %v585
  %v842 = vpack.c.b16 %v588, %v586
  %v843 = vpack.c.b16 %v591, %v589
  %v844 = vpack.c.b16 %v592, %v590
  %v845 = vpack.c.b16 %v595, %v593
  %v846 = vpack.c.b16 %v596, %v594
  %v847 = vpack.c.b16 %v599, %v597
  %v848 = vpack.c.b16 %v600, %v598
  %v849 = vpack.c.b16 %v603, %v601
  %v850 = vpack.c.b16 %v604, %v602
  %v851 = vpack.c.b16 %v607, %v605
  %v852 = vpack.c.b16 %v608, %v606
  %v853 = vpack.c.b16 %v611, %v609
  %v854 = vpack.c.b16 %v612, %v610
  %v855 = vpack.c.b16 %v615, %v613
  %v856 = vpack.c.b16 %v616, %v614
  %v857 = vpack.c.b16 %v619, %v617
  %v858 = vpack.c.b16 %v620, %v618
  %v859 = vpack.c.b16 %v623, %v621
  %v860 = vpack.c.b16 %v624, %v622
  %v861 = vpack.c.b16 %v627, %v625
  %v862 = vpack.c.b16 %v628, %v626
  %v863 = vpack.c.b16 %v631, %v629
  %v864 = vpack.c.b16 %v632, %v630
  %v865 = vpack.c.b16 %v635, %v633
  %v866 = vpack.c.b16 %v636, %v634
  %v867 = vpack.c.b16 %v639, %v637
  %v868 = vpack.c.b16 %v640, %v638
  %v869 = vpack.c.b16 %v643, %v641
  %v870 = vpack.c.b16 %v644, %v642
  %v871 = vpack.c.b16 %v647, %v645
  %v872 = vpack.c.b16 %v648, %v646
  %v873 = vpack.c.b16 %v651, %v649
  %v874 = vpack.c.b16 %v652, %v650
  %v875 = vpack.c.b16 %v655, %v653
  %v876 = vpack.c.b16 %v656, %v654
  %v877 = vpack.c.b16 %v659, %v657
  %v878 = vpack.c.b16 %v660, %v658
  %v879 = vpack.c.b16 %v663, %v661
  %v880 = vpack.c.b16 %v664, %v662
  %v881 = vpack.c.b16 %v667, %v665
  %v882 = vpack.c.b16 %v668, %v666
  %v883 = vpack.c.b16 %v671, %v669
  %v884 = vpack.c.b16 %v672, %v670
  %v885 = vpack.c.b16 %v675, %v673
  %v886 = vpack.c.b16 %v676, %v674
  %v887 = vpack.c.b16 %v679, %v677
  %v888 = vpack.c.b16 %v680, %v678
  %v889 = vpack.c.b16 %v683, %v681
  %v890 = vpack.c.b16 %v684, %v682
  %v891 = vpack.c.b16 %v687, %v685
  %v892 = vpack.c.b16 %v688, %v686
  %v893 = vpack.c.b16 %v691, %v689
  %v894 = vpack.c.b16 %v692, %v690
  %v895 = vpack.c.b16 %v695, %v693
  %v896 = vpack.c.b16 %v696, %v694
  %v897 = vpack.c.b16 %v699, %v697
  %v898 = vpack.c.b16 %v700, %v698
  %v899 = vpack.c.b16 %v703, %v701
  %v900 = vpack.c.b16 %v704, %v702
  %v901 = vpack.c.b16 %v707, %v705
  %v902 = vpack.c.b16 %v708, %v706
  %v903 = vpack.c.b16 %v711, %v709
  %v904 = vpack.c.b16 %v712, %v710
  %v905 = vpack.c.b16 %v715, %v713
  %v906 = vpack.c.b16 %v716, %v714
  %v907 = vpack.c.b16 %v719, %v717
  %v908 = vpack.c.b16 %v720, %v718
  %v909 = vpack.c.b16 %v723, %v721
  %v910 = vpack.c.b16 %v724, %v722
  %v911 = vpack.c.b16 %v727, %v725
  %v912 = vpack.c.b16 %v728, %v726
  %v913 = vpack.c.b16 %v731, %v729
  %v914 = vpack.c.b16 %v732, %v730
  %v915 = vpack.c.b16 %v735, %v733
  %v916 = vpack.c.b16 %v736, %v734
  %v917 = vpack.c.b16 %v739, %v737
  %v918 = vpack.c.b16 %v740, %v738
  %v919 = vpack.c.b16 %v743, %v741
  %v920 = vpack.c.b16 %v744, %v742
  %v921 = vpack.c.b16 %v747, %v745
  %v922 = vpack.c.b16 %v748, %v746
  %v923 = vpack.c.b16 %v751, %v749
  %v924 = vpack.c.b16 %v752, %v750
  %v925 = vpack.c.b16 %v755, %v753
  %v926 = vpack.c.b16 %v756, %v754
  %v927 = vpack.c.b16 %v759, %v757
  %v928 = vpack.c.b16 %v760, %v758
  %v929 = vpack.c.b16 %v763, %v761
  %v930 = vpack.c.b16 %v764, %v762
  %v931 = vpack.c.b16 %v767, %v765
  %v932 = vpack.c.b16 %v768, %v766
  %v933 = vpack.c.b16 %v771, %v769
  %v934 = vpack.c.b16 %v772, %v770
  %v935 = vpack.c.b16 %v775, %v773
  %v936 = vpack.c.b16 %v776, %v774
  %1097 = vmatpush.bf16.msra.mxu0 %v791
  %1098 = vmatpush.bf16.msra.mxu0 %v789
  %1099 = vmatpush.bf16.msra.mxu0 %v787
  %1100 = vmatpush.bf16.msra.mxu0 %v785
  %1101 = vmatpush.bf16.msra.mxu0 %v783
  %1102 = vmatpush.bf16.msra.mxu0 %v781
  %1103 = vmatpush.bf16.msra.mxu0 %v779
  %1104 = vmatpush.bf16.msra.mxu0 %v777
  %1105 = vmatmul.bf16.gmra.mxu0 %v257
  %v1106 = vpop.f32.mrf.mxu0
  %v1107 = vadd.f32 0.0, %v1106
  %v1108 = vpop.f32.mrf.mxu0
  %v1109 = vadd.f32 0.0, %v1108
  %1110 = vmatmul.bf16.gmra.mxu0 %v267
  %v1111 = vpop.f32.mrf.mxu0
  %v1112 = vadd.f32 0.0, %v1111
  %v1113 = vpop.f32.mrf.mxu0
  %v1114 = vadd.f32 0.0, %v1113
  %1115 = vdwg.mxu0
  %1116 = vmatpush.bf16.msra.mxu0 %v807
  %1117 = vmatpush.bf16.msra.mxu0 %v805
  %1118 = vmatpush.bf16.msra.mxu0 %v803
  %1119 = vmatpush.bf16.msra.mxu0 %v801
  %1120 = vmatpush.bf16.msra.mxu0 %v799
  %1121 = vmatpush.bf16.msra.mxu0 %v797
  %1122 = vmatpush.bf16.msra.mxu0 %v795
  %1123 = vmatpush.bf16.msra.mxu0 %v793
  %1124 = vmatmul.bf16.gmra.mxu0 %v258
  %v1125 = vpop.f32.mrf.mxu0
  %v1126 = vadd.f32 %v1107, %v1125
  %v1127 = vpop.f32.mrf.mxu0
  %v1128 = vadd.f32 %v1109, %v1127
  %1129 = vmatmul.bf16.gmra.mxu0 %v268
  %v1130 = vpop.f32.mrf.mxu0
  %v1131 = vadd.f32 %v1112, %v1130
  %v1132 = vpop.f32.mrf.mxu0
  %v1133 = vadd.f32 %v1114, %v1132
  %1134 = vdwg.mxu0
  %1135 = vmatpush.bf16.msra.mxu0 %v823
  %1136 = vmatpush.bf16.msra.mxu0 %v821
  %1137 = vmatpush.bf16.msra.mxu0 %v819
  %1138 = vmatpush.bf16.msra.mxu0 %v817
  %1139 = vmatpush.bf16.msra.mxu0 %v815
  %1140 = vmatpush.bf16.msra.mxu0 %v813
  %1141 = vmatpush.bf16.msra.mxu0 %v811
  %1142 = vmatpush.bf16.msra.mxu0 %v809
  %1143 = vmatmul.bf16.gmra.mxu0 %v259
  %v1144 = vpop.f32.mrf.mxu0
  %v1145 = vadd.f32 %v1126, %v1144
  %v1146 = vpop.f32.mrf.mxu0
  %v1147 = vadd.f32 %v1128, %v1146
  %1148 = vmatmul.bf16.gmra.mxu0 %v269
  %v1149 = vpop.f32.mrf.mxu0
  %v1150 = vadd.f32 %v1131, %v1149
  %v1151 = vpop.f32.mrf.mxu0
  %v1152 = vadd.f32 %v1133, %v1151
  %1153 = vdwg.mxu0
  %1154 = vmatpush.bf16.msra.mxu0 %v839
  %1155 = vmatpush.bf16.msra.mxu0 %v837
  %1156 = vmatpush.bf16.msra.mxu0 %v835
  %1157 = vmatpush.bf16.msra.mxu0 %v833
  %1158 = vmatpush.bf16.msra.mxu0 %v831
  %1159 = vmatpush.bf16.msra.mxu0 %v829
  %1160 = vmatpush.bf16.msra.mxu0 %v827
  %1161 = vmatpush.bf16.msra.mxu0 %v825
  %1162 = vmatmul.bf16.gmra.mxu0 %v260
  %v1163 = vpop.f32.mrf.mxu0
  %v1164 = vadd.f32 %v1145, %v1163
  %v1165 = vpop.f32.mrf.mxu0
  %v1166 = vadd.f32 %v1147, %v1165
  %1167 = vmatmul.bf16.gmra.mxu0 %v270
  %v1168 = vpop.f32.mrf.mxu0
  %v1169 = vadd.f32 %v1150, %v1168
  %v1170 = vpop.f32.mrf.mxu0
  %v1171 = vadd.f32 %v1152, %v1170
  %1172 = vdwg.mxu0
  %1173 = vmatpush.bf16.msra.mxu0 %v855
  %1174 = vmatpush.bf16.msra.mxu0 %v853
  %1175 = vmatpush.bf16.msra.mxu0 %v851
  %1176 = vmatpush.bf16.msra.mxu0 %v849
  %1177 = vmatpush.bf16.msra.mxu0 %v847
  %1178 = vmatpush.bf16.msra.mxu0 %v845
  %1179 = vmatpush.bf16.msra.mxu0 %v843
  %1180 = vmatpush.bf16.msra.mxu0 %v841
  %1181 = vmatmul.bf16.gmra.mxu0 %v261
  %v1182 = vpop.f32.mrf.mxu0
  %v1183 = vadd.f32 %v1164, %v1182
  %v1184 = vpop.f32.mrf.mxu0
  %v1185 = vadd.f32 %v1166, %v1184
  %1186 = vmatmul.bf16.gmra.mxu0 %v271
  %v1187 = vpop.f32.mrf.mxu0
  %v1188 = vadd.f32 %v1169, %v1187
  %v1189 = vpop.f32.mrf.mxu0
  %v1190 = vadd.f32 %v1171, %v1189
  %1191 = vdwg.mxu0
  %1192 = vmatpush.bf16.msra.mxu0 %v871
  %1193 = vmatpush.bf16.msra.mxu0 %v869
  %1194 = vmatpush.bf16.msra.mxu0 %v867
  %1195 = vmatpush.bf16.msra.mxu0 %v865
  %1196 = vmatpush.bf16.msra.mxu0 %v863
  %1197 = vmatpush.bf16.msra.mxu0 %v861
  %1198 = vmatpush.bf16.msra.mxu0 %v859
  %1199 = vmatpush.bf16.msra.mxu0 %v857
  %1200 = vmatmul.bf16.gmra.mxu0 %v262
  %v1201 = vpop.f32.mrf.mxu0
  %v1202 = vadd.f32 %v1183, %v1201
  %v1203 = vpop.f32.mrf.mxu0
  %v1204 = vadd.f32 %v1185, %v1203
  %1205 = vmatmul.bf16.gmra.mxu0 %v272
  %v1206 = vpop.f32.mrf.mxu0
  %v1207 = vadd.f32 %v1188, %v1206
  %v1208 = vpop.f32.mrf.mxu0
  %v1209 = vadd.f32 %v1190, %v1208
  %1210 = vdwg.mxu0
  %1211 = vmatpush.bf16.msra.mxu0 %v887
  %1212 = vmatpush.bf16.msra.mxu0 %v885
  %1213 = vmatpush.bf16.msra.mxu0 %v883
  %1214 = vmatpush.bf16.msra.mxu0 %v881
  %1215 = vmatpush.bf16.msra.mxu0 %v879
  %1216 = vmatpush.bf16.msra.mxu0 %v877
  %1217 = vmatpush.bf16.msra.mxu0 %v875
  %1218 = vmatpush.bf16.msra.mxu0 %v873
  %1219 = vmatmul.bf16.gmra.mxu0 %v263
  %v1220 = vpop.f32.mrf.mxu0
  %v1221 = vadd.f32 %v1202, %v1220
  %v1222 = vpop.f32.mrf.mxu0
  %v1223 = vadd.f32 %v1204, %v1222
  %1224 = vmatmul.bf16.gmra.mxu0 %v273
  %v1225 = vpop.f32.mrf.mxu0
  %v1226 = vadd.f32 %v1207, %v1225
  %v1227 = vpop.f32.mrf.mxu0
  %v1228 = vadd.f32 %v1209, %v1227
  %1229 = vdwg.mxu0
  %1230 = vmatpush.bf16.msra.mxu0 %v903
  %1231 = vmatpush.bf16.msra.mxu0 %v901
  %1232 = vmatpush.bf16.msra.mxu0 %v899
  %1233 = vmatpush.bf16.msra.mxu0 %v897
  %1234 = vmatpush.bf16.msra.mxu0 %v895
  %1235 = vmatpush.bf16.msra.mxu0 %v893
  %1236 = vmatpush.bf16.msra.mxu0 %v891
  %1237 = vmatpush.bf16.msra.mxu0 %v889
  %1238 = vmatmul.bf16.gmra.mxu0 %v264
  %v1239 = vpop.f32.mrf.mxu0
  %v1240 = vadd.f32 %v1221, %v1239
  %v1241 = vpop.f32.mrf.mxu0
  %v1242 = vadd.f32 %v1223, %v1241
  %1243 = vmatmul.bf16.gmra.mxu0 %v274
  %v1244 = vpop.f32.mrf.mxu0
  %v1245 = vadd.f32 %v1226, %v1244
  %v1246 = vpop.f32.mrf.mxu0
  %v1247 = vadd.f32 %v1228, %v1246
  %1248 = vdwg.mxu0
  %1249 = vmatpush.bf16.msra.mxu0 %v919
  %1250 = vmatpush.bf16.msra.mxu0 %v917
  %1251 = vmatpush.bf16.msra.mxu0 %v915
  %1252 = vmatpush.bf16.msra.mxu0 %v913
  %1253 = vmatpush.bf16.msra.mxu0 %v911
  %1254 = vmatpush.bf16.msra.mxu0 %v909
  %1255 = vmatpush.bf16.msra.mxu0 %v907
  %1256 = vmatpush.bf16.msra.mxu0 %v905
  %1257 = vmatmul.bf16.gmra.mxu0 %v265
  %v1258 = vpop.f32.mrf.mxu0
  %v1259 = vadd.f32 %v1240, %v1258
  %v1260 = vpop.f32.mrf.mxu0
  %v1261 = vadd.f32 %v1242, %v1260
  %1262 = vmatmul.bf16.gmra.mxu0 %v275
  %v1263 = vpop.f32.mrf.mxu0
  %v1264 = vadd.f32 %v1245, %v1263
  %v1265 = vpop.f32.mrf.mxu0
  %v1266 = vadd.f32 %v1247, %v1265
  %1267 = vdwg.mxu0
  %1268 = vmatpush.bf16.msra.mxu0 %v935
  %1269 = vmatpush.bf16.msra.mxu0 %v933
  %1270 = vmatpush.bf16.msra.mxu0 %v931
  %1271 = vmatpush.bf16.msra.mxu0 %v929
  %1272 = vmatpush.bf16.msra.mxu0 %v927
  %1273 = vmatpush.bf16.msra.mxu0 %v925
  %1274 = vmatpush.bf16.msra.mxu0 %v923
  %1275 = vmatpush.bf16.msra.mxu0 %v921
  %1276 = vmatmul.bf16.gmra.mxu0 %v266
  %v1277 = vpop.f32.mrf.mxu0
  %v1278 = vadd.f32 %v1259, %v1277
  %v1279 = vpop.f32.mrf.mxu0
  %v1280 = vadd.f32 %v1261, %v1279
  %1281 = vmatmul.bf16.gmra.mxu0 %v276
  %v1282 = vpop.f32.mrf.mxu0
  %v1283 = vadd.f32 %v1264, %v1282
  %v1284 = vpop.f32.mrf.mxu0
  %v1285 = vadd.f32 %v1266, %v1284
  %1286 = vdwg.mxu0
  %1287 = vmatpush.bf16.msra.mxu0 %v792
  %1288 = vmatpush.bf16.msra.mxu0 %v790
  %1289 = vmatpush.bf16.msra.mxu0 %v788
  %1290 = vmatpush.bf16.msra.mxu0 %v786
  %1291 = vmatpush.bf16.msra.mxu0 %v784
  %1292 = vmatpush.bf16.msra.mxu0 %v782
  %1293 = vmatpush.bf16.msra.mxu0 %v780
  %1294 = vmatpush.bf16.msra.mxu0 %v778
  %1295 = vmatmul.bf16.gmra.mxu0 %v257
  %v1296 = vpop.f32.mrf.mxu0
  %v1297 = vadd.f32 0.0, %v1296
  %v1298 = vpop.f32.mrf.mxu0
  %v1299 = vadd.f32 0.0, %v1298
  %1300 = vmatmul.bf16.gmra.mxu0 %v267
  %v1301 = vpop.f32.mrf.mxu0
  %v1302 = vadd.f32 0.0, %v1301
  %v1303 = vpop.f32.mrf.mxu0
  %v1304 = vadd.f32 0.0, %v1303
  %1305 = vdwg.mxu0
  %1306 = vmatpush.bf16.msra.mxu0 %v808
  %1307 = vmatpush.bf16.msra.mxu0 %v806
  %1308 = vmatpush.bf16.msra.mxu0 %v804
  %1309 = vmatpush.bf16.msra.mxu0 %v802
  %1310 = vmatpush.bf16.msra.mxu0 %v800
  %1311 = vmatpush.bf16.msra.mxu0 %v798
  %1312 = vmatpush.bf16.msra.mxu0 %v796
  %1313 = vmatpush.bf16.msra.mxu0 %v794
  %1314 = vmatmul.bf16.gmra.mxu0 %v258
  %v1315 = vpop.f32.mrf.mxu0
  %v1316 = vadd.f32 %v1297, %v1315
  %v1317 = vpop.f32.mrf.mxu0
  %v1318 = vadd.f32 %v1299, %v1317
  %1319 = vmatmul.bf16.gmra.mxu0 %v268
  %v1320 = vpop.f32.mrf.mxu0
  %v1321 = vadd.f32 %v1302, %v1320
  %v1322 = vpop.f32.mrf.mxu0
  %v1323 = vadd.f32 %v1304, %v1322
  %1324 = vdwg.mxu0
  %1325 = vmatpush.bf16.msra.mxu0 %v824
  %1326 = vmatpush.bf16.msra.mxu0 %v822
  %1327 = vmatpush.bf16.msra.mxu0 %v820
  %1328 = vmatpush.bf16.msra.mxu0 %v818
  %1329 = vmatpush.bf16.msra.mxu0 %v816
  %1330 = vmatpush.bf16.msra.mxu0 %v814
  %1331 = vmatpush.bf16.msra.mxu0 %v812
  %1332 = vmatpush.bf16.msra.mxu0 %v810
  %1333 = vmatmul.bf16.gmra.mxu0 %v259
  %v1334 = vpop.f32.mrf.mxu0
  %v1335 = vadd.f32 %v1316, %v1334
  %v1336 = vpop.f32.mrf.mxu0
  %v1337 = vadd.f32 %v1318, %v1336
  %1338 = vmatmul.bf16.gmra.mxu0 %v269
  %v1339 = vpop.f32.mrf.mxu0
  %v1340 = vadd.f32 %v1321, %v1339
  %v1341 = vpop.f32.mrf.mxu0
  %v1342 = vadd.f32 %v1323, %v1341
  %1343 = vdwg.mxu0
  %1344 = vmatpush.bf16.msra.mxu0 %v840
  %1345 = vmatpush.bf16.msra.mxu0 %v838
  %1346 = vmatpush.bf16.msra.mxu0 %v836
  %1347 = vmatpush.bf16.msra.mxu0 %v834
  %1348 = vmatpush.bf16.msra.mxu0 %v832
  %1349 = vmatpush.bf16.msra.mxu0 %v830
  %1350 = vmatpush.bf16.msra.mxu0 %v828
  %1351 = vmatpush.bf16.msra.mxu0 %v826
  %1352 = vmatmul.bf16.gmra.mxu0 %v260
  %v1353 = vpop.f32.mrf.mxu0
  %v1354 = vadd.f32 %v1335, %v1353
  %v1355 = vpop.f32.mrf.mxu0
  %v1356 = vadd.f32 %v1337, %v1355
  %1357 = vmatmul.bf16.gmra.mxu0 %v270
  %v1358 = vpop.f32.mrf.mxu0
  %v1359 = vadd.f32 %v1340, %v1358
  %v1360 = vpop.f32.mrf.mxu0
  %v1361 = vadd.f32 %v1342, %v1360
  %1362 = vdwg.mxu0
  %1363 = vmatpush.bf16.msra.mxu0 %v856
  %1364 = vmatpush.bf16.msra.mxu0 %v854
  %1365 = vmatpush.bf16.msra.mxu0 %v852
  %1366 = vmatpush.bf16.msra.mxu0 %v850
  %1367 = vmatpush.bf16.msra.mxu0 %v848
  %1368 = vmatpush.bf16.msra.mxu0 %v846
  %1369 = vmatpush.bf16.msra.mxu0 %v844
  %1370 = vmatpush.bf16.msra.mxu0 %v842
  %1371 = vmatmul.bf16.gmra.mxu0 %v261
  %v1372 = vpop.f32.mrf.mxu0
  %v1373 = vadd.f32 %v1354, %v1372
  %v1374 = vpop.f32.mrf.mxu0
  %v1375 = vadd.f32 %v1356, %v1374
  %1376 = vmatmul.bf16.gmra.mxu0 %v271
  %v1377 = vpop.f32.mrf.mxu0
  %v1378 = vadd.f32 %v1359, %v1377
  %v1379 = vpop.f32.mrf.mxu0
  %v1380 = vadd.f32 %v1361, %v1379
  %1381 = vdwg.mxu0
  %1382 = vmatpush.bf16.msra.mxu0 %v872
  %1383 = vmatpush.bf16.msra.mxu0 %v870
  %1384 = vmatpush.bf16.msra.mxu0 %v868
  %1385 = vmatpush.bf16.msra.mxu0 %v866
  %1386 = vmatpush.bf16.msra.mxu0 %v864
  %1387 = vmatpush.bf16.msra.mxu0 %v862
  %1388 = vmatpush.bf16.msra.mxu0 %v860
  %1389 = vmatpush.bf16.msra.mxu0 %v858
  %1390 = vmatmul.bf16.gmra.mxu0 %v262
  %v1391 = vpop.f32.mrf.mxu0
  %v1392 = vadd.f32 %v1373, %v1391
  %v1393 = vpop.f32.mrf.mxu0
  %v1394 = vadd.f32 %v1375, %v1393
  %1395 = vmatmul.bf16.gmra.mxu0 %v272
  %v1396 = vpop.f32.mrf.mxu0
  %v1397 = vadd.f32 %v1378, %v1396
  %v1398 = vpop.f32.mrf.mxu0
  %v1399 = vadd.f32 %v1380, %v1398
  %1400 = vdwg.mxu0
  %1401 = vmatpush.bf16.msra.mxu0 %v888
  %1402 = vmatpush.bf16.msra.mxu0 %v886
  %1403 = vmatpush.bf16.msra.mxu0 %v884
  %1404 = vmatpush.bf16.msra.mxu0 %v882
  %1405 = vmatpush.bf16.msra.mxu0 %v880
  %1406 = vmatpush.bf16.msra.mxu0 %v878
  %1407 = vmatpush.bf16.msra.mxu0 %v876
  %1408 = vmatpush.bf16.msra.mxu0 %v874
  %1409 = vmatmul.bf16.gmra.mxu0 %v263
  %v1410 = vpop.f32.mrf.mxu0
  %v1411 = vadd.f32 %v1392, %v1410
  %v1412 = vpop.f32.mrf.mxu0
  %v1413 = vadd.f32 %v1394, %v1412
  %1414 = vmatmul.bf16.gmra.mxu0 %v273
  %v1415 = vpop.f32.mrf.mxu0
  %v1416 = vadd.f32 %v1397, %v1415
  %v1417 = vpop.f32.mrf.mxu0
  %v1418 = vadd.f32 %v1399, %v1417
  %1419 = vdwg.mxu0
  %1420 = vmatpush.bf16.msra.mxu0 %v904
  %1421 = vmatpush.bf16.msra.mxu0 %v902
  %1422 = vmatpush.bf16.msra.mxu0 %v900
  %1423 = vmatpush.bf16.msra.mxu0 %v898
  %1424 = vmatpush.bf16.msra.mxu0 %v896
  %1425 = vmatpush.bf16.msra.mxu0 %v894
  %1426 = vmatpush.bf16.msra.mxu0 %v892
  %1427 = vmatpush.bf16.msra.mxu0 %v890
  %1428 = vmatmul.bf16.gmra.mxu0 %v264
  %v1429 = vpop.f32.mrf.mxu0
  %v1430 = vadd.f32 %v1411, %v1429
  %v1431 = vpop.f32.mrf.mxu0
  %v1432 = vadd.f32 %v1413, %v1431
  %1433 = vmatmul.bf16.gmra.mxu0 %v274
  %v1434 = vpop.f32.mrf.mxu0
  %v1435 = vadd.f32 %v1416, %v1434
  %v1436 = vpop.f32.mrf.mxu0
  %v1437 = vadd.f32 %v1418, %v1436
  %1438 = vdwg.mxu0
  %1439 = vmatpush.bf16.msra.mxu0 %v920
  %1440 = vmatpush.bf16.msra.mxu0 %v918
  %1441 = vmatpush.bf16.msra.mxu0 %v916
  %1442 = vmatpush.bf16.msra.mxu0 %v914
  %1443 = vmatpush.bf16.msra.mxu0 %v912
  %1444 = vmatpush.bf16.msra.mxu0 %v910
  %1445 = vmatpush.bf16.msra.mxu0 %v908
  %1446 = vmatpush.bf16.msra.mxu0 %v906
  %1447 = vmatmul.bf16.gmra.mxu0 %v265
  %v1448 = vpop.f32.mrf.mxu0
  %v1449 = vadd.f32 %v1430, %v1448
  %v1450 = vpop.f32.mrf.mxu0
  %v1451 = vadd.f32 %v1432, %v1450
  %1452 = vmatmul.bf16.gmra.mxu0 %v275
  %v1453 = vpop.f32.mrf.mxu0
  %v1454 = vadd.f32 %v1435, %v1453
  %v1455 = vpop.f32.mrf.mxu0
  %v1456 = vadd.f32 %v1437, %v1455
  %1457 = vdwg.mxu0
  %1458 = vmatpush.bf16.msra.mxu0 %v936
  %1459 = vmatpush.bf16.msra.mxu0 %v934
  %1460 = vmatpush.bf16.msra.mxu0 %v932
  %1461 = vmatpush.bf16.msra.mxu0 %v930
  %1462 = vmatpush.bf16.msra.mxu0 %v928
  %1463 = vmatpush.bf16.msra.mxu0 %v926
  %1464 = vmatpush.bf16.msra.mxu0 %v924
  %1465 = vmatpush.bf16.msra.mxu0 %v922
  %1466 = vmatmul.bf16.gmra.mxu0 %v266
  %v1467 = vpop.f32.mrf.mxu0
  %v1468 = vadd.f32 %v1449, %v1467
  %v1469 = vpop.f32.mrf.mxu0
  %v1470 = vadd.f32 %v1451, %v1469
  %1471 = vmatmul.bf16.gmra.mxu0 %v276
  %v1472 = vpop.f32.mrf.mxu0
  %v1473 = vadd.f32 %v1454, %v1472
  %v1474 = vpop.f32.mrf.mxu0
  %v1475 = vadd.f32 %v1456, %v1474
  %1476 = vdwg.mxu0
  %v1477 = vld [vmem:[%s2] sm:$0x3]
  %v1479 = vperm.slane %v1477, 0
  %v1480 = vperm.slane %v1477, 1
  %v1483 = vmul.f32 %v1278, %v1479
  %v1484 = vmul.f32 %v1468, %v1480
  %v1485 = vmul.f32 %v1280, %v1479
  %v1486 = vmul.f32 %v1470, %v1480
  %v1487 = vmul.f32 %v1283, %v1479
  %v1488 = vmul.f32 %v1473, %v1480
  %v1489 = vmul.f32 %v1285, %v1479
  %v1490 = vmul.f32 %v1475, %v1480
  %v1491 = vld [vmem:[%s3] sm:$0x3]
  %v1493 = vperm.slane %v1491, 0
  %v1494 = vperm.slane %v1491, 1
  %v1497 = vadd.f32 %v1483, %v1493
  %v1498 = vadd.f32 %v1484, %v1494
  %v1499 = vadd.f32 %v1485, %v1493
  %v1500 = vadd.f32 %v1486, %v1494
  %v1501 = vadd.f32 %v1487, %v1493
  %v1502 = vadd.f32 %v1488, %v1494
  %v1503 = vadd.f32 %v1489, %v1493
  %v1504 = vadd.f32 %v1490, %v1494
  %v1505 = vmax.f32 %v1497, 0.0
  %v1506 = vmax.f32 %v1498, 0.0
  %v1507 = vmax.f32 %v1499, 0.0
  %v1508 = vmax.f32 %v1500, 0.0
  %v1509 = vmax.f32 %v1501, 0.0
  %v1510 = vmax.f32 %v1502, 0.0
  %v1511 = vmax.f32 %v1503, 0.0
  %v1512 = vmax.f32 %v1504, 0.0
  %v1513 = vpack.c.bf16 %v1506, %v1505
  %v1514 = vpack.c.bf16 %v1508, %v1507
  %v1515 = vpack.c.bf16 %v1510, %v1509
  %v1516 = vpack.c.bf16 %v1512, %v1511
  %1517 = vst [vmem:[%s4] sm:$0xff] %v1513
  %1518 = vst [vmem:[%s4 + $0x8] sm:$0xff] %v1514
  %1519 = vst [vmem:[%s4 + $0x10] sm:$0xff] %v1515
  %1520 = vst [vmem:[%s4 + $0x18] sm:$0xff] %v1516
  // Predicated region
  $region18: #{retrain_autodeeplab2_forward.11} parent=0 // pred_check
    _
  $region19: #{retrain_autodeeplab2_forward.11} parent=0 // pred_check_branch
    %1522 = sbr.rel (0) target = $region21
  $region20: #{retrain_autodeeplab2_forward.11} parent=0 // pred_region
    _
  $region21: #{retrain_autodeeplab2_forward.11} parent=0 // pred_fallthru
    _
  // Predicated region
  $region22: #{retrain_autodeeplab2_forward.11} parent=0 // pred_check
    _
  $region23: #{retrain_autodeeplab2_forward.11} parent=0 // pred_check_branch
    %1524 = sbr.rel (0) target = $region25
  $region24: #{retrain_autodeeplab2_forward.11} parent=0 // pred_region
    _
  $region25: #{retrain_autodeeplab2_forward.11} parent=0 // pred_fallthru
    _

// kernel: retrain_autodeeplab2_forward.13
$region0: #{retrain_autodeeplab2_forward.13}
  #allocation0 [shape = 'u32[]', space=smem, size = 0x4, offset = 0x4, fixed_abs, tag = 'smem constant byte address 0x4 - core index']
  #allocation1 [shape = 'u32[72,128]{1,0:T(1,128)}', space=vmem, size = 0x9000, scoped, tag = 'internal scratch']
  %s0 = inlined_call_operand.vmem [shape: bf16[32,256], index: 0, kind: input, shape index: {}]
  %s1 = inlined_call_operand.vmem [shape: bf16[256,2], index: 1, kind: input, shape index: {}]
  %s2 = inlined_call_operand.vmem [shape: f32[1,2], index: 2, kind: input, shape index: {}]
  %s3 = inlined_call_operand.vmem [shape: f32[1,2], index: 3, kind: input, shape index: {}]
  %s4 = inlined_call_operand.vmem [shape: f32[32,2], index: 4, kind: output, shape index: {}]
  %s5 = sld [smem:[#allocation0]]
  $region26: #{retrain_autodeeplab2_forward.13} parent=0
    _
  %s7 = ssub.s32 1, %s5
  %s8 = scalar_select 0, %s7, %s5
  // Predicated region
  $region2: #{retrain_autodeeplab2_forward.13} parent=0 // pred_check
    _
  $region3: #{retrain_autodeeplab2_forward.13} parent=0 // pred_check_branch
    %10 = sbr.rel (0) target = $region5
  $region4: #{retrain_autodeeplab2_forward.13} parent=0 // pred_region
    _
  $region5: #{retrain_autodeeplab2_forward.13} parent=0 // pred_fallthru
    _
  // Predicated region
  $region6: #{retrain_autodeeplab2_forward.13} parent=0 // pred_check
    _
  $region7: #{retrain_autodeeplab2_forward.13} parent=0 // pred_check_branch
    %12 = sbr.rel (0) target = $region9
  $region8: #{retrain_autodeeplab2_forward.13} parent=0 // pred_region
    _
  $region9: #{retrain_autodeeplab2_forward.13} parent=0 // pred_fallthru
    _
  // Predicated region
  $region10: #{retrain_autodeeplab2_forward.13} parent=0 // pred_check
    _
  $region11: #{retrain_autodeeplab2_forward.13} parent=0 // pred_check_branch
    %14 = sbr.rel (0) target = $region13
  $region12: #{retrain_autodeeplab2_forward.13} parent=0 // pred_region
    _
  $region13: #{retrain_autodeeplab2_forward.13} parent=0 // pred_fallthru
    _
  // Predicated region
  $region14: #{retrain_autodeeplab2_forward.13} parent=0 // pred_check
    _
  $region15: #{retrain_autodeeplab2_forward.13} parent=0 // pred_check_branch
    %16 = sbr.rel (0) target = $region17
  $region16: #{retrain_autodeeplab2_forward.13} parent=0 // pred_region
    _
  $region17: #{retrain_autodeeplab2_forward.13} parent=0 // pred_fallthru
    _
  %v17 = vld [vmem:[%s0] sm:$0xff]
  %v18 = vld [vmem:[%s0 + $0x8] sm:$0xff]
  %v19 = vld [vmem:[%s0 + $0x10] sm:$0xff]
  %v20 = vld [vmem:[%s0 + $0x18] sm:$0xff]
  %v21 = vld [vmem:[%s1] sm:$0xf]
  %v22 = vld [vmem:[%s1 + $0x4] sm:$0xf]
  %v23 = vld [vmem:[%s1 + $0x8] sm:$0xf]
  %v24 = vld [vmem:[%s1 + $0xc] sm:$0xf]
  %v25 = vld [vmem:[%s1 + $0x10] sm:$0xf]
  %v26 = vld [vmem:[%s1 + $0x14] sm:$0xf]
  %v27 = vld [vmem:[%s1 + $0x18] sm:$0xf]
  %v28 = vld [vmem:[%s1 + $0x1c] sm:$0xf]
  %v29 = vld [vmem:[%s1 + $0x20] sm:$0xf]
  %v30 = vld [vmem:[%s1 + $0x24] sm:$0xf]
  %v31 = vld [vmem:[%s1 + $0x28] sm:$0xf]
  %v32 = vld [vmem:[%s1 + $0x2c] sm:$0xf]
  %v33 = vld [vmem:[%s1 + $0x30] sm:$0xf]
  %v34 = vld [vmem:[%s1 + $0x34] sm:$0xf]
  %v35 = vld [vmem:[%s1 + $0x38] sm:$0xf]
  %v36 = vld [vmem:[%s1 + $0x3c] sm:$0xf]
  %v37 = vld [vmem:[%s1 + $0x40] sm:$0xf]
  %v38 = vld [vmem:[%s1 + $0x44] sm:$0xf]
  %v39 = vld [vmem:[%s1 + $0x48] sm:$0xf]
  %v40 = vld [vmem:[%s1 + $0x4c] sm:$0xf]
  %v41 = vld [vmem:[%s1 + $0x50] sm:$0xf]
  %v42 = vld [vmem:[%s1 + $0x54] sm:$0xf]
  %v43 = vld [vmem:[%s1 + $0x58] sm:$0xf]
  %v44 = vld [vmem:[%s1 + $0x5c] sm:$0xf]
  %v45 = vld [vmem:[%s1 + $0x60] sm:$0xf]
  %v46 = vld [vmem:[%s1 + $0x64] sm:$0xf]
  %v47 = vld [vmem:[%s1 + $0x68] sm:$0xf]
  %v48 = vld [vmem:[%s1 + $0x6c] sm:$0xf]
  %v49 = vld [vmem:[%s1 + $0x70] sm:$0xf]
  %v50 = vld [vmem:[%s1 + $0x74] sm:$0xf]
  %v51 = vld [vmem:[%s1 + $0x78] sm:$0xf]
  %v52 = vld [vmem:[%s1 + $0x7c] sm:$0xf]
  %v57 = vunpack.c.l.b16 %v17
  %v58 = vunpack.c.h.b16 %v17
  %v59 = vunpack.c.l.b16 %v18
  %v60 = vunpack.c.h.b16 %v18
  %v61 = vunpack.c.l.b16 %v19
  %v62 = vunpack.c.h.b16 %v19
  %v63 = vunpack.c.l.b16 %v20
  %v64 = vunpack.c.h.b16 %v20
  %v65 = vpack.c.b16 %v59, %v57
  %v66 = vpack.c.b16 %v60, %v58
  %v67 = vpack.c.b16 %v63, %v61
  %v68 = vpack.c.b16 %v64, %v62
  %v105 = vunpack.c.l.b16 %v21
  %v106 = vunpack.c.l.b16 %v22
  %v107 = vunpack.c.l.b16 %v23
  %v108 = vunpack.c.l.b16 %v24
  %v109 = vunpack.c.l.b16 %v25
  %v110 = vunpack.c.l.b16 %v26
  %v111 = vunpack.c.l.b16 %v27
  %v112 = vunpack.c.l.b16 %v28
  %v113 = vunpack.c.l.b16 %v29
  %v114 = vunpack.c.l.b16 %v30
  %v115 = vunpack.c.l.b16 %v31
  %v116 = vunpack.c.l.b16 %v32
  %v117 = vunpack.c.l.b16 %v33
  %v118 = vunpack.c.l.b16 %v34
  %v119 = vunpack.c.l.b16 %v35
  %v120 = vunpack.c.l.b16 %v36
  %v121 = vunpack.c.l.b16 %v37
  %v122 = vunpack.c.l.b16 %v38
  %v123 = vunpack.c.l.b16 %v39
  %v124 = vunpack.c.l.b16 %v40
  %v125 = vunpack.c.l.b16 %v41
  %v126 = vunpack.c.l.b16 %v42
  %v127 = vunpack.c.l.b16 %v43
  %v128 = vunpack.c.l.b16 %v44
  %v129 = vunpack.c.l.b16 %v45
  %v130 = vunpack.c.l.b16 %v46
  %v131 = vunpack.c.l.b16 %v47
  %v132 = vunpack.c.l.b16 %v48
  %v133 = vunpack.c.l.b16 %v49
  %v134 = vunpack.c.l.b16 %v50
  %v135 = vunpack.c.l.b16 %v51
  %v136 = vunpack.c.l.b16 %v52
  %v137 = vpack.c.b16 %v106, %v105
  %v138 = vpack.c.b16 %v108, %v107
  %v139 = vpack.c.b16 %v110, %v109
  %v140 = vpack.c.b16 %v112, %v111
  %v141 = vpack.c.b16 %v114, %v113
  %v142 = vpack.c.b16 %v116, %v115
  %v143 = vpack.c.b16 %v118, %v117
  %v144 = vpack.c.b16 %v120, %v119
  %v145 = vpack.c.b16 %v122, %v121
  %v146 = vpack.c.b16 %v124, %v123
  %v147 = vpack.c.b16 %v126, %v125
  %v148 = vpack.c.b16 %v128, %v127
  %v149 = vpack.c.b16 %v130, %v129
  %v150 = vpack.c.b16 %v132, %v131
  %v151 = vpack.c.b16 %v134, %v133
  %v152 = vpack.c.b16 %v136, %v135
  %169 = vmatpush.bf16.msra.mxu0 %v144
  %170 = vmatpush.bf16.msra.mxu0 %v143
  %171 = vmatpush.bf16.msra.mxu0 %v142
  %172 = vmatpush.bf16.msra.mxu0 %v141
  %173 = vmatpush.bf16.msra.mxu0 %v140
  %174 = vmatpush.bf16.msra.mxu0 %v139
  %175 = vmatpush.bf16.msra.mxu0 %v138
  %176 = vmatpush.bf16.msra.mxu0 %v137
  %177 = vmatmul.bf16.gmra.mxu0 %v65
  %v178 = vpop.f32.mrf.mxu0
  %v179 = vadd.f32 0.0, %v178
  %v180 = vpop.f32.mrf.mxu0
  %v181 = vadd.f32 0.0, %v180
  %182 = vmatmul.bf16.gmra.mxu0 %v67
  %v183 = vpop.f32.mrf.mxu0
  %v184 = vadd.f32 0.0, %v183
  %v185 = vpop.f32.mrf.mxu0
  %v186 = vadd.f32 0.0, %v185
  %187 = vdwg.mxu0
  %188 = vmatpush.bf16.msra.mxu0 %v152
  %189 = vmatpush.bf16.msra.mxu0 %v151
  %190 = vmatpush.bf16.msra.mxu0 %v150
  %191 = vmatpush.bf16.msra.mxu0 %v149
  %192 = vmatpush.bf16.msra.mxu0 %v148
  %193 = vmatpush.bf16.msra.mxu0 %v147
  %194 = vmatpush.bf16.msra.mxu0 %v146
  %195 = vmatpush.bf16.msra.mxu0 %v145
  %196 = vmatmul.bf16.gmra.mxu0 %v66
  %v197 = vpop.f32.mrf.mxu0
  %v198 = vadd.f32 %v179, %v197
  %v199 = vpop.f32.mrf.mxu0
  %v200 = vadd.f32 %v181, %v199
  %201 = vmatmul.bf16.gmra.mxu0 %v68
  %v202 = vpop.f32.mrf.mxu0
  %v203 = vadd.f32 %v184, %v202
  %v204 = vpop.f32.mrf.mxu0
  %v205 = vadd.f32 %v186, %v204
  %206 = vdwg.mxu0
  %v207 = vld [vmem:[%s2] sm:$0x1]
  %v209 = vperm.slane %v207, 0
  %v211 = vmul.f32 %v198, %v209
  %v212 = vmul.f32 %v200, %v209
  %v213 = vmul.f32 %v203, %v209
  %v214 = vmul.f32 %v205, %v209
  %v215 = vld [vmem:[%s3] sm:$0x1]
  %v217 = vperm.slane %v215, 0
  %v219 = vadd.f32 %v211, %v217
  %v220 = vadd.f32 %v212, %v217
  %v221 = vadd.f32 %v213, %v217
  %v222 = vadd.f32 %v214, %v217
  %vm223 = vcmask 15360
  %224 = vst.msk [vmem:[%s4] sm:$0xff] %vm223, %v219
  %225 = vst.msk [vmem:[%s4 + $0x8] sm:$0xff] %vm223, %v220
  %226 = vst.msk [vmem:[%s4 + $0x10] sm:$0xff] %vm223, %v221
  %227 = vst.msk [vmem:[%s4 + $0x18] sm:$0xff] %vm223, %v222
  // Predicated region
  $region18: #{retrain_autodeeplab2_forward.13} parent=0 // pred_check
    _
  $region19: #{retrain_autodeeplab2_forward.13} parent=0 // pred_check_branch
    %229 = sbr.rel (0) target = $region21
  $region20: #{retrain_autodeeplab2_forward.13} parent=0 // pred_region
    _
  $region21: #{retrain_autodeeplab2_forward.13} parent=0 // pred_fallthru
    _
  // Predicated region
  $region22: #{retrain_autodeeplab2_forward.13} parent=0 // pred_check
    _
  $region23: #{retrain_autodeeplab2_forward.13} parent=0 // pred_check_branch
    %231 = sbr.rel (0) target = $region25
  $region24: #{retrain_autodeeplab2_forward.13} parent=0 // pred_region
    _
  $region25: #{retrain_autodeeplab2_forward.13} parent=0 // pred_fallthru
    _

// kernel: retrain_autodeeplab2_forward.12
$region0: #{retrain_autodeeplab2_forward.12}
  #allocation0 [shape = 'u32[]', space=smem, size = 0x4, offset = 0x4, fixed_abs, tag = 'smem constant byte address 0x4 - core index']
  #allocation1 [shape = 'u32[72,128]{1,0:T(1,128)}', space=vmem, size = 0x9000, scoped, tag = 'internal scratch']
  %s0 = inlined_call_operand.vmem [shape: bf16[32,2304], index: 0, kind: input, shape index: {}]
  %s1 = inlined_call_operand.vmem [shape: bf16[2304,256], index: 1, kind: input, shape index: {}]
  %s2 = inlined_call_operand.vmem [shape: f32[1,256], index: 2, kind: input, shape index: {}]
  %s3 = inlined_call_operand.vmem [shape: f32[1,256], index: 3, kind: input, shape index: {}]
  %s4 = inlined_call_operand.vmem [shape: bf16[32,256], index: 4, kind: output, shape index: {}]
  %s5 = sld [smem:[#allocation0]]
  $region26: #{retrain_autodeeplab2_forward.12} parent=0
    _
  %s7 = ssub.s32 1, %s5
  %s8 = scalar_select 0, %s7, %s5
  // Predicated region
  $region2: #{retrain_autodeeplab2_forward.12} parent=0 // pred_check
    _
  $region3: #{retrain_autodeeplab2_forward.12} parent=0 // pred_check_branch
    %10 = sbr.rel (0) target = $region5
  $region4: #{retrain_autodeeplab2_forward.12} parent=0 // pred_region
    _
  $region5: #{retrain_autodeeplab2_forward.12} parent=0 // pred_fallthru
    _
  // Predicated region
  $region6: #{retrain_autodeeplab2_forward.12} parent=0 // pred_check
    _
  $region7: #{retrain_autodeeplab2_forward.12} parent=0 // pred_check_branch
    %12 = sbr.rel (0) target = $region9
  $region8: #{retrain_autodeeplab2_forward.12} parent=0 // pred_region
    _
  $region9: #{retrain_autodeeplab2_forward.12} parent=0 // pred_fallthru
    _
  // Predicated region
  $region10: #{retrain_autodeeplab2_forward.12} parent=0 // pred_check
    _
  $region11: #{retrain_autodeeplab2_forward.12} parent=0 // pred_check_branch
    %14 = sbr.rel (0) target = $region13
  $region12: #{retrain_autodeeplab2_forward.12} parent=0 // pred_region
    _
  $region13: #{retrain_autodeeplab2_forward.12} parent=0 // pred_fallthru
    _
  // Predicated region
  $region14: #{retrain_autodeeplab2_forward.12} parent=0 // pred_check
    _
  $region15: #{retrain_autodeeplab2_forward.12} parent=0 // pred_check_branch
    %16 = sbr.rel (0) target = $region17
  $region16: #{retrain_autodeeplab2_forward.12} parent=0 // pred_region
    _
  $region17: #{retrain_autodeeplab2_forward.12} parent=0 // pred_fallthru
    _
  %v17 = vld [vmem:[%s0] sm:$0xff]
  %v18 = vld [vmem:[%s0 + $0x8] sm:$0xff]
  %v19 = vld [vmem:[%s0 + $0x10] sm:$0xff]
  %v20 = vld [vmem:[%s0 + $0x18] sm:$0xff]
  %v21 = vld [vmem:[%s0 + $0x20] sm:$0xff]
  %v22 = vld [vmem:[%s0 + $0x28] sm:$0xff]
  %v23 = vld [vmem:[%s0 + $0x30] sm:$0xff]
  %v24 = vld [vmem:[%s0 + $0x38] sm:$0xff]
  %v25 = vld [vmem:[%s0 + $0x40] sm:$0xff]
  %v26 = vld [vmem:[%s0 + $0x48] sm:$0xff]
  %v27 = vld [vmem:[%s0 + $0x50] sm:$0xff]
  %v28 = vld [vmem:[%s0 + $0x58] sm:$0xff]
  %v29 = vld [vmem:[%s0 + $0x60] sm:$0xff]
  %v30 = vld [vmem:[%s0 + $0x68] sm:$0xff]
  %v31 = vld [vmem:[%s0 + $0x70] sm:$0xff]
  %v32 = vld [vmem:[%s0 + $0x78] sm:$0xff]
  %v33 = vld [vmem:[%s0 + $0x80] sm:$0xff]
  %v34 = vld [vmem:[%s0 + $0x88] sm:$0xff]
  %v35 = vld [vmem:[%s0 + $0x90] sm:$0xff]
  %v36 = vld [vmem:[%s0 + $0x98] sm:$0xff]
  %v37 = vld [vmem:[%s0 + $0xa0] sm:$0xff]
  %v38 = vld [vmem:[%s0 + $0xa8] sm:$0xff]
  %v39 = vld [vmem:[%s0 + $0xb0] sm:$0xff]
  %v40 = vld [vmem:[%s0 + $0xb8] sm:$0xff]
  %v41 = vld [vmem:[%s0 + $0xc0] sm:$0xff]
  %v42 = vld [vmem:[%s0 + $0xc8] sm:$0xff]
  %v43 = vld [vmem:[%s0 + $0xd0] sm:$0xff]
  %v44 = vld [vmem:[%s0 + $0xd8] sm:$0xff]
  %v45 = vld [vmem:[%s0 + $0xe0] sm:$0xff]
  %v46 = vld [vmem:[%s0 + $0xe8] sm:$0xff]
  %v47 = vld [vmem:[%s0 + $0xf0] sm:$0xff]
  %v48 = vld [vmem:[%s0 + $0xf8] sm:$0xff]
  %v49 = vld [vmem:[%s0 + $0x100] sm:$0xff]
  %v50 = vld [vmem:[%s0 + $0x108] sm:$0xff]
  %v51 = vld [vmem:[%s0 + $0x110] sm:$0xff]
  %v52 = vld [vmem:[%s0 + $0x118] sm:$0xff]
  %v53 = vld [vmem:[%s1] sm:$0xff]
  %v54 = vld [vmem:[%s1 + $0x8] sm:$0xff]
  %v55 = vld [vmem:[%s1 + $0x10] sm:$0xff]
  %v56 = vld [vmem:[%s1 + $0x18] sm:$0xff]
  %v57 = vld [vmem:[%s1 + $0x20] sm:$0xff]
  %v58 = vld [vmem:[%s1 + $0x28] sm:$0xff]
  %v59 = vld [vmem:[%s1 + $0x30] sm:$0xff]
  %v60 = vld [vmem:[%s1 + $0x38] sm:$0xff]
  %v61 = vld [vmem:[%s1 + $0x40] sm:$0xff]
  %v62 = vld [vmem:[%s1 + $0x48] sm:$0xff]
  %v63 = vld [vmem:[%s1 + $0x50] sm:$0xff]
  %v64 = vld [vmem:[%s1 + $0x58] sm:$0xff]
  %v65 = vld [vmem:[%s1 + $0x60] sm:$0xff]
  %v66 = vld [vmem:[%s1 + $0x68] sm:$0xff]
  %v67 = vld [vmem:[%s1 + $0x70] sm:$0xff]
  %v68 = vld [vmem:[%s1 + $0x78] sm:$0xff]
  %v69 = vld [vmem:[%s1 + $0x80] sm:$0xff]
  %v70 = vld [vmem:[%s1 + $0x88] sm:$0xff]
  %v71 = vld [vmem:[%s1 + $0x90] sm:$0xff]
  %v72 = vld [vmem:[%s1 + $0x98] sm:$0xff]
  %v73 = vld [vmem:[%s1 + $0xa0] sm:$0xff]
  %v74 = vld [vmem:[%s1 + $0xa8] sm:$0xff]
  %v75 = vld [vmem:[%s1 + $0xb0] sm:$0xff]
  %v76 = vld [vmem:[%s1 + $0xb8] sm:$0xff]
  %v77 = vld [vmem:[%s1 + $0xc0] sm:$0xff]
  %v78 = vld [vmem:[%s1 + $0xc8] sm:$0xff]
  %v79 = vld [vmem:[%s1 + $0xd0] sm:$0xff]
  %v80 = vld [vmem:[%s1 + $0xd8] sm:$0xff]
  %v81 = vld [vmem:[%s1 + $0xe0] sm:$0xff]
  %v82 = vld [vmem:[%s1 + $0xe8] sm:$0xff]
  %v83 = vld [vmem:[%s1 + $0xf0] sm:$0xff]
  %v84 = vld [vmem:[%s1 + $0xf8] sm:$0xff]
  %v85 = vld [vmem:[%s1 + $0x100] sm:$0xff]
  %v86 = vld [vmem:[%s1 + $0x108] sm:$0xff]
  %v87 = vld [vmem:[%s1 + $0x110] sm:$0xff]
  %v88 = vld [vmem:[%s1 + $0x118] sm:$0xff]
  %v89 = vld [vmem:[%s1 + $0x120] sm:$0xff]
  %v90 = vld [vmem:[%s1 + $0x128] sm:$0xff]
  %v91 = vld [vmem:[%s1 + $0x130] sm:$0xff]
  %v92 = vld [vmem:[%s1 + $0x138] sm:$0xff]
  %v93 = vld [vmem:[%s1 + $0x140] sm:$0xff]
  %v94 = vld [vmem:[%s1 + $0x148] sm:$0xff]
  %v95 = vld [vmem:[%s1 + $0x150] sm:$0xff]
  %v96 = vld [vmem:[%s1 + $0x158] sm:$0xff]
  %v97 = vld [vmem:[%s1 + $0x160] sm:$0xff]
  %v98 = vld [vmem:[%s1 + $0x168] sm:$0xff]
  %v99 = vld [vmem:[%s1 + $0x170] sm:$0xff]
  %v100 = vld [vmem:[%s1 + $0x178] sm:$0xff]
  %v101 = vld [vmem:[%s1 + $0x180] sm:$0xff]
  %v102 = vld [vmem:[%s1 + $0x188] sm:$0xff]
  %v103 = vld [vmem:[%s1 + $0x190] sm:$0xff]
  %v104 = vld [vmem:[%s1 + $0x198] sm:$0xff]
  %v105 = vld [vmem:[%s1 + $0x1a0] sm:$0xff]
  %v106 = vld [vmem:[%s1 + $0x1a8] sm:$0xff]
  %v107 = vld [vmem:[%s1 + $0x1b0] sm:$0xff]
  %v108 = vld [vmem:[%s1 + $0x1b8] sm:$0xff]
  %v109 = vld [vmem:[%s1 + $0x1c0] sm:$0xff]
  %v110 = vld [vmem:[%s1 + $0x1c8] sm:$0xff]
  %v111 = vld [vmem:[%s1 + $0x1d0] sm:$0xff]
  %v112 = vld [vmem:[%s1 + $0x1d8] sm:$0xff]
  %v113 = vld [vmem:[%s1 + $0x1e0] sm:$0xff]
  %v114 = vld [vmem:[%s1 + $0x1e8] sm:$0xff]
  %v115 = vld [vmem:[%s1 + $0x1f0] sm:$0xff]
  %v116 = vld [vmem:[%s1 + $0x1f8] sm:$0xff]
  %v117 = vld [vmem:[%s1 + $0x200] sm:$0xff]
  %v118 = vld [vmem:[%s1 + $0x208] sm:$0xff]
  %v119 = vld [vmem:[%s1 + $0x210] sm:$0xff]
  %v120 = vld [vmem:[%s1 + $0x218] sm:$0xff]
  %v121 = vld [vmem:[%s1 + $0x220] sm:$0xff]
  %v122 = vld [vmem:[%s1 + $0x228] sm:$0xff]
  %v123 = vld [vmem:[%s1 + $0x230] sm:$0xff]
  %v124 = vld [vmem:[%s1 + $0x238] sm:$0xff]
  %v125 = vld [vmem:[%s1 + $0x240] sm:$0xff]
  %v126 = vld [vmem:[%s1 + $0x248] sm:$0xff]
  %v127 = vld [vmem:[%s1 + $0x250] sm:$0xff]
  %v128 = vld [vmem:[%s1 + $0x258] sm:$0xff]
  %v129 = vld [vmem:[%s1 + $0x260] sm:$0xff]
  %v130 = vld [vmem:[%s1 + $0x268] sm:$0xff]
  %v131 = vld [vmem:[%s1 + $0x270] sm:$0xff]
  %v132 = vld [vmem:[%s1 + $0x278] sm:$0xff]
  %v133 = vld [vmem:[%s1 + $0x280] sm:$0xff]
  %v134 = vld [vmem:[%s1 + $0x288] sm:$0xff]
  %v135 = vld [vmem:[%s1 + $0x290] sm:$0xff]
  %v136 = vld [vmem:[%s1 + $0x298] sm:$0xff]
  %v137 = vld [vmem:[%s1 + $0x2a0] sm:$0xff]
  %v138 = vld [vmem:[%s1 + $0x2a8] sm:$0xff]
  %v139 = vld [vmem:[%s1 + $0x2b0] sm:$0xff]
  %v140 = vld [vmem:[%s1 + $0x2b8] sm:$0xff]
  %v141 = vld [vmem:[%s1 + $0x2c0] sm:$0xff]
  %v142 = vld [vmem:[%s1 + $0x2c8] sm:$0xff]
  %v143 = vld [vmem:[%s1 + $0x2d0] sm:$0xff]
  %v144 = vld [vmem:[%s1 + $0x2d8] sm:$0xff]
  %v145 = vld [vmem:[%s1 + $0x2e0] sm:$0xff]
  %v146 = vld [vmem:[%s1 + $0x2e8] sm:$0xff]
  %v147 = vld [vmem:[%s1 + $0x2f0] sm:$0xff]
  %v148 = vld [vmem:[%s1 + $0x2f8] sm:$0xff]
  %v149 = vld [vmem:[%s1 + $0x300] sm:$0xff]
  %v150 = vld [vmem:[%s1 + $0x308] sm:$0xff]
  %v151 = vld [vmem:[%s1 + $0x310] sm:$0xff]
  %v152 = vld [vmem:[%s1 + $0x318] sm:$0xff]
  %v153 = vld [vmem:[%s1 + $0x320] sm:$0xff]
  %v154 = vld [vmem:[%s1 + $0x328] sm:$0xff]
  %v155 = vld [vmem:[%s1 + $0x330] sm:$0xff]
  %v156 = vld [vmem:[%s1 + $0x338] sm:$0xff]
  %v157 = vld [vmem:[%s1 + $0x340] sm:$0xff]
  %v158 = vld [vmem:[%s1 + $0x348] sm:$0xff]
  %v159 = vld [vmem:[%s1 + $0x350] sm:$0xff]
  %v160 = vld [vmem:[%s1 + $0x358] sm:$0xff]
  %v161 = vld [vmem:[%s1 + $0x360] sm:$0xff]
  %v162 = vld [vmem:[%s1 + $0x368] sm:$0xff]
  %v163 = vld [vmem:[%s1 + $0x370] sm:$0xff]
  %v164 = vld [vmem:[%s1 + $0x378] sm:$0xff]
  %v165 = vld [vmem:[%s1 + $0x380] sm:$0xff]
  %v166 = vld [vmem:[%s1 + $0x388] sm:$0xff]
  %v167 = vld [vmem:[%s1 + $0x390] sm:$0xff]
  %v168 = vld [vmem:[%s1 + $0x398] sm:$0xff]
  %v169 = vld [vmem:[%s1 + $0x3a0] sm:$0xff]
  %v170 = vld [vmem:[%s1 + $0x3a8] sm:$0xff]
  %v171 = vld [vmem:[%s1 + $0x3b0] sm:$0xff]
  %v172 = vld [vmem:[%s1 + $0x3b8] sm:$0xff]
  %v173 = vld [vmem:[%s1 + $0x3c0] sm:$0xff]
  %v174 = vld [vmem:[%s1 + $0x3c8] sm:$0xff]
  %v175 = vld [vmem:[%s1 + $0x3d0] sm:$0xff]
  %v176 = vld [vmem:[%s1 + $0x3d8] sm:$0xff]
  %v177 = vld [vmem:[%s1 + $0x3e0] sm:$0xff]
  %v178 = vld [vmem:[%s1 + $0x3e8] sm:$0xff]
  %v179 = vld [vmem:[%s1 + $0x3f0] sm:$0xff]
  %v180 = vld [vmem:[%s1 + $0x3f8] sm:$0xff]
  %v181 = vld [vmem:[%s1 + $0x400] sm:$0xff]
  %v182 = vld [vmem:[%s1 + $0x408] sm:$0xff]
  %v183 = vld [vmem:[%s1 + $0x410] sm:$0xff]
  %v184 = vld [vmem:[%s1 + $0x418] sm:$0xff]
  %v185 = vld [vmem:[%s1 + $0x420] sm:$0xff]
  %v186 = vld [vmem:[%s1 + $0x428] sm:$0xff]
  %v187 = vld [vmem:[%s1 + $0x430] sm:$0xff]
  %v188 = vld [vmem:[%s1 + $0x438] sm:$0xff]
  %v189 = vld [vmem:[%s1 + $0x440] sm:$0xff]
  %v190 = vld [vmem:[%s1 + $0x448] sm:$0xff]
  %v191 = vld [vmem:[%s1 + $0x450] sm:$0xff]
  %v192 = vld [vmem:[%s1 + $0x458] sm:$0xff]
  %v193 = vld [vmem:[%s1 + $0x460] sm:$0xff]
  %v194 = vld [vmem:[%s1 + $0x468] sm:$0xff]
  %v195 = vld [vmem:[%s1 + $0x470] sm:$0xff]
  %v196 = vld [vmem:[%s1 + $0x478] sm:$0xff]
  %v197 = vld [vmem:[%s1 + $0x480] sm:$0xff]
  %v198 = vld [vmem:[%s1 + $0x488] sm:$0xff]
  %v199 = vld [vmem:[%s1 + $0x490] sm:$0xff]
  %v200 = vld [vmem:[%s1 + $0x498] sm:$0xff]
  %v201 = vld [vmem:[%s1 + $0x4a0] sm:$0xff]
  %v202 = vld [vmem:[%s1 + $0x4a8] sm:$0xff]
  %v203 = vld [vmem:[%s1 + $0x4b0] sm:$0xff]
  %v204 = vld [vmem:[%s1 + $0x4b8] sm:$0xff]
  %v205 = vld [vmem:[%s1 + $0x4c0] sm:$0xff]
  %v206 = vld [vmem:[%s1 + $0x4c8] sm:$0xff]
  %v207 = vld [vmem:[%s1 + $0x4d0] sm:$0xff]
  %v208 = vld [vmem:[%s1 + $0x4d8] sm:$0xff]
  %v209 = vld [vmem:[%s1 + $0x4e0] sm:$0xff]
  %v210 = vld [vmem:[%s1 + $0x4e8] sm:$0xff]
  %v211 = vld [vmem:[%s1 + $0x4f0] sm:$0xff]
  %v212 = vld [vmem:[%s1 + $0x4f8] sm:$0xff]
  %v213 = vld [vmem:[%s1 + $0x500] sm:$0xff]
  %v214 = vld [vmem:[%s1 + $0x508] sm:$0xff]
  %v215 = vld [vmem:[%s1 + $0x510] sm:$0xff]
  %v216 = vld [vmem:[%s1 + $0x518] sm:$0xff]
  %v217 = vld [vmem:[%s1 + $0x520] sm:$0xff]
  %v218 = vld [vmem:[%s1 + $0x528] sm:$0xff]
  %v219 = vld [vmem:[%s1 + $0x530] sm:$0xff]
  %v220 = vld [vmem:[%s1 + $0x538] sm:$0xff]
  %v221 = vld [vmem:[%s1 + $0x540] sm:$0xff]
  %v222 = vld [vmem:[%s1 + $0x548] sm:$0xff]
  %v223 = vld [vmem:[%s1 + $0x550] sm:$0xff]
  %v224 = vld [vmem:[%s1 + $0x558] sm:$0xff]
  %v225 = vld [vmem:[%s1 + $0x560] sm:$0xff]
  %v226 = vld [vmem:[%s1 + $0x568] sm:$0xff]
  %v227 = vld [vmem:[%s1 + $0x570] sm:$0xff]
  %v228 = vld [vmem:[%s1 + $0x578] sm:$0xff]
  %v229 = vld [vmem:[%s1 + $0x580] sm:$0xff]
  %v230 = vld [vmem:[%s1 + $0x588] sm:$0xff]
  %v231 = vld [vmem:[%s1 + $0x590] sm:$0xff]
  %v232 = vld [vmem:[%s1 + $0x598] sm:$0xff]
  %v233 = vld [vmem:[%s1 + $0x5a0] sm:$0xff]
  %v234 = vld [vmem:[%s1 + $0x5a8] sm:$0xff]
  %v235 = vld [vmem:[%s1 + $0x5b0] sm:$0xff]
  %v236 = vld [vmem:[%s1 + $0x5b8] sm:$0xff]
  %v237 = vld [vmem:[%s1 + $0x5c0] sm:$0xff]
  %v238 = vld [vmem:[%s1 + $0x5c8] sm:$0xff]
  %v239 = vld [vmem:[%s1 + $0x5d0] sm:$0xff]
  %v240 = vld [vmem:[%s1 + $0x5d8] sm:$0xff]
  %v241 = vld [vmem:[%s1 + $0x5e0] sm:$0xff]
  %v242 = vld [vmem:[%s1 + $0x5e8] sm:$0xff]
  %v243 = vld [vmem:[%s1 + $0x5f0] sm:$0xff]
  %v244 = vld [vmem:[%s1 + $0x5f8] sm:$0xff]
  %v245 = vld [vmem:[%s1 + $0x600] sm:$0xff]
  %v246 = vld [vmem:[%s1 + $0x608] sm:$0xff]
  %v247 = vld [vmem:[%s1 + $0x610] sm:$0xff]
  %v248 = vld [vmem:[%s1 + $0x618] sm:$0xff]
  %v249 = vld [vmem:[%s1 + $0x620] sm:$0xff]
  %v250 = vld [vmem:[%s1 + $0x628] sm:$0xff]
  %v251 = vld [vmem:[%s1 + $0x630] sm:$0xff]
  %v252 = vld [vmem:[%s1 + $0x638] sm:$0xff]
  %v253 = vld [vmem:[%s1 + $0x640] sm:$0xff]
  %v254 = vld [vmem:[%s1 + $0x648] sm:$0xff]
  %v255 = vld [vmem:[%s1 + $0x650] sm:$0xff]
  %v256 = vld [vmem:[%s1 + $0x658] sm:$0xff]
  %v257 = vld [vmem:[%s1 + $0x660] sm:$0xff]
  %v258 = vld [vmem:[%s1 + $0x668] sm:$0xff]
  %v259 = vld [vmem:[%s1 + $0x670] sm:$0xff]
  %v260 = vld [vmem:[%s1 + $0x678] sm:$0xff]
  %v261 = vld [vmem:[%s1 + $0x680] sm:$0xff]
  %v262 = vld [vmem:[%s1 + $0x688] sm:$0xff]
  %v263 = vld [vmem:[%s1 + $0x690] sm:$0xff]
  %v264 = vld [vmem:[%s1 + $0x698] sm:$0xff]
  %v265 = vld [vmem:[%s1 + $0x6a0] sm:$0xff]
  %v266 = vld [vmem:[%s1 + $0x6a8] sm:$0xff]
  %v267 = vld [vmem:[%s1 + $0x6b0] sm:$0xff]
  %v268 = vld [vmem:[%s1 + $0x6b8] sm:$0xff]
  %v269 = vld [vmem:[%s1 + $0x6c0] sm:$0xff]
  %v270 = vld [vmem:[%s1 + $0x6c8] sm:$0xff]
  %v271 = vld [vmem:[%s1 + $0x6d0] sm:$0xff]
  %v272 = vld [vmem:[%s1 + $0x6d8] sm:$0xff]
  %v273 = vld [vmem:[%s1 + $0x6e0] sm:$0xff]
  %v274 = vld [vmem:[%s1 + $0x6e8] sm:$0xff]
  %v275 = vld [vmem:[%s1 + $0x6f0] sm:$0xff]
  %v276 = vld [vmem:[%s1 + $0x6f8] sm:$0xff]
  %v277 = vld [vmem:[%s1 + $0x700] sm:$0xff]
  %v278 = vld [vmem:[%s1 + $0x708] sm:$0xff]
  %v279 = vld [vmem:[%s1 + $0x710] sm:$0xff]
  %v280 = vld [vmem:[%s1 + $0x718] sm:$0xff]
  %v281 = vld [vmem:[%s1 + $0x720] sm:$0xff]
  %v282 = vld [vmem:[%s1 + $0x728] sm:$0xff]
  %v283 = vld [vmem:[%s1 + $0x730] sm:$0xff]
  %v284 = vld [vmem:[%s1 + $0x738] sm:$0xff]
  %v285 = vld [vmem:[%s1 + $0x740] sm:$0xff]
  %v286 = vld [vmem:[%s1 + $0x748] sm:$0xff]
  %v287 = vld [vmem:[%s1 + $0x750] sm:$0xff]
  %v288 = vld [vmem:[%s1 + $0x758] sm:$0xff]
  %v289 = vld [vmem:[%s1 + $0x760] sm:$0xff]
  %v290 = vld [vmem:[%s1 + $0x768] sm:$0xff]
  %v291 = vld [vmem:[%s1 + $0x770] sm:$0xff]
  %v292 = vld [vmem:[%s1 + $0x778] sm:$0xff]
  %v293 = vld [vmem:[%s1 + $0x780] sm:$0xff]
  %v294 = vld [vmem:[%s1 + $0x788] sm:$0xff]
  %v295 = vld [vmem:[%s1 + $0x790] sm:$0xff]
  %v296 = vld [vmem:[%s1 + $0x798] sm:$0xff]
  %v297 = vld [vmem:[%s1 + $0x7a0] sm:$0xff]
  %v298 = vld [vmem:[%s1 + $0x7a8] sm:$0xff]
  %v299 = vld [vmem:[%s1 + $0x7b0] sm:$0xff]
  %v300 = vld [vmem:[%s1 + $0x7b8] sm:$0xff]
  %v301 = vld [vmem:[%s1 + $0x7c0] sm:$0xff]
  %v302 = vld [vmem:[%s1 + $0x7c8] sm:$0xff]
  %v303 = vld [vmem:[%s1 + $0x7d0] sm:$0xff]
  %v304 = vld [vmem:[%s1 + $0x7d8] sm:$0xff]
  %v305 = vld [vmem:[%s1 + $0x7e0] sm:$0xff]
  %v306 = vld [vmem:[%s1 + $0x7e8] sm:$0xff]
  %v307 = vld [vmem:[%s1 + $0x7f0] sm:$0xff]
  %v308 = vld [vmem:[%s1 + $0x7f8] sm:$0xff]
  %v309 = vld [vmem:[%s1 + $0x800] sm:$0xff]
  %v310 = vld [vmem:[%s1 + $0x808] sm:$0xff]
  %v311 = vld [vmem:[%s1 + $0x810] sm:$0xff]
  %v312 = vld [vmem:[%s1 + $0x818] sm:$0xff]
  %v313 = vld [vmem:[%s1 + $0x820] sm:$0xff]
  %v314 = vld [vmem:[%s1 + $0x828] sm:$0xff]
  %v315 = vld [vmem:[%s1 + $0x830] sm:$0xff]
  %v316 = vld [vmem:[%s1 + $0x838] sm:$0xff]
  %v317 = vld [vmem:[%s1 + $0x840] sm:$0xff]
  %v318 = vld [vmem:[%s1 + $0x848] sm:$0xff]
  %v319 = vld [vmem:[%s1 + $0x850] sm:$0xff]
  %v320 = vld [vmem:[%s1 + $0x858] sm:$0xff]
  %v321 = vld [vmem:[%s1 + $0x860] sm:$0xff]
  %v322 = vld [vmem:[%s1 + $0x868] sm:$0xff]
  %v323 = vld [vmem:[%s1 + $0x870] sm:$0xff]
  %v324 = vld [vmem:[%s1 + $0x878] sm:$0xff]
  %v325 = vld [vmem:[%s1 + $0x880] sm:$0xff]
  %v326 = vld [vmem:[%s1 + $0x888] sm:$0xff]
  %v327 = vld [vmem:[%s1 + $0x890] sm:$0xff]
  %v328 = vld [vmem:[%s1 + $0x898] sm:$0xff]
  %v329 = vld [vmem:[%s1 + $0x8a0] sm:$0xff]
  %v330 = vld [vmem:[%s1 + $0x8a8] sm:$0xff]
  %v331 = vld [vmem:[%s1 + $0x8b0] sm:$0xff]
  %v332 = vld [vmem:[%s1 + $0x8b8] sm:$0xff]
  %v333 = vld [vmem:[%s1 + $0x8c0] sm:$0xff]
  %v334 = vld [vmem:[%s1 + $0x8c8] sm:$0xff]
  %v335 = vld [vmem:[%s1 + $0x8d0] sm:$0xff]
  %v336 = vld [vmem:[%s1 + $0x8d8] sm:$0xff]
  %v337 = vld [vmem:[%s1 + $0x8e0] sm:$0xff]
  %v338 = vld [vmem:[%s1 + $0x8e8] sm:$0xff]
  %v339 = vld [vmem:[%s1 + $0x8f0] sm:$0xff]
  %v340 = vld [vmem:[%s1 + $0x8f8] sm:$0xff]
  %v377 = vunpack.c.l.b16 %v17
  %v378 = vunpack.c.h.b16 %v17
  %v379 = vunpack.c.l.b16 %v18
  %v380 = vunpack.c.h.b16 %v18
  %v381 = vunpack.c.l.b16 %v19
  %v382 = vunpack.c.h.b16 %v19
  %v383 = vunpack.c.l.b16 %v20
  %v384 = vunpack.c.h.b16 %v20
  %v385 = vunpack.c.l.b16 %v21
  %v386 = vunpack.c.h.b16 %v21
  %v387 = vunpack.c.l.b16 %v22
  %v388 = vunpack.c.h.b16 %v22
  %v389 = vunpack.c.l.b16 %v23
  %v390 = vunpack.c.h.b16 %v23
  %v391 = vunpack.c.l.b16 %v24
  %v392 = vunpack.c.h.b16 %v24
  %v393 = vunpack.c.l.b16 %v25
  %v394 = vunpack.c.h.b16 %v25
  %v395 = vunpack.c.l.b16 %v26
  %v396 = vunpack.c.h.b16 %v26
  %v397 = vunpack.c.l.b16 %v27
  %v398 = vunpack.c.h.b16 %v27
  %v399 = vunpack.c.l.b16 %v28
  %v400 = vunpack.c.h.b16 %v28
  %v401 = vunpack.c.l.b16 %v29
  %v402 = vunpack.c.h.b16 %v29
  %v403 = vunpack.c.l.b16 %v30
  %v404 = vunpack.c.h.b16 %v30
  %v405 = vunpack.c.l.b16 %v31
  %v406 = vunpack.c.h.b16 %v31
  %v407 = vunpack.c.l.b16 %v32
  %v408 = vunpack.c.h.b16 %v32
  %v409 = vunpack.c.l.b16 %v33
  %v410 = vunpack.c.h.b16 %v33
  %v411 = vunpack.c.l.b16 %v34
  %v412 = vunpack.c.h.b16 %v34
  %v413 = vunpack.c.l.b16 %v35
  %v414 = vunpack.c.h.b16 %v35
  %v415 = vunpack.c.l.b16 %v36
  %v416 = vunpack.c.h.b16 %v36
  %v417 = vunpack.c.l.b16 %v37
  %v418 = vunpack.c.h.b16 %v37
  %v419 = vunpack.c.l.b16 %v38
  %v420 = vunpack.c.h.b16 %v38
  %v421 = vunpack.c.l.b16 %v39
  %v422 = vunpack.c.h.b16 %v39
  %v423 = vunpack.c.l.b16 %v40
  %v424 = vunpack.c.h.b16 %v40
  %v425 = vunpack.c.l.b16 %v41
  %v426 = vunpack.c.h.b16 %v41
  %v427 = vunpack.c.l.b16 %v42
  %v428 = vunpack.c.h.b16 %v42
  %v429 = vunpack.c.l.b16 %v43
  %v430 = vunpack.c.h.b16 %v43
  %v431 = vunpack.c.l.b16 %v44
  %v432 = vunpack.c.h.b16 %v44
  %v433 = vunpack.c.l.b16 %v45
  %v434 = vunpack.c.h.b16 %v45
  %v435 = vunpack.c.l.b16 %v46
  %v436 = vunpack.c.h.b16 %v46
  %v437 = vunpack.c.l.b16 %v47
  %v438 = vunpack.c.h.b16 %v47
  %v439 = vunpack.c.l.b16 %v48
  %v440 = vunpack.c.h.b16 %v48
  %v441 = vunpack.c.l.b16 %v49
  %v442 = vunpack.c.h.b16 %v49
  %v443 = vunpack.c.l.b16 %v50
  %v444 = vunpack.c.h.b16 %v50
  %v445 = vunpack.c.l.b16 %v51
  %v446 = vunpack.c.h.b16 %v51
  %v447 = vunpack.c.l.b16 %v52
  %v448 = vunpack.c.h.b16 %v52
  %v449 = vpack.c.b16 %v395, %v377
  %v450 = vpack.c.b16 %v396, %v378
  %v451 = vpack.c.b16 %v397, %v379
  %v452 = vpack.c.b16 %v398, %v380
  %v453 = vpack.c.b16 %v399, %v381
  %v454 = vpack.c.b16 %v400, %v382
  %v455 = vpack.c.b16 %v401, %v383
  %v456 = vpack.c.b16 %v402, %v384
  %v457 = vpack.c.b16 %v403, %v385
  %v458 = vpack.c.b16 %v404, %v386
  %v459 = vpack.c.b16 %v405, %v387
  %v460 = vpack.c.b16 %v406, %v388
  %v461 = vpack.c.b16 %v407, %v389
  %v462 = vpack.c.b16 %v408, %v390
  %v463 = vpack.c.b16 %v409, %v391
  %v464 = vpack.c.b16 %v410, %v392
  %v465 = vpack.c.b16 %v411, %v393
  %v466 = vpack.c.b16 %v412, %v394
  %v467 = vpack.c.b16 %v431, %v413
  %v468 = vpack.c.b16 %v432, %v414
  %v469 = vpack.c.b16 %v433, %v415
  %v470 = vpack.c.b16 %v434, %v416
  %v471 = vpack.c.b16 %v435, %v417
  %v472 = vpack.c.b16 %v436, %v418
  %v473 = vpack.c.b16 %v437, %v419
  %v474 = vpack.c.b16 %v438, %v420
  %v475 = vpack.c.b16 %v439, %v421
  %v476 = vpack.c.b16 %v440, %v422
  %v477 = vpack.c.b16 %v441, %v423
  %v478 = vpack.c.b16 %v442, %v424
  %v479 = vpack.c.b16 %v443, %v425
  %v480 = vpack.c.b16 %v444, %v426
  %v481 = vpack.c.b16 %v445, %v427
  %v482 = vpack.c.b16 %v446, %v428
  %v483 = vpack.c.b16 %v447, %v429
  %v484 = vpack.c.b16 %v448, %v430
  %v809 = vunpack.c.l.b16 %v53
  %v810 = vunpack.c.h.b16 %v53
  %v811 = vunpack.c.l.b16 %v54
  %v812 = vunpack.c.h.b16 %v54
  %v813 = vunpack.c.l.b16 %v55
  %v814 = vunpack.c.h.b16 %v55
  %v815 = vunpack.c.l.b16 %v56
  %v816 = vunpack.c.h.b16 %v56
  %v817 = vunpack.c.l.b16 %v57
  %v818 = vunpack.c.h.b16 %v57
  %v819 = vunpack.c.l.b16 %v58
  %v820 = vunpack.c.h.b16 %v58
  %v821 = vunpack.c.l.b16 %v59
  %v822 = vunpack.c.h.b16 %v59
  %v823 = vunpack.c.l.b16 %v60
  %v824 = vunpack.c.h.b16 %v60
  %v825 = vunpack.c.l.b16 %v61
  %v826 = vunpack.c.h.b16 %v61
  %v827 = vunpack.c.l.b16 %v62
  %v828 = vunpack.c.h.b16 %v62
  %v829 = vunpack.c.l.b16 %v63
  %v830 = vunpack.c.h.b16 %v63
  %v831 = vunpack.c.l.b16 %v64
  %v832 = vunpack.c.h.b16 %v64
  %v833 = vunpack.c.l.b16 %v65
  %v834 = vunpack.c.h.b16 %v65
  %v835 = vunpack.c.l.b16 %v66
  %v836 = vunpack.c.h.b16 %v66
  %v837 = vunpack.c.l.b16 %v67
  %v838 = vunpack.c.h.b16 %v67
  %v839 = vunpack.c.l.b16 %v68
  %v840 = vunpack.c.h.b16 %v68
  %v841 = vunpack.c.l.b16 %v69
  %v842 = vunpack.c.h.b16 %v69
  %v843 = vunpack.c.l.b16 %v70
  %v844 = vunpack.c.h.b16 %v70
  %v845 = vunpack.c.l.b16 %v71
  %v846 = vunpack.c.h.b16 %v71
  %v847 = vunpack.c.l.b16 %v72
  %v848 = vunpack.c.h.b16 %v72
  %v849 = vunpack.c.l.b16 %v73
  %v850 = vunpack.c.h.b16 %v73
  %v851 = vunpack.c.l.b16 %v74
  %v852 = vunpack.c.h.b16 %v74
  %v853 = vunpack.c.l.b16 %v75
  %v854 = vunpack.c.h.b16 %v75
  %v855 = vunpack.c.l.b16 %v76
  %v856 = vunpack.c.h.b16 %v76
  %v857 = vunpack.c.l.b16 %v77
  %v858 = vunpack.c.h.b16 %v77
  %v859 = vunpack.c.l.b16 %v78
  %v860 = vunpack.c.h.b16 %v78
  %v861 = vunpack.c.l.b16 %v79
  %v862 = vunpack.c.h.b16 %v79
  %v863 = vunpack.c.l.b16 %v80
  %v864 = vunpack.c.h.b16 %v80
  %v865 = vunpack.c.l.b16 %v81
  %v866 = vunpack.c.h.b16 %v81
  %v867 = vunpack.c.l.b16 %v82
  %v868 = vunpack.c.h.b16 %v82
  %v869 = vunpack.c.l.b16 %v83
  %v870 = vunpack.c.h.b16 %v83
  %v871 = vunpack.c.l.b16 %v84
  %v872 = vunpack.c.h.b16 %v84
  %v873 = vunpack.c.l.b16 %v85
  %v874 = vunpack.c.h.b16 %v85
  %v875 = vunpack.c.l.b16 %v86
  %v876 = vunpack.c.h.b16 %v86
  %v877 = vunpack.c.l.b16 %v87
  %v878 = vunpack.c.h.b16 %v87
  %v879 = vunpack.c.l.b16 %v88
  %v880 = vunpack.c.h.b16 %v88
  %v881 = vunpack.c.l.b16 %v89
  %v882 = vunpack.c.h.b16 %v89
  %v883 = vunpack.c.l.b16 %v90
  %v884 = vunpack.c.h.b16 %v90
  %v885 = vunpack.c.l.b16 %v91
  %v886 = vunpack.c.h.b16 %v91
  %v887 = vunpack.c.l.b16 %v92
  %v888 = vunpack.c.h.b16 %v92
  %v889 = vunpack.c.l.b16 %v93
  %v890 = vunpack.c.h.b16 %v93
  %v891 = vunpack.c.l.b16 %v94
  %v892 = vunpack.c.h.b16 %v94
  %v893 = vunpack.c.l.b16 %v95
  %v894 = vunpack.c.h.b16 %v95
  %v895 = vunpack.c.l.b16 %v96
  %v896 = vunpack.c.h.b16 %v96
  %v897 = vunpack.c.l.b16 %v97
  %v898 = vunpack.c.h.b16 %v97
  %v899 = vunpack.c.l.b16 %v98
  %v900 = vunpack.c.h.b16 %v98
  %v901 = vunpack.c.l.b16 %v99
  %v902 = vunpack.c.h.b16 %v99
  %v903 = vunpack.c.l.b16 %v100
  %v904 = vunpack.c.h.b16 %v100
  %v905 = vunpack.c.l.b16 %v101
  %v906 = vunpack.c.h.b16 %v101
  %v907 = vunpack.c.l.b16 %v102
  %v908 = vunpack.c.h.b16 %v102
  %v909 = vunpack.c.l.b16 %v103
  %v910 = vunpack.c.h.b16 %v103
  %v911 = vunpack.c.l.b16 %v104
  %v912 = vunpack.c.h.b16 %v104
  %v913 = vunpack.c.l.b16 %v105
  %v914 = vunpack.c.h.b16 %v105
  %v915 = vunpack.c.l.b16 %v106
  %v916 = vunpack.c.h.b16 %v106
  %v917 = vunpack.c.l.b16 %v107
  %v918 = vunpack.c.h.b16 %v107
  %v919 = vunpack.c.l.b16 %v108
  %v920 = vunpack.c.h.b16 %v108
  %v921 = vunpack.c.l.b16 %v109
  %v922 = vunpack.c.h.b16 %v109
  %v923 = vunpack.c.l.b16 %v110
  %v924 = vunpack.c.h.b16 %v110
  %v925 = vunpack.c.l.b16 %v111
  %v926 = vunpack.c.h.b16 %v111
  %v927 = vunpack.c.l.b16 %v112
  %v928 = vunpack.c.h.b16 %v112
  %v929 = vunpack.c.l.b16 %v113
  %v930 = vunpack.c.h.b16 %v113
  %v931 = vunpack.c.l.b16 %v114
  %v932 = vunpack.c.h.b16 %v114
  %v933 = vunpack.c.l.b16 %v115
  %v934 = vunpack.c.h.b16 %v115
  %v935 = vunpack.c.l.b16 %v116
  %v936 = vunpack.c.h.b16 %v116
  %v937 = vunpack.c.l.b16 %v117
  %v938 = vunpack.c.h.b16 %v117
  %v939 = vunpack.c.l.b16 %v118
  %v940 = vunpack.c.h.b16 %v118
  %v941 = vunpack.c.l.b16 %v119
  %v942 = vunpack.c.h.b16 %v119
  %v943 = vunpack.c.l.b16 %v120
  %v944 = vunpack.c.h.b16 %v120
  %v945 = vunpack.c.l.b16 %v121
  %v946 = vunpack.c.h.b16 %v121
  %v947 = vunpack.c.l.b16 %v122
  %v948 = vunpack.c.h.b16 %v122
  %v949 = vunpack.c.l.b16 %v123
  %v950 = vunpack.c.h.b16 %v123
  %v951 = vunpack.c.l.b16 %v124
  %v952 = vunpack.c.h.b16 %v124
  %v953 = vunpack.c.l.b16 %v125
  %v954 = vunpack.c.h.b16 %v125
  %v955 = vunpack.c.l.b16 %v126
  %v956 = vunpack.c.h.b16 %v126
  %v957 = vunpack.c.l.b16 %v127
  %v958 = vunpack.c.h.b16 %v127
  %v959 = vunpack.c.l.b16 %v128
  %v960 = vunpack.c.h.b16 %v128
  %v961 = vunpack.c.l.b16 %v129
  %v962 = vunpack.c.h.b16 %v129
  %v963 = vunpack.c.l.b16 %v130
  %v964 = vunpack.c.h.b16 %v130
  %v965 = vunpack.c.l.b16 %v131
  %v966 = vunpack.c.h.b16 %v131
  %v967 = vunpack.c.l.b16 %v132
  %v968 = vunpack.c.h.b16 %v132
  %v969 = vunpack.c.l.b16 %v133
  %v970 = vunpack.c.h.b16 %v133
  %v971 = vunpack.c.l.b16 %v134
  %v972 = vunpack.c.h.b16 %v134
  %v973 = vunpack.c.l.b16 %v135
  %v974 = vunpack.c.h.b16 %v135
  %v975 = vunpack.c.l.b16 %v136
  %v976 = vunpack.c.h.b16 %v136
  %v977 = vunpack.c.l.b16 %v137
  %v978 = vunpack.c.h.b16 %v137
  %v979 = vunpack.c.l.b16 %v138
  %v980 = vunpack.c.h.b16 %v138
  %v981 = vunpack.c.l.b16 %v139
  %v982 = vunpack.c.h.b16 %v139
  %v983 = vunpack.c.l.b16 %v140
  %v984 = vunpack.c.h.b16 %v140
  %v985 = vunpack.c.l.b16 %v141
  %v986 = vunpack.c.h.b16 %v141
  %v987 = vunpack.c.l.b16 %v142
  %v988 = vunpack.c.h.b16 %v142
  %v989 = vunpack.c.l.b16 %v143
  %v990 = vunpack.c.h.b16 %v143
  %v991 = vunpack.c.l.b16 %v144
  %v992 = vunpack.c.h.b16 %v144
  %v993 = vunpack.c.l.b16 %v145
  %v994 = vunpack.c.h.b16 %v145
  %v995 = vunpack.c.l.b16 %v146
  %v996 = vunpack.c.h.b16 %v146
  %v997 = vunpack.c.l.b16 %v147
  %v998 = vunpack.c.h.b16 %v147
  %v999 = vunpack.c.l.b16 %v148
  %v1000 = vunpack.c.h.b16 %v148
  %v1001 = vunpack.c.l.b16 %v149
  %v1002 = vunpack.c.h.b16 %v149
  %v1003 = vunpack.c.l.b16 %v150
  %v1004 = vunpack.c.h.b16 %v150
  %v1005 = vunpack.c.l.b16 %v151
  %v1006 = vunpack.c.h.b16 %v151
  %v1007 = vunpack.c.l.b16 %v152
  %v1008 = vunpack.c.h.b16 %v152
  %v1009 = vunpack.c.l.b16 %v153
  %v1010 = vunpack.c.h.b16 %v153
  %v1011 = vunpack.c.l.b16 %v154
  %v1012 = vunpack.c.h.b16 %v154
  %v1013 = vunpack.c.l.b16 %v155
  %v1014 = vunpack.c.h.b16 %v155
  %v1015 = vunpack.c.l.b16 %v156
  %v1016 = vunpack.c.h.b16 %v156
  %v1017 = vunpack.c.l.b16 %v157
  %v1018 = vunpack.c.h.b16 %v157
  %v1019 = vunpack.c.l.b16 %v158
  %v1020 = vunpack.c.h.b16 %v158
  %v1021 = vunpack.c.l.b16 %v159
  %v1022 = vunpack.c.h.b16 %v159
  %v1023 = vunpack.c.l.b16 %v160
  %v1024 = vunpack.c.h.b16 %v160
  %v1025 = vunpack.c.l.b16 %v161
  %v1026 = vunpack.c.h.b16 %v161
  %v1027 = vunpack.c.l.b16 %v162
  %v1028 = vunpack.c.h.b16 %v162
  %v1029 = vunpack.c.l.b16 %v163
  %v1030 = vunpack.c.h.b16 %v163
  %v1031 = vunpack.c.l.b16 %v164
  %v1032 = vunpack.c.h.b16 %v164
  %v1033 = vunpack.c.l.b16 %v165
  %v1034 = vunpack.c.h.b16 %v165
  %v1035 = vunpack.c.l.b16 %v166
  %v1036 = vunpack.c.h.b16 %v166
  %v1037 = vunpack.c.l.b16 %v167
  %v1038 = vunpack.c.h.b16 %v167
  %v1039 = vunpack.c.l.b16 %v168
  %v1040 = vunpack.c.h.b16 %v168
  %v1041 = vunpack.c.l.b16 %v169
  %v1042 = vunpack.c.h.b16 %v169
  %v1043 = vunpack.c.l.b16 %v170
  %v1044 = vunpack.c.h.b16 %v170
  %v1045 = vunpack.c.l.b16 %v171
  %v1046 = vunpack.c.h.b16 %v171
  %v1047 = vunpack.c.l.b16 %v172
  %v1048 = vunpack.c.h.b16 %v172
  %v1049 = vunpack.c.l.b16 %v173
  %v1050 = vunpack.c.h.b16 %v173
  %v1051 = vunpack.c.l.b16 %v174
  %v1052 = vunpack.c.h.b16 %v174
  %v1053 = vunpack.c.l.b16 %v175
  %v1054 = vunpack.c.h.b16 %v175
  %v1055 = vunpack.c.l.b16 %v176
  %v1056 = vunpack.c.h.b16 %v176
  %v1057 = vunpack.c.l.b16 %v177
  %v1058 = vunpack.c.h.b16 %v177
  %v1059 = vunpack.c.l.b16 %v178
  %v1060 = vunpack.c.h.b16 %v178
  %v1061 = vunpack.c.l.b16 %v179
  %v1062 = vunpack.c.h.b16 %v179
  %v1063 = vunpack.c.l.b16 %v180
  %v1064 = vunpack.c.h.b16 %v180
  %v1065 = vunpack.c.l.b16 %v181
  %v1066 = vunpack.c.h.b16 %v181
  %v1067 = vunpack.c.l.b16 %v182
  %v1068 = vunpack.c.h.b16 %v182
  %v1069 = vunpack.c.l.b16 %v183
  %v1070 = vunpack.c.h.b16 %v183
  %v1071 = vunpack.c.l.b16 %v184
  %v1072 = vunpack.c.h.b16 %v184
  %v1073 = vunpack.c.l.b16 %v185
  %v1074 = vunpack.c.h.b16 %v185
  %v1075 = vunpack.c.l.b16 %v186
  %v1076 = vunpack.c.h.b16 %v186
  %v1077 = vunpack.c.l.b16 %v187
  %v1078 = vunpack.c.h.b16 %v187
  %v1079 = vunpack.c.l.b16 %v188
  %v1080 = vunpack.c.h.b16 %v188
  %v1081 = vunpack.c.l.b16 %v189
  %v1082 = vunpack.c.h.b16 %v189
  %v1083 = vunpack.c.l.b16 %v190
  %v1084 = vunpack.c.h.b16 %v190
  %v1085 = vunpack.c.l.b16 %v191
  %v1086 = vunpack.c.h.b16 %v191
  %v1087 = vunpack.c.l.b16 %v192
  %v1088 = vunpack.c.h.b16 %v192
  %v1089 = vunpack.c.l.b16 %v193
  %v1090 = vunpack.c.h.b16 %v193
  %v1091 = vunpack.c.l.b16 %v194
  %v1092 = vunpack.c.h.b16 %v194
  %v1093 = vunpack.c.l.b16 %v195
  %v1094 = vunpack.c.h.b16 %v195
  %v1095 = vunpack.c.l.b16 %v196
  %v1096 = vunpack.c.h.b16 %v196
  %v1097 = vunpack.c.l.b16 %v197
  %v1098 = vunpack.c.h.b16 %v197
  %v1099 = vunpack.c.l.b16 %v198
  %v1100 = vunpack.c.h.b16 %v198
  %v1101 = vunpack.c.l.b16 %v199
  %v1102 = vunpack.c.h.b16 %v199
  %v1103 = vunpack.c.l.b16 %v200
  %v1104 = vunpack.c.h.b16 %v200
  %v1105 = vunpack.c.l.b16 %v201
  %v1106 = vunpack.c.h.b16 %v201
  %v1107 = vunpack.c.l.b16 %v202
  %v1108 = vunpack.c.h.b16 %v202
  %v1109 = vunpack.c.l.b16 %v203
  %v1110 = vunpack.c.h.b16 %v203
  %v1111 = vunpack.c.l.b16 %v204
  %v1112 = vunpack.c.h.b16 %v204
  %v1113 = vunpack.c.l.b16 %v205
  %v1114 = vunpack.c.h.b16 %v205
  %v1115 = vunpack.c.l.b16 %v206
  %v1116 = vunpack.c.h.b16 %v206
  %v1117 = vunpack.c.l.b16 %v207
  %v1118 = vunpack.c.h.b16 %v207
  %v1119 = vunpack.c.l.b16 %v208
  %v1120 = vunpack.c.h.b16 %v208
  %v1121 = vunpack.c.l.b16 %v209
  %v1122 = vunpack.c.h.b16 %v209
  %v1123 = vunpack.c.l.b16 %v210
  %v1124 = vunpack.c.h.b16 %v210
  %v1125 = vunpack.c.l.b16 %v211
  %v1126 = vunpack.c.h.b16 %v211
  %v1127 = vunpack.c.l.b16 %v212
  %v1128 = vunpack.c.h.b16 %v212
  %v1129 = vunpack.c.l.b16 %v213
  %v1130 = vunpack.c.h.b16 %v213
  %v1131 = vunpack.c.l.b16 %v214
  %v1132 = vunpack.c.h.b16 %v214
  %v1133 = vunpack.c.l.b16 %v215
  %v1134 = vunpack.c.h.b16 %v215
  %v1135 = vunpack.c.l.b16 %v216
  %v1136 = vunpack.c.h.b16 %v216
  %v1137 = vunpack.c.l.b16 %v217
  %v1138 = vunpack.c.h.b16 %v217
  %v1139 = vunpack.c.l.b16 %v218
  %v1140 = vunpack.c.h.b16 %v218
  %v1141 = vunpack.c.l.b16 %v219
  %v1142 = vunpack.c.h.b16 %v219
  %v1143 = vunpack.c.l.b16 %v220
  %v1144 = vunpack.c.h.b16 %v220
  %v1145 = vunpack.c.l.b16 %v221
  %v1146 = vunpack.c.h.b16 %v221
  %v1147 = vunpack.c.l.b16 %v222
  %v1148 = vunpack.c.h.b16 %v222
  %v1149 = vunpack.c.l.b16 %v223
  %v1150 = vunpack.c.h.b16 %v223
  %v1151 = vunpack.c.l.b16 %v224
  %v1152 = vunpack.c.h.b16 %v224
  %v1153 = vunpack.c.l.b16 %v225
  %v1154 = vunpack.c.h.b16 %v225
  %v1155 = vunpack.c.l.b16 %v226
  %v1156 = vunpack.c.h.b16 %v226
  %v1157 = vunpack.c.l.b16 %v227
  %v1158 = vunpack.c.h.b16 %v227
  %v1159 = vunpack.c.l.b16 %v228
  %v1160 = vunpack.c.h.b16 %v228
  %v1161 = vunpack.c.l.b16 %v229
  %v1162 = vunpack.c.h.b16 %v229
  %v1163 = vunpack.c.l.b16 %v230
  %v1164 = vunpack.c.h.b16 %v230
  %v1165 = vunpack.c.l.b16 %v231
  %v1166 = vunpack.c.h.b16 %v231
  %v1167 = vunpack.c.l.b16 %v232
  %v1168 = vunpack.c.h.b16 %v232
  %v1169 = vunpack.c.l.b16 %v233
  %v1170 = vunpack.c.h.b16 %v233
  %v1171 = vunpack.c.l.b16 %v234
  %v1172 = vunpack.c.h.b16 %v234
  %v1173 = vunpack.c.l.b16 %v235
  %v1174 = vunpack.c.h.b16 %v235
  %v1175 = vunpack.c.l.b16 %v236
  %v1176 = vunpack.c.h.b16 %v236
  %v1177 = vunpack.c.l.b16 %v237
  %v1178 = vunpack.c.h.b16 %v237
  %v1179 = vunpack.c.l.b16 %v238
  %v1180 = vunpack.c.h.b16 %v238
  %v1181 = vunpack.c.l.b16 %v239
  %v1182 = vunpack.c.h.b16 %v239
  %v1183 = vunpack.c.l.b16 %v240
  %v1184 = vunpack.c.h.b16 %v240
  %v1185 = vunpack.c.l.b16 %v241
  %v1186 = vunpack.c.h.b16 %v241
  %v1187 = vunpack.c.l.b16 %v242
  %v1188 = vunpack.c.h.b16 %v242
  %v1189 = vunpack.c.l.b16 %v243
  %v1190 = vunpack.c.h.b16 %v243
  %v1191 = vunpack.c.l.b16 %v244
  %v1192 = vunpack.c.h.b16 %v244
  %v1193 = vunpack.c.l.b16 %v245
  %v1194 = vunpack.c.h.b16 %v245
  %v1195 = vunpack.c.l.b16 %v246
  %v1196 = vunpack.c.h.b16 %v246
  %v1197 = vunpack.c.l.b16 %v247
  %v1198 = vunpack.c.h.b16 %v247
  %v1199 = vunpack.c.l.b16 %v248
  %v1200 = vunpack.c.h.b16 %v248
  %v1201 = vunpack.c.l.b16 %v249
  %v1202 = vunpack.c.h.b16 %v249
  %v1203 = vunpack.c.l.b16 %v250
  %v1204 = vunpack.c.h.b16 %v250
  %v1205 = vunpack.c.l.b16 %v251
  %v1206 = vunpack.c.h.b16 %v251
  %v1207 = vunpack.c.l.b16 %v252
  %v1208 = vunpack.c.h.b16 %v252
  %v1209 = vunpack.c.l.b16 %v253
  %v1210 = vunpack.c.h.b16 %v253
  %v1211 = vunpack.c.l.b16 %v254
  %v1212 = vunpack.c.h.b16 %v254
  %v1213 = vunpack.c.l.b16 %v255
  %v1214 = vunpack.c.h.b16 %v255
  %v1215 = vunpack.c.l.b16 %v256
  %v1216 = vunpack.c.h.b16 %v256
  %v1217 = vunpack.c.l.b16 %v257
  %v1218 = vunpack.c.h.b16 %v257
  %v1219 = vunpack.c.l.b16 %v258
  %v1220 = vunpack.c.h.b16 %v258
  %v1221 = vunpack.c.l.b16 %v259
  %v1222 = vunpack.c.h.b16 %v259
  %v1223 = vunpack.c.l.b16 %v260
  %v1224 = vunpack.c.h.b16 %v260
  %v1225 = vunpack.c.l.b16 %v261
  %v1226 = vunpack.c.h.b16 %v261
  %v1227 = vunpack.c.l.b16 %v262
  %v1228 = vunpack.c.h.b16 %v262
  %v1229 = vunpack.c.l.b16 %v263
  %v1230 = vunpack.c.h.b16 %v263
  %v1231 = vunpack.c.l.b16 %v264
  %v1232 = vunpack.c.h.b16 %v264
  %v1233 = vunpack.c.l.b16 %v265
  %v1234 = vunpack.c.h.b16 %v265
  %v1235 = vunpack.c.l.b16 %v266
  %v1236 = vunpack.c.h.b16 %v266
  %v1237 = vunpack.c.l.b16 %v267
  %v1238 = vunpack.c.h.b16 %v267
  %v1239 = vunpack.c.l.b16 %v268
  %v1240 = vunpack.c.h.b16 %v268
  %v1241 = vunpack.c.l.b16 %v269
  %v1242 = vunpack.c.h.b16 %v269
  %v1243 = vunpack.c.l.b16 %v270
  %v1244 = vunpack.c.h.b16 %v270
  %v1245 = vunpack.c.l.b16 %v271
  %v1246 = vunpack.c.h.b16 %v271
  %v1247 = vunpack.c.l.b16 %v272
  %v1248 = vunpack.c.h.b16 %v272
  %v1249 = vunpack.c.l.b16 %v273
  %v1250 = vunpack.c.h.b16 %v273
  %v1251 = vunpack.c.l.b16 %v274
  %v1252 = vunpack.c.h.b16 %v274
  %v1253 = vunpack.c.l.b16 %v275
  %v1254 = vunpack.c.h.b16 %v275
  %v1255 = vunpack.c.l.b16 %v276
  %v1256 = vunpack.c.h.b16 %v276
  %v1257 = vunpack.c.l.b16 %v277
  %v1258 = vunpack.c.h.b16 %v277
  %v1259 = vunpack.c.l.b16 %v278
  %v1260 = vunpack.c.h.b16 %v278
  %v1261 = vunpack.c.l.b16 %v279
  %v1262 = vunpack.c.h.b16 %v279
  %v1263 = vunpack.c.l.b16 %v280
  %v1264 = vunpack.c.h.b16 %v280
  %v1265 = vunpack.c.l.b16 %v281
  %v1266 = vunpack.c.h.b16 %v281
  %v1267 = vunpack.c.l.b16 %v282
  %v1268 = vunpack.c.h.b16 %v282
  %v1269 = vunpack.c.l.b16 %v283
  %v1270 = vunpack.c.h.b16 %v283
  %v1271 = vunpack.c.l.b16 %v284
  %v1272 = vunpack.c.h.b16 %v284
  %v1273 = vunpack.c.l.b16 %v285
  %v1274 = vunpack.c.h.b16 %v285
  %v1275 = vunpack.c.l.b16 %v286
  %v1276 = vunpack.c.h.b16 %v286
  %v1277 = vunpack.c.l.b16 %v287
  %v1278 = vunpack.c.h.b16 %v287
  %v1279 = vunpack.c.l.b16 %v288
  %v1280 = vunpack.c.h.b16 %v288
  %v1281 = vunpack.c.l.b16 %v289
  %v1282 = vunpack.c.h.b16 %v289
  %v1283 = vunpack.c.l.b16 %v290
  %v1284 = vunpack.c.h.b16 %v290
  %v1285 = vunpack.c.l.b16 %v291
  %v1286 = vunpack.c.h.b16 %v291
  %v1287 = vunpack.c.l.b16 %v292
  %v1288 = vunpack.c.h.b16 %v292
  %v1289 = vunpack.c.l.b16 %v293
  %v1290 = vunpack.c.h.b16 %v293
  %v1291 = vunpack.c.l.b16 %v294
  %v1292 = vunpack.c.h.b16 %v294
  %v1293 = vunpack.c.l.b16 %v295
  %v1294 = vunpack.c.h.b16 %v295
  %v1295 = vunpack.c.l.b16 %v296
  %v1296 = vunpack.c.h.b16 %v296
  %v1297 = vunpack.c.l.b16 %v297
  %v1298 = vunpack.c.h.b16 %v297
  %v1299 = vunpack.c.l.b16 %v298
  %v1300 = vunpack.c.h.b16 %v298
  %v1301 = vunpack.c.l.b16 %v299
  %v1302 = vunpack.c.h.b16 %v299
  %v1303 = vunpack.c.l.b16 %v300
  %v1304 = vunpack.c.h.b16 %v300
  %v1305 = vunpack.c.l.b16 %v301
  %v1306 = vunpack.c.h.b16 %v301
  %v1307 = vunpack.c.l.b16 %v302
  %v1308 = vunpack.c.h.b16 %v302
  %v1309 = vunpack.c.l.b16 %v303
  %v1310 = vunpack.c.h.b16 %v303
  %v1311 = vunpack.c.l.b16 %v304
  %v1312 = vunpack.c.h.b16 %v304
  %v1313 = vunpack.c.l.b16 %v305
  %v1314 = vunpack.c.h.b16 %v305
  %v1315 = vunpack.c.l.b16 %v306
  %v1316 = vunpack.c.h.b16 %v306
  %v1317 = vunpack.c.l.b16 %v307
  %v1318 = vunpack.c.h.b16 %v307
  %v1319 = vunpack.c.l.b16 %v308
  %v1320 = vunpack.c.h.b16 %v308
  %v1321 = vunpack.c.l.b16 %v309
  %v1322 = vunpack.c.h.b16 %v309
  %v1323 = vunpack.c.l.b16 %v310
  %v1324 = vunpack.c.h.b16 %v310
  %v1325 = vunpack.c.l.b16 %v311
  %v1326 = vunpack.c.h.b16 %v311
  %v1327 = vunpack.c.l.b16 %v312
  %v1328 = vunpack.c.h.b16 %v312
  %v1329 = vunpack.c.l.b16 %v313
  %v1330 = vunpack.c.h.b16 %v313
  %v1331 = vunpack.c.l.b16 %v314
  %v1332 = vunpack.c.h.b16 %v314
  %v1333 = vunpack.c.l.b16 %v315
  %v1334 = vunpack.c.h.b16 %v315
  %v1335 = vunpack.c.l.b16 %v316
  %v1336 = vunpack.c.h.b16 %v316
  %v1337 = vunpack.c.l.b16 %v317
  %v1338 = vunpack.c.h.b16 %v317
  %v1339 = vunpack.c.l.b16 %v318
  %v1340 = vunpack.c.h.b16 %v318
  %v1341 = vunpack.c.l.b16 %v319
  %v1342 = vunpack.c.h.b16 %v319
  %v1343 = vunpack.c.l.b16 %v320
  %v1344 = vunpack.c.h.b16 %v320
  %v1345 = vunpack.c.l.b16 %v321
  %v1346 = vunpack.c.h.b16 %v321
  %v1347 = vunpack.c.l.b16 %v322
  %v1348 = vunpack.c.h.b16 %v322
  %v1349 = vunpack.c.l.b16 %v323
  %v1350 = vunpack.c.h.b16 %v323
  %v1351 = vunpack.c.l.b16 %v324
  %v1352 = vunpack.c.h.b16 %v324
  %v1353 = vunpack.c.l.b16 %v325
  %v1354 = vunpack.c.h.b16 %v325
  %v1355 = vunpack.c.l.b16 %v326
  %v1356 = vunpack.c.h.b16 %v326
  %v1357 = vunpack.c.l.b16 %v327
  %v1358 = vunpack.c.h.b16 %v327
  %v1359 = vunpack.c.l.b16 %v328
  %v1360 = vunpack.c.h.b16 %v328
  %v1361 = vunpack.c.l.b16 %v329
  %v1362 = vunpack.c.h.b16 %v329
  %v1363 = vunpack.c.l.b16 %v330
  %v1364 = vunpack.c.h.b16 %v330
  %v1365 = vunpack.c.l.b16 %v331
  %v1366 = vunpack.c.h.b16 %v331
  %v1367 = vunpack.c.l.b16 %v332
  %v1368 = vunpack.c.h.b16 %v332
  %v1369 = vunpack.c.l.b16 %v333
  %v1370 = vunpack.c.h.b16 %v333
  %v1371 = vunpack.c.l.b16 %v334
  %v1372 = vunpack.c.h.b16 %v334
  %v1373 = vunpack.c.l.b16 %v335
  %v1374 = vunpack.c.h.b16 %v335
  %v1375 = vunpack.c.l.b16 %v336
  %v1376 = vunpack.c.h.b16 %v336
  %v1377 = vunpack.c.l.b16 %v337
  %v1378 = vunpack.c.h.b16 %v337
  %v1379 = vunpack.c.l.b16 %v338
  %v1380 = vunpack.c.h.b16 %v338
  %v1381 = vunpack.c.l.b16 %v339
  %v1382 = vunpack.c.h.b16 %v339
  %v1383 = vunpack.c.l.b16 %v340
  %v1384 = vunpack.c.h.b16 %v340
  %v1385 = vpack.c.b16 %v811, %v809
  %v1386 = vpack.c.b16 %v812, %v810
  %v1387 = vpack.c.b16 %v815, %v813
  %v1388 = vpack.c.b16 %v816, %v814
  %v1389 = vpack.c.b16 %v819, %v817
  %v1390 = vpack.c.b16 %v820, %v818
  %v1391 = vpack.c.b16 %v823, %v821
  %v1392 = vpack.c.b16 %v824, %v822
  %v1393 = vpack.c.b16 %v827, %v825
  %v1394 = vpack.c.b16 %v828, %v826
  %v1395 = vpack.c.b16 %v831, %v829
  %v1396 = vpack.c.b16 %v832, %v830
  %v1397 = vpack.c.b16 %v835, %v833
  %v1398 = vpack.c.b16 %v836, %v834
  %v1399 = vpack.c.b16 %v839, %v837
  %v1400 = vpack.c.b16 %v840, %v838
  %v1401 = vpack.c.b16 %v843, %v841
  %v1402 = vpack.c.b16 %v844, %v842
  %v1403 = vpack.c.b16 %v847, %v845
  %v1404 = vpack.c.b16 %v848, %v846
  %v1405 = vpack.c.b16 %v851, %v849
  %v1406 = vpack.c.b16 %v852, %v850
  %v1407 = vpack.c.b16 %v855, %v853
  %v1408 = vpack.c.b16 %v856, %v854
  %v1409 = vpack.c.b16 %v859, %v857
  %v1410 = vpack.c.b16 %v860, %v858
  %v1411 = vpack.c.b16 %v863, %v861
  %v1412 = vpack.c.b16 %v864, %v862
  %v1413 = vpack.c.b16 %v867, %v865
  %v1414 = vpack.c.b16 %v868, %v866
  %v1415 = vpack.c.b16 %v871, %v869
  %v1416 = vpack.c.b16 %v872, %v870
  %v1417 = vpack.c.b16 %v875, %v873
  %v1418 = vpack.c.b16 %v876, %v874
  %v1419 = vpack.c.b16 %v879, %v877
  %v1420 = vpack.c.b16 %v880, %v878
  %v1421 = vpack.c.b16 %v883, %v881
  %v1422 = vpack.c.b16 %v884, %v882
  %v1423 = vpack.c.b16 %v887, %v885
  %v1424 = vpack.c.b16 %v888, %v886
  %v1425 = vpack.c.b16 %v891, %v889
  %v1426 = vpack.c.b16 %v892, %v890
  %v1427 = vpack.c.b16 %v895, %v893
  %v1428 = vpack.c.b16 %v896, %v894
  %v1429 = vpack.c.b16 %v899, %v897
  %v1430 = vpack.c.b16 %v900, %v898
  %v1431 = vpack.c.b16 %v903, %v901
  %v1432 = vpack.c.b16 %v904, %v902
  %v1433 = vpack.c.b16 %v907, %v905
  %v1434 = vpack.c.b16 %v908, %v906
  %v1435 = vpack.c.b16 %v911, %v909
  %v1436 = vpack.c.b16 %v912, %v910
  %v1437 = vpack.c.b16 %v915, %v913
  %v1438 = vpack.c.b16 %v916, %v914
  %v1439 = vpack.c.b16 %v919, %v917
  %v1440 = vpack.c.b16 %v920, %v918
  %v1441 = vpack.c.b16 %v923, %v921
  %v1442 = vpack.c.b16 %v924, %v922
  %v1443 = vpack.c.b16 %v927, %v925
  %v1444 = vpack.c.b16 %v928, %v926
  %v1445 = vpack.c.b16 %v931, %v929
  %v1446 = vpack.c.b16 %v932, %v930
  %v1447 = vpack.c.b16 %v935, %v933
  %v1448 = vpack.c.b16 %v936, %v934
  %v1449 = vpack.c.b16 %v939, %v937
  %v1450 = vpack.c.b16 %v940, %v938
  %v1451 = vpack.c.b16 %v943, %v941
  %v1452 = vpack.c.b16 %v944, %v942
  %v1453 = vpack.c.b16 %v947, %v945
  %v1454 = vpack.c.b16 %v948, %v946
  %v1455 = vpack.c.b16 %v951, %v949
  %v1456 = vpack.c.b16 %v952, %v950
  %v1457 = vpack.c.b16 %v955, %v953
  %v1458 = vpack.c.b16 %v956, %v954
  %v1459 = vpack.c.b16 %v959, %v957
  %v1460 = vpack.c.b16 %v960, %v958
  %v1461 = vpack.c.b16 %v963, %v961
  %v1462 = vpack.c.b16 %v964, %v962
  %v1463 = vpack.c.b16 %v967, %v965
  %v1464 = vpack.c.b16 %v968, %v966
  %v1465 = vpack.c.b16 %v971, %v969
  %v1466 = vpack.c.b16 %v972, %v970
  %v1467 = vpack.c.b16 %v975, %v973
  %v1468 = vpack.c.b16 %v976, %v974
  %v1469 = vpack.c.b16 %v979, %v977
  %v1470 = vpack.c.b16 %v980, %v978
  %v1471 = vpack.c.b16 %v983, %v981
  %v1472 = vpack.c.b16 %v984, %v982
  %v1473 = vpack.c.b16 %v987, %v985
  %v1474 = vpack.c.b16 %v988, %v986
  %v1475 = vpack.c.b16 %v991, %v989
  %v1476 = vpack.c.b16 %v992, %v990
  %v1477 = vpack.c.b16 %v995, %v993
  %v1478 = vpack.c.b16 %v996, %v994
  %v1479 = vpack.c.b16 %v999, %v997
  %v1480 = vpack.c.b16 %v1000, %v998
  %v1481 = vpack.c.b16 %v1003, %v1001
  %v1482 = vpack.c.b16 %v1004, %v1002
  %v1483 = vpack.c.b16 %v1007, %v1005
  %v1484 = vpack.c.b16 %v1008, %v1006
  %v1485 = vpack.c.b16 %v1011, %v1009
  %v1486 = vpack.c.b16 %v1012, %v1010
  %v1487 = vpack.c.b16 %v1015, %v1013
  %v1488 = vpack.c.b16 %v1016, %v1014
  %v1489 = vpack.c.b16 %v1019, %v1017
  %v1490 = vpack.c.b16 %v1020, %v1018
  %v1491 = vpack.c.b16 %v1023, %v1021
  %v1492 = vpack.c.b16 %v1024, %v1022
  %v1493 = vpack.c.b16 %v1027, %v1025
  %v1494 = vpack.c.b16 %v1028, %v1026
  %v1495 = vpack.c.b16 %v1031, %v1029
  %v1496 = vpack.c.b16 %v1032, %v1030
  %v1497 = vpack.c.b16 %v1035, %v1033
  %v1498 = vpack.c.b16 %v1036, %v1034
  %v1499 = vpack.c.b16 %v1039, %v1037
  %v1500 = vpack.c.b16 %v1040, %v1038
  %v1501 = vpack.c.b16 %v1043, %v1041
  %v1502 = vpack.c.b16 %v1044, %v1042
  %v1503 = vpack.c.b16 %v1047, %v1045
  %v1504 = vpack.c.b16 %v1048, %v1046
  %v1505 = vpack.c.b16 %v1051, %v1049
  %v1506 = vpack.c.b16 %v1052, %v1050
  %v1507 = vpack.c.b16 %v1055, %v1053
  %v1508 = vpack.c.b16 %v1056, %v1054
  %v1509 = vpack.c.b16 %v1059, %v1057
  %v1510 = vpack.c.b16 %v1060, %v1058
  %v1511 = vpack.c.b16 %v1063, %v1061
  %v1512 = vpack.c.b16 %v1064, %v1062
  %v1513 = vpack.c.b16 %v1067, %v1065
  %v1514 = vpack.c.b16 %v1068, %v1066
  %v1515 = vpack.c.b16 %v1071, %v1069
  %v1516 = vpack.c.b16 %v1072, %v1070
  %v1517 = vpack.c.b16 %v1075, %v1073
  %v1518 = vpack.c.b16 %v1076, %v1074
  %v1519 = vpack.c.b16 %v1079, %v1077
  %v1520 = vpack.c.b16 %v1080, %v1078
  %v1521 = vpack.c.b16 %v1083, %v1081
  %v1522 = vpack.c.b16 %v1084, %v1082
  %v1523 = vpack.c.b16 %v1087, %v1085
  %v1524 = vpack.c.b16 %v1088, %v1086
  %v1525 = vpack.c.b16 %v1091, %v1089
  %v1526 = vpack.c.b16 %v1092, %v1090
  %v1527 = vpack.c.b16 %v1095, %v1093
  %v1528 = vpack.c.b16 %v1096, %v1094
  %v1529 = vpack.c.b16 %v1099, %v1097
  %v1530 = vpack.c.b16 %v1100, %v1098
  %v1531 = vpack.c.b16 %v1103, %v1101
  %v1532 = vpack.c.b16 %v1104, %v1102
  %v1533 = vpack.c.b16 %v1107, %v1105
  %v1534 = vpack.c.b16 %v1108, %v1106
  %v1535 = vpack.c.b16 %v1111, %v1109
  %v1536 = vpack.c.b16 %v1112, %v1110
  %v1537 = vpack.c.b16 %v1115, %v1113
  %v1538 = vpack.c.b16 %v1116, %v1114
  %v1539 = vpack.c.b16 %v1119, %v1117
  %v1540 = vpack.c.b16 %v1120, %v1118
  %v1541 = vpack.c.b16 %v1123, %v1121
  %v1542 = vpack.c.b16 %v1124, %v1122
  %v1543 = vpack.c.b16 %v1127, %v1125
  %v1544 = vpack.c.b16 %v1128, %v1126
  %v1545 = vpack.c.b16 %v1131, %v1129
  %v1546 = vpack.c.b16 %v1132, %v1130
  %v1547 = vpack.c.b16 %v1135, %v1133
  %v1548 = vpack.c.b16 %v1136, %v1134
  %v1549 = vpack.c.b16 %v1139, %v1137
  %v1550 = vpack.c.b16 %v1140, %v1138
  %v1551 = vpack.c.b16 %v1143, %v1141
  %v1552 = vpack.c.b16 %v1144, %v1142
  %v1553 = vpack.c.b16 %v1147, %v1145
  %v1554 = vpack.c.b16 %v1148, %v1146
  %v1555 = vpack.c.b16 %v1151, %v1149
  %v1556 = vpack.c.b16 %v1152, %v1150
  %v1557 = vpack.c.b16 %v1155, %v1153
  %v1558 = vpack.c.b16 %v1156, %v1154
  %v1559 = vpack.c.b16 %v1159, %v1157
  %v1560 = vpack.c.b16 %v1160, %v1158
  %v1561 = vpack.c.b16 %v1163, %v1161
  %v1562 = vpack.c.b16 %v1164, %v1162
  %v1563 = vpack.c.b16 %v1167, %v1165
  %v1564 = vpack.c.b16 %v1168, %v1166
  %v1565 = vpack.c.b16 %v1171, %v1169
  %v1566 = vpack.c.b16 %v1172, %v1170
  %v1567 = vpack.c.b16 %v1175, %v1173
  %v1568 = vpack.c.b16 %v1176, %v1174
  %v1569 = vpack.c.b16 %v1179, %v1177
  %v1570 = vpack.c.b16 %v1180, %v1178
  %v1571 = vpack.c.b16 %v1183, %v1181
  %v1572 = vpack.c.b16 %v1184, %v1182
  %v1573 = vpack.c.b16 %v1187, %v1185
  %v1574 = vpack.c.b16 %v1188, %v1186
  %v1575 = vpack.c.b16 %v1191, %v1189
  %v1576 = vpack.c.b16 %v1192, %v1190
  %v1577 = vpack.c.b16 %v1195, %v1193
  %v1578 = vpack.c.b16 %v1196, %v1194
  %v1579 = vpack.c.b16 %v1199, %v1197
  %v1580 = vpack.c.b16 %v1200, %v1198
  %v1581 = vpack.c.b16 %v1203, %v1201
  %v1582 = vpack.c.b16 %v1204, %v1202
  %v1583 = vpack.c.b16 %v1207, %v1205
  %v1584 = vpack.c.b16 %v1208, %v1206
  %v1585 = vpack.c.b16 %v1211, %v1209
  %v1586 = vpack.c.b16 %v1212, %v1210
  %v1587 = vpack.c.b16 %v1215, %v1213
  %v1588 = vpack.c.b16 %v1216, %v1214
  %v1589 = vpack.c.b16 %v1219, %v1217
  %v1590 = vpack.c.b16 %v1220, %v1218
  %v1591 = vpack.c.b16 %v1223, %v1221
  %v1592 = vpack.c.b16 %v1224, %v1222
  %v1593 = vpack.c.b16 %v1227, %v1225
  %v1594 = vpack.c.b16 %v1228, %v1226
  %v1595 = vpack.c.b16 %v1231, %v1229
  %v1596 = vpack.c.b16 %v1232, %v1230
  %v1597 = vpack.c.b16 %v1235, %v1233
  %v1598 = vpack.c.b16 %v1236, %v1234
  %v1599 = vpack.c.b16 %v1239, %v1237
  %v1600 = vpack.c.b16 %v1240, %v1238
  %v1601 = vpack.c.b16 %v1243, %v1241
  %v1602 = vpack.c.b16 %v1244, %v1242
  %v1603 = vpack.c.b16 %v1247, %v1245
  %v1604 = vpack.c.b16 %v1248, %v1246
  %v1605 = vpack.c.b16 %v1251, %v1249
  %v1606 = vpack.c.b16 %v1252, %v1250
  %v1607 = vpack.c.b16 %v1255, %v1253
  %v1608 = vpack.c.b16 %v1256, %v1254
  %v1609 = vpack.c.b16 %v1259, %v1257
  %v1610 = vpack.c.b16 %v1260, %v1258
  %v1611 = vpack.c.b16 %v1263, %v1261
  %v1612 = vpack.c.b16 %v1264, %v1262
  %v1613 = vpack.c.b16 %v1267, %v1265
  %v1614 = vpack.c.b16 %v1268, %v1266
  %v1615 = vpack.c.b16 %v1271, %v1269
  %v1616 = vpack.c.b16 %v1272, %v1270
  %v1617 = vpack.c.b16 %v1275, %v1273
  %v1618 = vpack.c.b16 %v1276, %v1274
  %v1619 = vpack.c.b16 %v1279, %v1277
  %v1620 = vpack.c.b16 %v1280, %v1278
  %v1621 = vpack.c.b16 %v1283, %v1281
  %v1622 = vpack.c.b16 %v1284, %v1282
  %v1623 = vpack.c.b16 %v1287, %v1285
  %v1624 = vpack.c.b16 %v1288, %v1286
  %v1625 = vpack.c.b16 %v1291, %v1289
  %v1626 = vpack.c.b16 %v1292, %v1290
  %v1627 = vpack.c.b16 %v1295, %v1293
  %v1628 = vpack.c.b16 %v1296, %v1294
  %v1629 = vpack.c.b16 %v1299, %v1297
  %v1630 = vpack.c.b16 %v1300, %v1298
  %v1631 = vpack.c.b16 %v1303, %v1301
  %v1632 = vpack.c.b16 %v1304, %v1302
  %v1633 = vpack.c.b16 %v1307, %v1305
  %v1634 = vpack.c.b16 %v1308, %v1306
  %v1635 = vpack.c.b16 %v1311, %v1309
  %v1636 = vpack.c.b16 %v1312, %v1310
  %v1637 = vpack.c.b16 %v1315, %v1313
  %v1638 = vpack.c.b16 %v1316, %v1314
  %v1639 = vpack.c.b16 %v1319, %v1317
  %v1640 = vpack.c.b16 %v1320, %v1318
  %v1641 = vpack.c.b16 %v1323, %v1321
  %v1642 = vpack.c.b16 %v1324, %v1322
  %v1643 = vpack.c.b16 %v1327, %v1325
  %v1644 = vpack.c.b16 %v1328, %v1326
  %v1645 = vpack.c.b16 %v1331, %v1329
  %v1646 = vpack.c.b16 %v1332, %v1330
  %v1647 = vpack.c.b16 %v1335, %v1333
  %v1648 = vpack.c.b16 %v1336, %v1334
  %v1649 = vpack.c.b16 %v1339, %v1337
  %v1650 = vpack.c.b16 %v1340, %v1338
  %v1651 = vpack.c.b16 %v1343, %v1341
  %v1652 = vpack.c.b16 %v1344, %v1342
  %v1653 = vpack.c.b16 %v1347, %v1345
  %v1654 = vpack.c.b16 %v1348, %v1346
  %v1655 = vpack.c.b16 %v1351, %v1349
  %v1656 = vpack.c.b16 %v1352, %v1350
  %v1657 = vpack.c.b16 %v1355, %v1353
  %v1658 = vpack.c.b16 %v1356, %v1354
  %v1659 = vpack.c.b16 %v1359, %v1357
  %v1660 = vpack.c.b16 %v1360, %v1358
  %v1661 = vpack.c.b16 %v1363, %v1361
  %v1662 = vpack.c.b16 %v1364, %v1362
  %v1663 = vpack.c.b16 %v1367, %v1365
  %v1664 = vpack.c.b16 %v1368, %v1366
  %v1665 = vpack.c.b16 %v1371, %v1369
  %v1666 = vpack.c.b16 %v1372, %v1370
  %v1667 = vpack.c.b16 %v1375, %v1373
  %v1668 = vpack.c.b16 %v1376, %v1374
  %v1669 = vpack.c.b16 %v1379, %v1377
  %v1670 = vpack.c.b16 %v1380, %v1378
  %v1671 = vpack.c.b16 %v1383, %v1381
  %v1672 = vpack.c.b16 %v1384, %v1382
  %1961 = vmatpush.bf16.msra.mxu0 %v1399
  %1962 = vmatpush.bf16.msra.mxu0 %v1397
  %1963 = vmatpush.bf16.msra.mxu0 %v1395
  %1964 = vmatpush.bf16.msra.mxu0 %v1393
  %1965 = vmatpush.bf16.msra.mxu0 %v1391
  %1966 = vmatpush.bf16.msra.mxu0 %v1389
  %1967 = vmatpush.bf16.msra.mxu0 %v1387
  %1968 = vmatpush.bf16.msra.mxu0 %v1385
  %1969 = vmatmul.bf16.gmra.mxu0 %v449
  %v1970 = vpop.f32.mrf.mxu0
  %v1971 = vadd.f32 0.0, %v1970
  %v1972 = vpop.f32.mrf.mxu0
  %v1973 = vadd.f32 0.0, %v1972
  %1974 = vmatmul.bf16.gmra.mxu0 %v467
  %v1975 = vpop.f32.mrf.mxu0
  %v1976 = vadd.f32 0.0, %v1975
  %v1977 = vpop.f32.mrf.mxu0
  %v1978 = vadd.f32 0.0, %v1977
  %1979 = vdwg.mxu0
  %1980 = vmatpush.bf16.msra.mxu0 %v1415
  %1981 = vmatpush.bf16.msra.mxu0 %v1413
  %1982 = vmatpush.bf16.msra.mxu0 %v1411
  %1983 = vmatpush.bf16.msra.mxu0 %v1409
  %1984 = vmatpush.bf16.msra.mxu0 %v1407
  %1985 = vmatpush.bf16.msra.mxu0 %v1405
  %1986 = vmatpush.bf16.msra.mxu0 %v1403
  %1987 = vmatpush.bf16.msra.mxu0 %v1401
  %1988 = vmatmul.bf16.gmra.mxu0 %v450
  %v1989 = vpop.f32.mrf.mxu0
  %v1990 = vadd.f32 %v1971, %v1989
  %v1991 = vpop.f32.mrf.mxu0
  %v1992 = vadd.f32 %v1973, %v1991
  %1993 = vmatmul.bf16.gmra.mxu0 %v468
  %v1994 = vpop.f32.mrf.mxu0
  %v1995 = vadd.f32 %v1976, %v1994
  %v1996 = vpop.f32.mrf.mxu0
  %v1997 = vadd.f32 %v1978, %v1996
  %1998 = vdwg.mxu0
  %1999 = vmatpush.bf16.msra.mxu0 %v1431
  %2000 = vmatpush.bf16.msra.mxu0 %v1429
  %2001 = vmatpush.bf16.msra.mxu0 %v1427
  %2002 = vmatpush.bf16.msra.mxu0 %v1425
  %2003 = vmatpush.bf16.msra.mxu0 %v1423
  %2004 = vmatpush.bf16.msra.mxu0 %v1421
  %2005 = vmatpush.bf16.msra.mxu0 %v1419
  %2006 = vmatpush.bf16.msra.mxu0 %v1417
  %2007 = vmatmul.bf16.gmra.mxu0 %v451
  %v2008 = vpop.f32.mrf.mxu0
  %v2009 = vadd.f32 %v1990, %v2008
  %v2010 = vpop.f32.mrf.mxu0
  %v2011 = vadd.f32 %v1992, %v2010
  %2012 = vmatmul.bf16.gmra.mxu0 %v469
  %v2013 = vpop.f32.mrf.mxu0
  %v2014 = vadd.f32 %v1995, %v2013
  %v2015 = vpop.f32.mrf.mxu0
  %v2016 = vadd.f32 %v1997, %v2015
  %2017 = vdwg.mxu0
  %2018 = vmatpush.bf16.msra.mxu0 %v1447
  %2019 = vmatpush.bf16.msra.mxu0 %v1445
  %2020 = vmatpush.bf16.msra.mxu0 %v1443
  %2021 = vmatpush.bf16.msra.mxu0 %v1441
  %2022 = vmatpush.bf16.msra.mxu0 %v1439
  %2023 = vmatpush.bf16.msra.mxu0 %v1437
  %2024 = vmatpush.bf16.msra.mxu0 %v1435
  %2025 = vmatpush.bf16.msra.mxu0 %v1433
  %2026 = vmatmul.bf16.gmra.mxu0 %v452
  %v2027 = vpop.f32.mrf.mxu0
  %v2028 = vadd.f32 %v2009, %v2027
  %v2029 = vpop.f32.mrf.mxu0
  %v2030 = vadd.f32 %v2011, %v2029
  %2031 = vmatmul.bf16.gmra.mxu0 %v470
  %v2032 = vpop.f32.mrf.mxu0
  %v2033 = vadd.f32 %v2014, %v2032
  %v2034 = vpop.f32.mrf.mxu0
  %v2035 = vadd.f32 %v2016, %v2034
  %2036 = vdwg.mxu0
  %2037 = vmatpush.bf16.msra.mxu0 %v1463
  %2038 = vmatpush.bf16.msra.mxu0 %v1461
  %2039 = vmatpush.bf16.msra.mxu0 %v1459
  %2040 = vmatpush.bf16.msra.mxu0 %v1457
  %2041 = vmatpush.bf16.msra.mxu0 %v1455
  %2042 = vmatpush.bf16.msra.mxu0 %v1453
  %2043 = vmatpush.bf16.msra.mxu0 %v1451
  %2044 = vmatpush.bf16.msra.mxu0 %v1449
  %2045 = vmatmul.bf16.gmra.mxu0 %v453
  %v2046 = vpop.f32.mrf.mxu0
  %v2047 = vadd.f32 %v2028, %v2046
  %v2048 = vpop.f32.mrf.mxu0
  %v2049 = vadd.f32 %v2030, %v2048
  %2050 = vmatmul.bf16.gmra.mxu0 %v471
  %v2051 = vpop.f32.mrf.mxu0
  %v2052 = vadd.f32 %v2033, %v2051
  %v2053 = vpop.f32.mrf.mxu0
  %v2054 = vadd.f32 %v2035, %v2053
  %2055 = vdwg.mxu0
  %2056 = vmatpush.bf16.msra.mxu0 %v1479
  %2057 = vmatpush.bf16.msra.mxu0 %v1477
  %2058 = vmatpush.bf16.msra.mxu0 %v1475
  %2059 = vmatpush.bf16.msra.mxu0 %v1473
  %2060 = vmatpush.bf16.msra.mxu0 %v1471
  %2061 = vmatpush.bf16.msra.mxu0 %v1469
  %2062 = vmatpush.bf16.msra.mxu0 %v1467
  %2063 = vmatpush.bf16.msra.mxu0 %v1465
  %2064 = vmatmul.bf16.gmra.mxu0 %v454
  %v2065 = vpop.f32.mrf.mxu0
  %v2066 = vadd.f32 %v2047, %v2065
  %v2067 = vpop.f32.mrf.mxu0
  %v2068 = vadd.f32 %v2049, %v2067
  %2069 = vmatmul.bf16.gmra.mxu0 %v472
  %v2070 = vpop.f32.mrf.mxu0
  %v2071 = vadd.f32 %v2052, %v2070
  %v2072 = vpop.f32.mrf.mxu0
  %v2073 = vadd.f32 %v2054, %v2072
  %2074 = vdwg.mxu0
  %2075 = vmatpush.bf16.msra.mxu0 %v1495
  %2076 = vmatpush.bf16.msra.mxu0 %v1493
  %2077 = vmatpush.bf16.msra.mxu0 %v1491
  %2078 = vmatpush.bf16.msra.mxu0 %v1489
  %2079 = vmatpush.bf16.msra.mxu0 %v1487
  %2080 = vmatpush.bf16.msra.mxu0 %v1485
  %2081 = vmatpush.bf16.msra.mxu0 %v1483
  %2082 = vmatpush.bf16.msra.mxu0 %v1481
  %2083 = vmatmul.bf16.gmra.mxu0 %v455
  %v2084 = vpop.f32.mrf.mxu0
  %v2085 = vadd.f32 %v2066, %v2084
  %v2086 = vpop.f32.mrf.mxu0
  %v2087 = vadd.f32 %v2068, %v2086
  %2088 = vmatmul.bf16.gmra.mxu0 %v473
  %v2089 = vpop.f32.mrf.mxu0
  %v2090 = vadd.f32 %v2071, %v2089
  %v2091 = vpop.f32.mrf.mxu0
  %v2092 = vadd.f32 %v2073, %v2091
  %2093 = vdwg.mxu0
  %2094 = vmatpush.bf16.msra.mxu0 %v1511
  %2095 = vmatpush.bf16.msra.mxu0 %v1509
  %2096 = vmatpush.bf16.msra.mxu0 %v1507
  %2097 = vmatpush.bf16.msra.mxu0 %v1505
  %2098 = vmatpush.bf16.msra.mxu0 %v1503
  %2099 = vmatpush.bf16.msra.mxu0 %v1501
  %2100 = vmatpush.bf16.msra.mxu0 %v1499
  %2101 = vmatpush.bf16.msra.mxu0 %v1497
  %2102 = vmatmul.bf16.gmra.mxu0 %v456
  %v2103 = vpop.f32.mrf.mxu0
  %v2104 = vadd.f32 %v2085, %v2103
  %v2105 = vpop.f32.mrf.mxu0
  %v2106 = vadd.f32 %v2087, %v2105
  %2107 = vmatmul.bf16.gmra.mxu0 %v474
  %v2108 = vpop.f32.mrf.mxu0
  %v2109 = vadd.f32 %v2090, %v2108
  %v2110 = vpop.f32.mrf.mxu0
  %v2111 = vadd.f32 %v2092, %v2110
  %2112 = vdwg.mxu0
  %2113 = vmatpush.bf16.msra.mxu0 %v1527
  %2114 = vmatpush.bf16.msra.mxu0 %v1525
  %2115 = vmatpush.bf16.msra.mxu0 %v1523
  %2116 = vmatpush.bf16.msra.mxu0 %v1521
  %2117 = vmatpush.bf16.msra.mxu0 %v1519
  %2118 = vmatpush.bf16.msra.mxu0 %v1517
  %2119 = vmatpush.bf16.msra.mxu0 %v1515
  %2120 = vmatpush.bf16.msra.mxu0 %v1513
  %2121 = vmatmul.bf16.gmra.mxu0 %v457
  %v2122 = vpop.f32.mrf.mxu0
  %v2123 = vadd.f32 %v2104, %v2122
  %v2124 = vpop.f32.mrf.mxu0
  %v2125 = vadd.f32 %v2106, %v2124
  %2126 = vmatmul.bf16.gmra.mxu0 %v475
  %v2127 = vpop.f32.mrf.mxu0
  %v2128 = vadd.f32 %v2109, %v2127
  %v2129 = vpop.f32.mrf.mxu0
  %v2130 = vadd.f32 %v2111, %v2129
  %2131 = vdwg.mxu0
  %2132 = vmatpush.bf16.msra.mxu0 %v1543
  %2133 = vmatpush.bf16.msra.mxu0 %v1541
  %2134 = vmatpush.bf16.msra.mxu0 %v1539
  %2135 = vmatpush.bf16.msra.mxu0 %v1537
  %2136 = vmatpush.bf16.msra.mxu0 %v1535
  %2137 = vmatpush.bf16.msra.mxu0 %v1533
  %2138 = vmatpush.bf16.msra.mxu0 %v1531
  %2139 = vmatpush.bf16.msra.mxu0 %v1529
  %2140 = vmatmul.bf16.gmra.mxu0 %v458
  %v2141 = vpop.f32.mrf.mxu0
  %v2142 = vadd.f32 %v2123, %v2141
  %v2143 = vpop.f32.mrf.mxu0
  %v2144 = vadd.f32 %v2125, %v2143
  %2145 = vmatmul.bf16.gmra.mxu0 %v476
  %v2146 = vpop.f32.mrf.mxu0
  %v2147 = vadd.f32 %v2128, %v2146
  %v2148 = vpop.f32.mrf.mxu0
  %v2149 = vadd.f32 %v2130, %v2148
  %2150 = vdwg.mxu0
  %2151 = vmatpush.bf16.msra.mxu0 %v1559
  %2152 = vmatpush.bf16.msra.mxu0 %v1557
  %2153 = vmatpush.bf16.msra.mxu0 %v1555
  %2154 = vmatpush.bf16.msra.mxu0 %v1553
  %2155 = vmatpush.bf16.msra.mxu0 %v1551
  %2156 = vmatpush.bf16.msra.mxu0 %v1549
  %2157 = vmatpush.bf16.msra.mxu0 %v1547
  %2158 = vmatpush.bf16.msra.mxu0 %v1545
  %2159 = vmatmul.bf16.gmra.mxu0 %v459
  %v2160 = vpop.f32.mrf.mxu0
  %v2161 = vadd.f32 %v2142, %v2160
  %v2162 = vpop.f32.mrf.mxu0
  %v2163 = vadd.f32 %v2144, %v2162
  %2164 = vmatmul.bf16.gmra.mxu0 %v477
  %v2165 = vpop.f32.mrf.mxu0
  %v2166 = vadd.f32 %v2147, %v2165
  %v2167 = vpop.f32.mrf.mxu0
  %v2168 = vadd.f32 %v2149, %v2167
  %2169 = vdwg.mxu0
  %2170 = vmatpush.bf16.msra.mxu0 %v1575
  %2171 = vmatpush.bf16.msra.mxu0 %v1573
  %2172 = vmatpush.bf16.msra.mxu0 %v1571
  %2173 = vmatpush.bf16.msra.mxu0 %v1569
  %2174 = vmatpush.bf16.msra.mxu0 %v1567
  %2175 = vmatpush.bf16.msra.mxu0 %v1565
  %2176 = vmatpush.bf16.msra.mxu0 %v1563
  %2177 = vmatpush.bf16.msra.mxu0 %v1561
  %2178 = vmatmul.bf16.gmra.mxu0 %v460
  %v2179 = vpop.f32.mrf.mxu0
  %v2180 = vadd.f32 %v2161, %v2179
  %v2181 = vpop.f32.mrf.mxu0
  %v2182 = vadd.f32 %v2163, %v2181
  %2183 = vmatmul.bf16.gmra.mxu0 %v478
  %v2184 = vpop.f32.mrf.mxu0
  %v2185 = vadd.f32 %v2166, %v2184
  %v2186 = vpop.f32.mrf.mxu0
  %v2187 = vadd.f32 %v2168, %v2186
  %2188 = vdwg.mxu0
  %2189 = vmatpush.bf16.msra.mxu0 %v1591
  %2190 = vmatpush.bf16.msra.mxu0 %v1589
  %2191 = vmatpush.bf16.msra.mxu0 %v1587
  %2192 = vmatpush.bf16.msra.mxu0 %v1585
  %2193 = vmatpush.bf16.msra.mxu0 %v1583
  %2194 = vmatpush.bf16.msra.mxu0 %v1581
  %2195 = vmatpush.bf16.msra.mxu0 %v1579
  %2196 = vmatpush.bf16.msra.mxu0 %v1577
  %2197 = vmatmul.bf16.gmra.mxu0 %v461
  %v2198 = vpop.f32.mrf.mxu0
  %v2199 = vadd.f32 %v2180, %v2198
  %v2200 = vpop.f32.mrf.mxu0
  %v2201 = vadd.f32 %v2182, %v2200
  %2202 = vmatmul.bf16.gmra.mxu0 %v479
  %v2203 = vpop.f32.mrf.mxu0
  %v2204 = vadd.f32 %v2185, %v2203
  %v2205 = vpop.f32.mrf.mxu0
  %v2206 = vadd.f32 %v2187, %v2205
  %2207 = vdwg.mxu0
  %2208 = vmatpush.bf16.msra.mxu0 %v1607
  %2209 = vmatpush.bf16.msra.mxu0 %v1605
  %2210 = vmatpush.bf16.msra.mxu0 %v1603
  %2211 = vmatpush.bf16.msra.mxu0 %v1601
  %2212 = vmatpush.bf16.msra.mxu0 %v1599
  %2213 = vmatpush.bf16.msra.mxu0 %v1597
  %2214 = vmatpush.bf16.msra.mxu0 %v1595
  %2215 = vmatpush.bf16.msra.mxu0 %v1593
  %2216 = vmatmul.bf16.gmra.mxu0 %v462
  %v2217 = vpop.f32.mrf.mxu0
  %v2218 = vadd.f32 %v2199, %v2217
  %v2219 = vpop.f32.mrf.mxu0
  %v2220 = vadd.f32 %v2201, %v2219
  %2221 = vmatmul.bf16.gmra.mxu0 %v480
  %v2222 = vpop.f32.mrf.mxu0
  %v2223 = vadd.f32 %v2204, %v2222
  %v2224 = vpop.f32.mrf.mxu0
  %v2225 = vadd.f32 %v2206, %v2224
  %2226 = vdwg.mxu0
  %2227 = vmatpush.bf16.msra.mxu0 %v1623
  %2228 = vmatpush.bf16.msra.mxu0 %v1621
  %2229 = vmatpush.bf16.msra.mxu0 %v1619
  %2230 = vmatpush.bf16.msra.mxu0 %v1617
  %2231 = vmatpush.bf16.msra.mxu0 %v1615
  %2232 = vmatpush.bf16.msra.mxu0 %v1613
  %2233 = vmatpush.bf16.msra.mxu0 %v1611
  %2234 = vmatpush.bf16.msra.mxu0 %v1609
  %2235 = vmatmul.bf16.gmra.mxu0 %v463
  %v2236 = vpop.f32.mrf.mxu0
  %v2237 = vadd.f32 %v2218, %v2236
  %v2238 = vpop.f32.mrf.mxu0
  %v2239 = vadd.f32 %v2220, %v2238
  %2240 = vmatmul.bf16.gmra.mxu0 %v481
  %v2241 = vpop.f32.mrf.mxu0
  %v2242 = vadd.f32 %v2223, %v2241
  %v2243 = vpop.f32.mrf.mxu0
  %v2244 = vadd.f32 %v2225, %v2243
  %2245 = vdwg.mxu0
  %2246 = vmatpush.bf16.msra.mxu0 %v1639
  %2247 = vmatpush.bf16.msra.mxu0 %v1637
  %2248 = vmatpush.bf16.msra.mxu0 %v1635
  %2249 = vmatpush.bf16.msra.mxu0 %v1633
  %2250 = vmatpush.bf16.msra.mxu0 %v1631
  %2251 = vmatpush.bf16.msra.mxu0 %v1629
  %2252 = vmatpush.bf16.msra.mxu0 %v1627
  %2253 = vmatpush.bf16.msra.mxu0 %v1625
  %2254 = vmatmul.bf16.gmra.mxu0 %v464
  %v2255 = vpop.f32.mrf.mxu0
  %v2256 = vadd.f32 %v2237, %v2255
  %v2257 = vpop.f32.mrf.mxu0
  %v2258 = vadd.f32 %v2239, %v2257
  %2259 = vmatmul.bf16.gmra.mxu0 %v482
  %v2260 = vpop.f32.mrf.mxu0
  %v2261 = vadd.f32 %v2242, %v2260
  %v2262 = vpop.f32.mrf.mxu0
  %v2263 = vadd.f32 %v2244, %v2262
  %2264 = vdwg.mxu0
  %2265 = vmatpush.bf16.msra.mxu0 %v1655
  %2266 = vmatpush.bf16.msra.mxu0 %v1653
  %2267 = vmatpush.bf16.msra.mxu0 %v1651
  %2268 = vmatpush.bf16.msra.mxu0 %v1649
  %2269 = vmatpush.bf16.msra.mxu0 %v1647
  %2270 = vmatpush.bf16.msra.mxu0 %v1645
  %2271 = vmatpush.bf16.msra.mxu0 %v1643
  %2272 = vmatpush.bf16.msra.mxu0 %v1641
  %2273 = vmatmul.bf16.gmra.mxu0 %v465
  %v2274 = vpop.f32.mrf.mxu0
  %v2275 = vadd.f32 %v2256, %v2274
  %v2276 = vpop.f32.mrf.mxu0
  %v2277 = vadd.f32 %v2258, %v2276
  %2278 = vmatmul.bf16.gmra.mxu0 %v483
  %v2279 = vpop.f32.mrf.mxu0
  %v2280 = vadd.f32 %v2261, %v2279
  %v2281 = vpop.f32.mrf.mxu0
  %v2282 = vadd.f32 %v2263, %v2281
  %2283 = vdwg.mxu0
  %2284 = vmatpush.bf16.msra.mxu0 %v1671
  %2285 = vmatpush.bf16.msra.mxu0 %v1669
  %2286 = vmatpush.bf16.msra.mxu0 %v1667
  %2287 = vmatpush.bf16.msra.mxu0 %v1665
  %2288 = vmatpush.bf16.msra.mxu0 %v1663
  %2289 = vmatpush.bf16.msra.mxu0 %v1661
  %2290 = vmatpush.bf16.msra.mxu0 %v1659
  %2291 = vmatpush.bf16.msra.mxu0 %v1657
  %2292 = vmatmul.bf16.gmra.mxu0 %v466
  %v2293 = vpop.f32.mrf.mxu0
  %v2294 = vadd.f32 %v2275, %v2293
  %v2295 = vpop.f32.mrf.mxu0
  %v2296 = vadd.f32 %v2277, %v2295
  %2297 = vmatmul.bf16.gmra.mxu0 %v484
  %v2298 = vpop.f32.mrf.mxu0
  %v2299 = vadd.f32 %v2280, %v2298
  %v2300 = vpop.f32.mrf.mxu0
  %v2301 = vadd.f32 %v2282, %v2300
  %2302 = vdwg.mxu0
  %2303 = vmatpush.bf16.msra.mxu0 %v1400
  %2304 = vmatpush.bf16.msra.mxu0 %v1398
  %2305 = vmatpush.bf16.msra.mxu0 %v1396
  %2306 = vmatpush.bf16.msra.mxu0 %v1394
  %2307 = vmatpush.bf16.msra.mxu0 %v1392
  %2308 = vmatpush.bf16.msra.mxu0 %v1390
  %2309 = vmatpush.bf16.msra.mxu0 %v1388
  %2310 = vmatpush.bf16.msra.mxu0 %v1386
  %2311 = vmatmul.bf16.gmra.mxu0 %v449
  %v2312 = vpop.f32.mrf.mxu0
  %v2313 = vadd.f32 0.0, %v2312
  %v2314 = vpop.f32.mrf.mxu0
  %v2315 = vadd.f32 0.0, %v2314
  %2316 = vmatmul.bf16.gmra.mxu0 %v467
  %v2317 = vpop.f32.mrf.mxu0
  %v2318 = vadd.f32 0.0, %v2317
  %v2319 = vpop.f32.mrf.mxu0
  %v2320 = vadd.f32 0.0, %v2319
  %2321 = vdwg.mxu0
  %2322 = vmatpush.bf16.msra.mxu0 %v1416
  %2323 = vmatpush.bf16.msra.mxu0 %v1414
  %2324 = vmatpush.bf16.msra.mxu0 %v1412
  %2325 = vmatpush.bf16.msra.mxu0 %v1410
  %2326 = vmatpush.bf16.msra.mxu0 %v1408
  %2327 = vmatpush.bf16.msra.mxu0 %v1406
  %2328 = vmatpush.bf16.msra.mxu0 %v1404
  %2329 = vmatpush.bf16.msra.mxu0 %v1402
  %2330 = vmatmul.bf16.gmra.mxu0 %v450
  %v2331 = vpop.f32.mrf.mxu0
  %v2332 = vadd.f32 %v2313, %v2331
  %v2333 = vpop.f32.mrf.mxu0
  %v2334 = vadd.f32 %v2315, %v2333
  %2335 = vmatmul.bf16.gmra.mxu0 %v468
  %v2336 = vpop.f32.mrf.mxu0
  %v2337 = vadd.f32 %v2318, %v2336
  %v2338 = vpop.f32.mrf.mxu0
  %v2339 = vadd.f32 %v2320, %v2338
  %2340 = vdwg.mxu0
  %2341 = vmatpush.bf16.msra.mxu0 %v1432
  %2342 = vmatpush.bf16.msra.mxu0 %v1430
  %2343 = vmatpush.bf16.msra.mxu0 %v1428
  %2344 = vmatpush.bf16.msra.mxu0 %v1426
  %2345 = vmatpush.bf16.msra.mxu0 %v1424
  %2346 = vmatpush.bf16.msra.mxu0 %v1422
  %2347 = vmatpush.bf16.msra.mxu0 %v1420
  %2348 = vmatpush.bf16.msra.mxu0 %v1418
  %2349 = vmatmul.bf16.gmra.mxu0 %v451
  %v2350 = vpop.f32.mrf.mxu0
  %v2351 = vadd.f32 %v2332, %v2350
  %v2352 = vpop.f32.mrf.mxu0
  %v2353 = vadd.f32 %v2334, %v2352
  %2354 = vmatmul.bf16.gmra.mxu0 %v469
  %v2355 = vpop.f32.mrf.mxu0
  %v2356 = vadd.f32 %v2337, %v2355
  %v2357 = vpop.f32.mrf.mxu0
  %v2358 = vadd.f32 %v2339, %v2357
  %2359 = vdwg.mxu0
  %2360 = vmatpush.bf16.msra.mxu0 %v1448
  %2361 = vmatpush.bf16.msra.mxu0 %v1446
  %2362 = vmatpush.bf16.msra.mxu0 %v1444
  %2363 = vmatpush.bf16.msra.mxu0 %v1442
  %2364 = vmatpush.bf16.msra.mxu0 %v1440
  %2365 = vmatpush.bf16.msra.mxu0 %v1438
  %2366 = vmatpush.bf16.msra.mxu0 %v1436
  %2367 = vmatpush.bf16.msra.mxu0 %v1434
  %2368 = vmatmul.bf16.gmra.mxu0 %v452
  %v2369 = vpop.f32.mrf.mxu0
  %v2370 = vadd.f32 %v2351, %v2369
  %v2371 = vpop.f32.mrf.mxu0
  %v2372 = vadd.f32 %v2353, %v2371
  %2373 = vmatmul.bf16.gmra.mxu0 %v470
  %v2374 = vpop.f32.mrf.mxu0
  %v2375 = vadd.f32 %v2356, %v2374
  %v2376 = vpop.f32.mrf.mxu0
  %v2377 = vadd.f32 %v2358, %v2376
  %2378 = vdwg.mxu0
  %2379 = vmatpush.bf16.msra.mxu0 %v1464
  %2380 = vmatpush.bf16.msra.mxu0 %v1462
  %2381 = vmatpush.bf16.msra.mxu0 %v1460
  %2382 = vmatpush.bf16.msra.mxu0 %v1458
  %2383 = vmatpush.bf16.msra.mxu0 %v1456
  %2384 = vmatpush.bf16.msra.mxu0 %v1454
  %2385 = vmatpush.bf16.msra.mxu0 %v1452
  %2386 = vmatpush.bf16.msra.mxu0 %v1450
  %2387 = vmatmul.bf16.gmra.mxu0 %v453
  %v2388 = vpop.f32.mrf.mxu0
  %v2389 = vadd.f32 %v2370, %v2388
  %v2390 = vpop.f32.mrf.mxu0
  %v2391 = vadd.f32 %v2372, %v2390
  %2392 = vmatmul.bf16.gmra.mxu0 %v471
  %v2393 = vpop.f32.mrf.mxu0
  %v2394 = vadd.f32 %v2375, %v2393
  %v2395 = vpop.f32.mrf.mxu0
  %v2396 = vadd.f32 %v2377, %v2395
  %2397 = vdwg.mxu0
  %2398 = vmatpush.bf16.msra.mxu0 %v1480
  %2399 = vmatpush.bf16.msra.mxu0 %v1478
  %2400 = vmatpush.bf16.msra.mxu0 %v1476
  %2401 = vmatpush.bf16.msra.mxu0 %v1474
  %2402 = vmatpush.bf16.msra.mxu0 %v1472
  %2403 = vmatpush.bf16.msra.mxu0 %v1470
  %2404 = vmatpush.bf16.msra.mxu0 %v1468
  %2405 = vmatpush.bf16.msra.mxu0 %v1466
  %2406 = vmatmul.bf16.gmra.mxu0 %v454
  %v2407 = vpop.f32.mrf.mxu0
  %v2408 = vadd.f32 %v2389, %v2407
  %v2409 = vpop.f32.mrf.mxu0
  %v2410 = vadd.f32 %v2391, %v2409
  %2411 = vmatmul.bf16.gmra.mxu0 %v472
  %v2412 = vpop.f32.mrf.mxu0
  %v2413 = vadd.f32 %v2394, %v2412
  %v2414 = vpop.f32.mrf.mxu0
  %v2415 = vadd.f32 %v2396, %v2414
  %2416 = vdwg.mxu0
  %2417 = vmatpush.bf16.msra.mxu0 %v1496
  %2418 = vmatpush.bf16.msra.mxu0 %v1494
  %2419 = vmatpush.bf16.msra.mxu0 %v1492
  %2420 = vmatpush.bf16.msra.mxu0 %v1490
  %2421 = vmatpush.bf16.msra.mxu0 %v1488
  %2422 = vmatpush.bf16.msra.mxu0 %v1486
  %2423 = vmatpush.bf16.msra.mxu0 %v1484
  %2424 = vmatpush.bf16.msra.mxu0 %v1482
  %2425 = vmatmul.bf16.gmra.mxu0 %v455
  %v2426 = vpop.f32.mrf.mxu0
  %v2427 = vadd.f32 %v2408, %v2426
  %v2428 = vpop.f32.mrf.mxu0
  %v2429 = vadd.f32 %v2410, %v2428
  %2430 = vmatmul.bf16.gmra.mxu0 %v473
  %v2431 = vpop.f32.mrf.mxu0
  %v2432 = vadd.f32 %v2413, %v2431
  %v2433 = vpop.f32.mrf.mxu0
  %v2434 = vadd.f32 %v2415, %v2433
  %2435 = vdwg.mxu0
  %2436 = vmatpush.bf16.msra.mxu0 %v1512
  %2437 = vmatpush.bf16.msra.mxu0 %v1510
  %2438 = vmatpush.bf16.msra.mxu0 %v1508
  %2439 = vmatpush.bf16.msra.mxu0 %v1506
  %2440 = vmatpush.bf16.msra.mxu0 %v1504
  %2441 = vmatpush.bf16.msra.mxu0 %v1502
  %2442 = vmatpush.bf16.msra.mxu0 %v1500
  %2443 = vmatpush.bf16.msra.mxu0 %v1498
  %2444 = vmatmul.bf16.gmra.mxu0 %v456
  %v2445 = vpop.f32.mrf.mxu0
  %v2446 = vadd.f32 %v2427, %v2445
  %v2447 = vpop.f32.mrf.mxu0
  %v2448 = vadd.f32 %v2429, %v2447
  %2449 = vmatmul.bf16.gmra.mxu0 %v474
  %v2450 = vpop.f32.mrf.mxu0
  %v2451 = vadd.f32 %v2432, %v2450
  %v2452 = vpop.f32.mrf.mxu0
  %v2453 = vadd.f32 %v2434, %v2452
  %2454 = vdwg.mxu0
  %2455 = vmatpush.bf16.msra.mxu0 %v1528
  %2456 = vmatpush.bf16.msra.mxu0 %v1526
  %2457 = vmatpush.bf16.msra.mxu0 %v1524
  %2458 = vmatpush.bf16.msra.mxu0 %v1522
  %2459 = vmatpush.bf16.msra.mxu0 %v1520
  %2460 = vmatpush.bf16.msra.mxu0 %v1518
  %2461 = vmatpush.bf16.msra.mxu0 %v1516
  %2462 = vmatpush.bf16.msra.mxu0 %v1514
  %2463 = vmatmul.bf16.gmra.mxu0 %v457
  %v2464 = vpop.f32.mrf.mxu0
  %v2465 = vadd.f32 %v2446, %v2464
  %v2466 = vpop.f32.mrf.mxu0
  %v2467 = vadd.f32 %v2448, %v2466
  %2468 = vmatmul.bf16.gmra.mxu0 %v475
  %v2469 = vpop.f32.mrf.mxu0
  %v2470 = vadd.f32 %v2451, %v2469
  %v2471 = vpop.f32.mrf.mxu0
  %v2472 = vadd.f32 %v2453, %v2471
  %2473 = vdwg.mxu0
  %2474 = vmatpush.bf16.msra.mxu0 %v1544
  %2475 = vmatpush.bf16.msra.mxu0 %v1542
  %2476 = vmatpush.bf16.msra.mxu0 %v1540
  %2477 = vmatpush.bf16.msra.mxu0 %v1538
  %2478 = vmatpush.bf16.msra.mxu0 %v1536
  %2479 = vmatpush.bf16.msra.mxu0 %v1534
  %2480 = vmatpush.bf16.msra.mxu0 %v1532
  %2481 = vmatpush.bf16.msra.mxu0 %v1530
  %2482 = vmatmul.bf16.gmra.mxu0 %v458
  %v2483 = vpop.f32.mrf.mxu0
  %v2484 = vadd.f32 %v2465, %v2483
  %v2485 = vpop.f32.mrf.mxu0
  %v2486 = vadd.f32 %v2467, %v2485
  %2487 = vmatmul.bf16.gmra.mxu0 %v476
  %v2488 = vpop.f32.mrf.mxu0
  %v2489 = vadd.f32 %v2470, %v2488
  %v2490 = vpop.f32.mrf.mxu0
  %v2491 = vadd.f32 %v2472, %v2490
  %2492 = vdwg.mxu0
  %2493 = vmatpush.bf16.msra.mxu0 %v1560
  %2494 = vmatpush.bf16.msra.mxu0 %v1558
  %2495 = vmatpush.bf16.msra.mxu0 %v1556
  %2496 = vmatpush.bf16.msra.mxu0 %v1554
  %2497 = vmatpush.bf16.msra.mxu0 %v1552
  %2498 = vmatpush.bf16.msra.mxu0 %v1550
  %2499 = vmatpush.bf16.msra.mxu0 %v1548
  %2500 = vmatpush.bf16.msra.mxu0 %v1546
  %2501 = vmatmul.bf16.gmra.mxu0 %v459
  %v2502 = vpop.f32.mrf.mxu0
  %v2503 = vadd.f32 %v2484, %v2502
  %v2504 = vpop.f32.mrf.mxu0
  %v2505 = vadd.f32 %v2486, %v2504
  %2506 = vmatmul.bf16.gmra.mxu0 %v477
  %v2507 = vpop.f32.mrf.mxu0
  %v2508 = vadd.f32 %v2489, %v2507
  %v2509 = vpop.f32.mrf.mxu0
  %v2510 = vadd.f32 %v2491, %v2509
  %2511 = vdwg.mxu0
  %2512 = vmatpush.bf16.msra.mxu0 %v1576
  %2513 = vmatpush.bf16.msra.mxu0 %v1574
  %2514 = vmatpush.bf16.msra.mxu0 %v1572
  %2515 = vmatpush.bf16.msra.mxu0 %v1570
  %2516 = vmatpush.bf16.msra.mxu0 %v1568
  %2517 = vmatpush.bf16.msra.mxu0 %v1566
  %2518 = vmatpush.bf16.msra.mxu0 %v1564
  %2519 = vmatpush.bf16.msra.mxu0 %v1562
  %2520 = vmatmul.bf16.gmra.mxu0 %v460
  %v2521 = vpop.f32.mrf.mxu0
  %v2522 = vadd.f32 %v2503, %v2521
  %v2523 = vpop.f32.mrf.mxu0
  %v2524 = vadd.f32 %v2505, %v2523
  %2525 = vmatmul.bf16.gmra.mxu0 %v478
  %v2526 = vpop.f32.mrf.mxu0
  %v2527 = vadd.f32 %v2508, %v2526
  %v2528 = vpop.f32.mrf.mxu0
  %v2529 = vadd.f32 %v2510, %v2528
  %2530 = vdwg.mxu0
  %2531 = vmatpush.bf16.msra.mxu0 %v1592
  %2532 = vmatpush.bf16.msra.mxu0 %v1590
  %2533 = vmatpush.bf16.msra.mxu0 %v1588
  %2534 = vmatpush.bf16.msra.mxu0 %v1586
  %2535 = vmatpush.bf16.msra.mxu0 %v1584
  %2536 = vmatpush.bf16.msra.mxu0 %v1582
  %2537 = vmatpush.bf16.msra.mxu0 %v1580
  %2538 = vmatpush.bf16.msra.mxu0 %v1578
  %2539 = vmatmul.bf16.gmra.mxu0 %v461
  %v2540 = vpop.f32.mrf.mxu0
  %v2541 = vadd.f32 %v2522, %v2540
  %v2542 = vpop.f32.mrf.mxu0
  %v2543 = vadd.f32 %v2524, %v2542
  %2544 = vmatmul.bf16.gmra.mxu0 %v479
  %v2545 = vpop.f32.mrf.mxu0
  %v2546 = vadd.f32 %v2527, %v2545
  %v2547 = vpop.f32.mrf.mxu0
  %v2548 = vadd.f32 %v2529, %v2547
  %2549 = vdwg.mxu0
  %2550 = vmatpush.bf16.msra.mxu0 %v1608
  %2551 = vmatpush.bf16.msra.mxu0 %v1606
  %2552 = vmatpush.bf16.msra.mxu0 %v1604
  %2553 = vmatpush.bf16.msra.mxu0 %v1602
  %2554 = vmatpush.bf16.msra.mxu0 %v1600
  %2555 = vmatpush.bf16.msra.mxu0 %v1598
  %2556 = vmatpush.bf16.msra.mxu0 %v1596
  %2557 = vmatpush.bf16.msra.mxu0 %v1594
  %2558 = vmatmul.bf16.gmra.mxu0 %v462
  %v2559 = vpop.f32.mrf.mxu0
  %v2560 = vadd.f32 %v2541, %v2559
  %v2561 = vpop.f32.mrf.mxu0
  %v2562 = vadd.f32 %v2543, %v2561
  %2563 = vmatmul.bf16.gmra.mxu0 %v480
  %v2564 = vpop.f32.mrf.mxu0
  %v2565 = vadd.f32 %v2546, %v2564
  %v2566 = vpop.f32.mrf.mxu0
  %v2567 = vadd.f32 %v2548, %v2566
  %2568 = vdwg.mxu0
  %2569 = vmatpush.bf16.msra.mxu0 %v1624
  %2570 = vmatpush.bf16.msra.mxu0 %v1622
  %2571 = vmatpush.bf16.msra.mxu0 %v1620
  %2572 = vmatpush.bf16.msra.mxu0 %v1618
  %2573 = vmatpush.bf16.msra.mxu0 %v1616
  %2574 = vmatpush.bf16.msra.mxu0 %v1614
  %2575 = vmatpush.bf16.msra.mxu0 %v1612
  %2576 = vmatpush.bf16.msra.mxu0 %v1610
  %2577 = vmatmul.bf16.gmra.mxu0 %v463
  %v2578 = vpop.f32.mrf.mxu0
  %v2579 = vadd.f32 %v2560, %v2578
  %v2580 = vpop.f32.mrf.mxu0
  %v2581 = vadd.f32 %v2562, %v2580
  %2582 = vmatmul.bf16.gmra.mxu0 %v481
  %v2583 = vpop.f32.mrf.mxu0
  %v2584 = vadd.f32 %v2565, %v2583
  %v2585 = vpop.f32.mrf.mxu0
  %v2586 = vadd.f32 %v2567, %v2585
  %2587 = vdwg.mxu0
  %2588 = vmatpush.bf16.msra.mxu0 %v1640
  %2589 = vmatpush.bf16.msra.mxu0 %v1638
  %2590 = vmatpush.bf16.msra.mxu0 %v1636
  %2591 = vmatpush.bf16.msra.mxu0 %v1634
  %2592 = vmatpush.bf16.msra.mxu0 %v1632
  %2593 = vmatpush.bf16.msra.mxu0 %v1630
  %2594 = vmatpush.bf16.msra.mxu0 %v1628
  %2595 = vmatpush.bf16.msra.mxu0 %v1626
  %2596 = vmatmul.bf16.gmra.mxu0 %v464
  %v2597 = vpop.f32.mrf.mxu0
  %v2598 = vadd.f32 %v2579, %v2597
  %v2599 = vpop.f32.mrf.mxu0
  %v2600 = vadd.f32 %v2581, %v2599
  %2601 = vmatmul.bf16.gmra.mxu0 %v482
  %v2602 = vpop.f32.mrf.mxu0
  %v2603 = vadd.f32 %v2584, %v2602
  %v2604 = vpop.f32.mrf.mxu0
  %v2605 = vadd.f32 %v2586, %v2604
  %2606 = vdwg.mxu0
  %2607 = vmatpush.bf16.msra.mxu0 %v1656
  %2608 = vmatpush.bf16.msra.mxu0 %v1654
  %2609 = vmatpush.bf16.msra.mxu0 %v1652
  %2610 = vmatpush.bf16.msra.mxu0 %v1650
  %2611 = vmatpush.bf16.msra.mxu0 %v1648
  %2612 = vmatpush.bf16.msra.mxu0 %v1646
  %2613 = vmatpush.bf16.msra.mxu0 %v1644
  %2614 = vmatpush.bf16.msra.mxu0 %v1642
  %2615 = vmatmul.bf16.gmra.mxu0 %v465
  %v2616 = vpop.f32.mrf.mxu0
  %v2617 = vadd.f32 %v2598, %v2616
  %v2618 = vpop.f32.mrf.mxu0
  %v2619 = vadd.f32 %v2600, %v2618
  %2620 = vmatmul.bf16.gmra.mxu0 %v483
  %v2621 = vpop.f32.mrf.mxu0
  %v2622 = vadd.f32 %v2603, %v2621
  %v2623 = vpop.f32.mrf.mxu0
  %v2624 = vadd.f32 %v2605, %v2623
  %2625 = vdwg.mxu0
  %2626 = vmatpush.bf16.msra.mxu0 %v1672
  %2627 = vmatpush.bf16.msra.mxu0 %v1670
  %2628 = vmatpush.bf16.msra.mxu0 %v1668
  %2629 = vmatpush.bf16.msra.mxu0 %v1666
  %2630 = vmatpush.bf16.msra.mxu0 %v1664
  %2631 = vmatpush.bf16.msra.mxu0 %v1662
  %2632 = vmatpush.bf16.msra.mxu0 %v1660
  %2633 = vmatpush.bf16.msra.mxu0 %v1658
  %2634 = vmatmul.bf16.gmra.mxu0 %v466
  %v2635 = vpop.f32.mrf.mxu0
  %v2636 = vadd.f32 %v2617, %v2635
  %v2637 = vpop.f32.mrf.mxu0
  %v2638 = vadd.f32 %v2619, %v2637
  %2639 = vmatmul.bf16.gmra.mxu0 %v484
  %v2640 = vpop.f32.mrf.mxu0
  %v2641 = vadd.f32 %v2622, %v2640
  %v2642 = vpop.f32.mrf.mxu0
  %v2643 = vadd.f32 %v2624, %v2642
  %2644 = vdwg.mxu0
  %v2645 = vld [vmem:[%s2] sm:$0x3]
  %v2647 = vperm.slane %v2645, 0
  %v2648 = vperm.slane %v2645, 1
  %v2651 = vmul.f32 %v2294, %v2647
  %v2652 = vmul.f32 %v2636, %v2648
  %v2653 = vmul.f32 %v2296, %v2647
  %v2654 = vmul.f32 %v2638, %v2648
  %v2655 = vmul.f32 %v2299, %v2647
  %v2656 = vmul.f32 %v2641, %v2648
  %v2657 = vmul.f32 %v2301, %v2647
  %v2658 = vmul.f32 %v2643, %v2648
  %v2659 = vld [vmem:[%s3] sm:$0x3]
  %v2661 = vperm.slane %v2659, 0
  %v2662 = vperm.slane %v2659, 1
  %v2665 = vadd.f32 %v2651, %v2661
  %v2666 = vadd.f32 %v2652, %v2662
  %v2667 = vadd.f32 %v2653, %v2661
  %v2668 = vadd.f32 %v2654, %v2662
  %v2669 = vadd.f32 %v2655, %v2661
  %v2670 = vadd.f32 %v2656, %v2662
  %v2671 = vadd.f32 %v2657, %v2661
  %v2672 = vadd.f32 %v2658, %v2662
  %v2673 = vmax.f32 %v2665, 0.0
  %v2674 = vmax.f32 %v2666, 0.0
  %v2675 = vmax.f32 %v2667, 0.0
  %v2676 = vmax.f32 %v2668, 0.0
  %v2677 = vmax.f32 %v2669, 0.0
  %v2678 = vmax.f32 %v2670, 0.0
  %v2679 = vmax.f32 %v2671, 0.0
  %v2680 = vmax.f32 %v2672, 0.0
  %v2681 = vpack.c.bf16 %v2674, %v2673
  %v2682 = vpack.c.bf16 %v2676, %v2675
  %v2683 = vpack.c.bf16 %v2678, %v2677
  %v2684 = vpack.c.bf16 %v2680, %v2679
  %2685 = vst [vmem:[%s4] sm:$0xff] %v2681
  %2686 = vst [vmem:[%s4 + $0x8] sm:$0xff] %v2682
  %2687 = vst [vmem:[%s4 + $0x10] sm:$0xff] %v2683
  %2688 = vst [vmem:[%s4 + $0x18] sm:$0xff] %v2684
  // Predicated region
  $region18: #{retrain_autodeeplab2_forward.12} parent=0 // pred_check
    _
  $region19: #{retrain_autodeeplab2_forward.12} parent=0 // pred_check_branch
    %2690 = sbr.rel (0) target = $region21
  $region20: #{retrain_autodeeplab2_forward.12} parent=0 // pred_region
    _
  $region21: #{retrain_autodeeplab2_forward.12} parent=0 // pred_fallthru
    _
  // Predicated region
  $region22: #{retrain_autodeeplab2_forward.12} parent=0 // pred_check
    _
  $region23: #{retrain_autodeeplab2_forward.12} parent=0 // pred_check_branch
    %2692 = sbr.rel (0) target = $region25
  $region24: #{retrain_autodeeplab2_forward.12} parent=0 // pred_region
    _
  $region25: #{retrain_autodeeplab2_forward.12} parent=0 // pred_fallthru
    _

</llo_original>
